<compile_context>
chip_gen: v7x
topology: tpu7x:2x2x1
jax: 0.10.0
libtpu: 0.0.40
codegen_flags: <defaults>
</compile_context>

<pallas_src>
import math
import functools

import jax
import jax.numpy as jnp
from jax import lax
from jax.experimental import pallas as pl
from jax.experimental.pallas import tpu as pltpu

_EPS = 1e-5  # nn.LayerNorm default


# ----------------------------- in-kernel helpers -----------------------------

def _layernorm(x, gamma, beta):
    # x: (S, D); gamma/beta: (1, D)
    mu = jnp.mean(x, axis=-1, keepdims=True)
    var = jnp.mean((x - mu) ** 2, axis=-1, keepdims=True)
    return (x - mu) * lax.rsqrt(var + _EPS) * gamma + beta


def _split_heads(x2d, h, d):
    # (S, h*d) -> (h, S, d): lane slices stacked along a NEW leading axis
    # (cheap major-dim concat, no lane-dim concatenate).
    return jnp.stack([x2d[:, i * d:(i + 1) * d] for i in range(h)], axis=0)


def _mha_heads(q, k, v, wo_h, bo):
    """Batched-over-heads attention. 1/sqrt(dk) is already folded into Wq.

    q: (h, Sq, dk)  k: (h, Sk, dk)  v: (h, Sk, dv)  wo_h: (h, dv, D)  bo: (1, D)
    """
    # scores: contract last dims of both operands (no explicit k.T / vxpose).
    s = lax.dot_general(q, k, (((2,), (2,)), ((0,), (0,))),
                        preferred_element_type=jnp.float32)          # (h, Sq, Sk)
    s = s - jnp.max(s, axis=-1, keepdims=True)
    p = jnp.exp(s)
    # TODO(synk): at production scale use approx=True (EUP slot); exact here for the 1e-4 check.
    p = p * pl.reciprocal(jnp.sum(p, axis=-1, keepdims=True), approx=False)
    ctx = lax.dot_general(p, v, (((2,), (1,)), ((0,), (0,))),
                          preferred_element_type=jnp.float32)         # (h, Sq, dv)
    # head-major output projection + sum over heads == concat(heads) @ Wo
    out = lax.dot_general(ctx, wo_h, (((2,), (1,)), ((0,), (0,))),
                          preferred_element_type=jnp.float32)         # (h, Sq, D)
    return jnp.sum(out, axis=0) + bo                                  # (Sq, D)


# ----------------------------- fused Pallas kernel ----------------------------

def _fused_layer_kernel(
        x_ref, mem_ref,
        g1_ref, be1_ref, wqkv1_ref, bqkv1_ref, wo1_ref, bo1_ref,
        g2_ref, be2_ref, wq2_ref, bq2_ref, wkv2_ref, bkv2_ref, wo2_ref, bo2_ref,
        g3_ref, be3_ref, w1_ref, b1_ref, w2_ref, b2_ref, gf_ref, bf_ref,
        o_ref, *, h, dim_k, dim_v):
    """Whole decoder block for one batch element; activation stays in VMEM throughout."""
    x = x_ref[0].astype(jnp.float32)        # (S, D)
    mem = mem_ref[0].astype(jnp.float32)    # (Sm, D)
    hk = h * dim_k

    # ---- 1) self-attention block: x += MHA(LN1(x), LN1(x), LN1(x)) ----
    ln1 = _layernorm(x, g1_ref[...], be1_ref[...])
    qkv = jnp.dot(ln1, wqkv1_ref[...],
                  preferred_element_type=jnp.float32) + bqkv1_ref[...]   # (S, 2hk+hv), one wide MXU dot
    q = _split_heads(qkv[:, :hk], h, dim_k)
    k = _split_heads(qkv[:, hk:2 * hk], h, dim_k)
    v = _split_heads(qkv[:, 2 * hk:], h, dim_v)
    x = x + _mha_heads(q, k, v, wo1_ref[...], bo1_ref[...])

    # ---- 2) cross-attention block: x += MHA(LN2(x), mem, mem) ----
    # (ResidualConnectionLayer norms only the query side; memory is used raw.)
    ln2 = _layernorm(x, g2_ref[...], be2_ref[...])
    q2 = jnp.dot(ln2, wq2_ref[...],
                 preferred_element_type=jnp.float32) + bq2_ref[...]      # (S, hk)
    kv2 = jnp.dot(mem, wkv2_ref[...],
                  preferred_element_type=jnp.float32) + bkv2_ref[...]    # (Sm, hk+hv), fused K|V
    q = _split_heads(q2, h, dim_k)
    k = _split_heads(kv2[:, :hk], h, dim_k)
    v = _split_heads(kv2[:, hk:], h, dim_v)
    x = x + _mha_heads(q, k, v, wo2_ref[...], bo2_ref[...])

    # ---- 3) feed-forward block + final LN ----
    ln3 = _layernorm(x, g3_ref[...], be3_ref[...])
    hid = jnp.maximum(
        jnp.dot(ln3, w1_ref[...], preferred_element_type=jnp.float32) + b1_ref[...], 0.0)
    x = x + jnp.dot(hid, w2_ref[...], preferred_element_type=jnp.float32) + b2_ref[...]
    o_ref[0] = _layernorm(x, gf_ref[...], bf_ref[...]).astype(o_ref.dtype)


# ----------------------------- wrapper ----------------------------------------

def forward_cross_attention_layer(x, memory_x, params, *, h, dim_k, dim_v):
    B, S, D = x.shape
    Sm = memory_x.shape[1]
    sp, cp, fp = params
    scale = 1.0 / math.sqrt(dim_k)

    # --- trace-time weight fusion / re-layout (plain jnp ops, outside the kernel) ---
    wq1, bq1, wk1, bk1, wv1, bv1, wo1, bo1, g1, be1 = sp
    wqkv1 = jnp.concatenate([wq1 * scale, wk1, wv1], axis=1)   # (D, 2hk+hv); 1/sqrt(dk) folded in
    bqkv1 = jnp.concatenate([bq1 * scale, bk1, bv1], axis=1)
    wo1_h = wo1.reshape(h, dim_v, D)

    wq2, bq2, wk2, bk2, wv2, bv2, wo2, bo2, g2, be2 = cp
    wq2s, bq2s = wq2 * scale, bq2 * scale
    wkv2 = jnp.concatenate([wk2, wv2], axis=1)                 # (D, hk+hv)
    bkv2 = jnp.concatenate([bk2, bv2], axis=1)
    wo2_h = wo2.reshape(h, dim_v, D)

    w1, b1, w2, b2, g3, be3, gf, bf = fp

    weights = (g1, be1, wqkv1, bqkv1, wo1_h, bo1,
               g2, be2, wq2s, bq2s, wkv2, bkv2, wo2_h, bo2,
               g3, be3, w1, b1, w2, b2, gf, bf)

    def full_spec(a):
        nd = a.ndim
        return pl.BlockSpec(a.shape, lambda b, _nd=nd: (0,) * _nd)

    kernel = functools.partial(_fused_layer_kernel, h=h, dim_k=dim_k, dim_v=dim_v)
    return pl.pallas_call(
        kernel,
        out_shape=jax.ShapeDtypeStruct((B, S, D), x.dtype),
        grid=(B,),
        in_specs=[pl.BlockSpec((1, S, D), lambda b: (b, 0, 0)),
                  pl.BlockSpec((1, Sm, D), lambda b: (b, 0, 0))]
                 + [full_spec(w) for w in weights],
        out_specs=pl.BlockSpec((1, S, D), lambda b: (b, 0, 0)),
        # batch axis parallel -> both TensorCores get work on v7x; serial loop elsewhere.
        compiler_params=pltpu.CompilerParams(dimension_semantics=("parallel",)),
    )(x, memory_x, *weights)


# ----------------------------- parameter init ---------------------------------

def init_params(key, dim_model, dim_k, dim_v, h, dim_ff):
    ks = jax.random.split(key, 16)
    hk, hv = h * dim_k, h * dim_v

    def lin(k, din, dout):
        bound = 1.0 / math.sqrt(din)
        kw, kb = jax.random.split(k)
        w = jax.random.uniform(kw, (din, dout), jnp.float32, -bound, bound)
        b = jax.random.uniform(kb, (1, dout), jnp.float32, -bound, bound)
        return w, b

    def mha(keys):
        wq, bq = lin(keys[0], dim_model, hk)
        wk, bk = lin(keys[1], dim_model, hk)
        wv, bv = lin(keys[2], dim_model, hv)
        wo, bo = lin(keys[3], hv, dim_model)
        return wq, bq, wk, bk, wv, bv, wo, bo

    ln = lambda: (jnp.ones((1, dim_model), jnp.float32),
                  jnp.zeros((1, dim_model), jnp.float32))

    self_att = mha(ks[0:4]) + ln()              # + rc1.norm (gamma, beta)
    cross_att = mha(ks[4:8]) + ln()             # + rc2.norm
    w1, b1 = lin(ks[8], dim_model, dim_ff)
    w2, b2 = lin(ks[9], dim_ff, dim_model)
    ff = (w1, b1, w2, b2) + ln() + ln()         # + rc3.norm + final norm
    return self_att, cross_att, ff


# ----------------------------- pure-JAX reference ------------------------------

def _ref_ln(x, g, b):
    mu = jnp.mean(x, axis=-1, keepdims=True)
    var = jnp.mean((x - mu) ** 2, axis=-1, keepdims=True)
    return (x - mu) / jnp.sqrt(var + _EPS) * g + b


def _ref_mha(q_in, kv_in, p, h, dim_k, dim_v):
    wq, bq, wk, bk, wv, bv, wo, bo = p[:8]
    q = q_in @ wq + bq
    k = kv_in @ wk + bk
    v = kv_in @ wv + bv
    B, S, _ = q.shape
    Sk = k.shape[1]
    qh = q.reshape(B, S, h, dim_k).transpose(0, 2, 1, 3)
    kh = k.reshape(B, Sk, h, dim_k).transpose(0, 2, 1, 3)
    vh = v.reshape(B, Sk, h, dim_v).transpose(0, 2, 1, 3)
    s = jnp.einsum("bhqd,bhkd->bhqk", qh, kh) / math.sqrt(dim_k)
    p_attn = jax.nn.softmax(s, axis=-1)
    o = jnp.einsum("bhqk,bhkd->bhqd", p_attn, vh).transpose(0, 2, 1, 3).reshape(B, S, h * dim_v)
    return o @ wo + bo


def reference(x, mem, params, h, dim_k, dim_v):
    sp, cp, fp = params
    out = x + _ref_mha(_ref_ln(x, sp[8], sp[9]), _ref_ln(x, sp[8], sp[9]), sp, h, dim_k, dim_v)
    out = out + _ref_mha(_ref_ln(out, cp[8], cp[9]), mem, cp, h, dim_k, dim_v)
    w1, b1, w2, b2, g3, be3, gf, bf = fp
    ln3 = _ref_ln(out, g3, be3)
    out = out + (jnp.maximum(ln3 @ w1 + b1, 0.0) @ w2 + b2)
    return _ref_ln(out, gf, bf)


# ----------------------------- main --------------------------------------------

if __name__ == "__main__":
    dim_model, dim_k, dim_v, h, dim_ff = 32, 8, 8, 4, 64
    B, S, S_mem = 2, 8, 8

    key = jax.random.PRNGKey(0)
    kx, kmem, kp = jax.random.split(key, 3)
    x = jax.random.normal(kx, (B, S, dim_model), jnp.float32)
    memory_x = jax.random.normal(kmem, (B, S_mem, dim_model), jnp.float32)

    params = init_params(kp, dim_model, dim_k, dim_v, h, dim_ff)

    out = forward_cross_attention_layer(x, memory_x, params, h=h, dim_k=dim_k, dim_v=dim_v)
    out = jax.block_until_ready(out)

    ref = reference(x, memory_x, params, h, dim_k, dim_v)
    assert out.shape == (B, S, dim_model)
    assert jnp.max(jnp.abs(out - ref)) < 1e-4, "mismatch vs pure-JAX reference"

    print("KERNEL_OK")
</pallas_src>

<mosaic_0001>
module attributes {stable_mosaic.version = 11 : i64} {
  func.func @_fused_layer_kernel(%arg0: i32, %arg1: memref<1x8x32xf32, #tpu.memory_space<vmem>>, %arg2: memref<1x8x32xf32, #tpu.memory_space<vmem>>, %arg3: memref<1x32xf32, #tpu.memory_space<vmem>>, %arg4: memref<1x32xf32, #tpu.memory_space<vmem>>, %arg5: memref<32x96xf32, #tpu.memory_space<vmem>>, %arg6: memref<1x96xf32, #tpu.memory_space<vmem>>, %arg7: memref<4x8x32xf32, #tpu.memory_space<vmem>>, %arg8: memref<1x32xf32, #tpu.memory_space<vmem>>, %arg9: memref<1x32xf32, #tpu.memory_space<vmem>>, %arg10: memref<1x32xf32, #tpu.memory_space<vmem>>, %arg11: memref<32x32xf32, #tpu.memory_space<vmem>>, %arg12: memref<1x32xf32, #tpu.memory_space<vmem>>, %arg13: memref<32x64xf32, #tpu.memory_space<vmem>>, %arg14: memref<1x64xf32, #tpu.memory_space<vmem>>, %arg15: memref<4x8x32xf32, #tpu.memory_space<vmem>>, %arg16: memref<1x32xf32, #tpu.memory_space<vmem>>, %arg17: memref<1x32xf32, #tpu.memory_space<vmem>>, %arg18: memref<1x32xf32, #tpu.memory_space<vmem>>, %arg19: memref<32x64xf32, #tpu.memory_space<vmem>>, %arg20: memref<1x64xf32, #tpu.memory_space<vmem>>, %arg21: memref<64x32xf32, #tpu.memory_space<vmem>>, %arg22: memref<1x32xf32, #tpu.memory_space<vmem>>, %arg23: memref<1x32xf32, #tpu.memory_space<vmem>>, %arg24: memref<1x32xf32, #tpu.memory_space<vmem>>, %arg25: memref<1x8x32xf32, #tpu.memory_space<vmem>>) attributes {dimension_semantics = [#tpu.dimension_semantics<parallel>], iteration_bounds = array<i64: 2>, scalar_prefetch = 0 : i64, scratch_operands = 0 : i64, tpu.core_type = #tpu.core_type<tc>, window_params = [{transform_indices = @transform_0, window_bounds = array<i64: 1, 8, 32>}, {transform_indices = @transform_1, window_bounds = array<i64: 1, 8, 32>}, {pipeline_mode = #tpu.pipeline_mode<synchronous>, transform_indices = @transform_2, window_bounds = array<i64: 1, 32>}, {pipeline_mode = #tpu.pipeline_mode<synchronous>, transform_indices = @transform_3, window_bounds = array<i64: 1, 32>}, {pipeline_mode = #tpu.pipeline_mode<synchronous>, transform_indices = @transform_4, window_bounds = array<i64: 32, 96>}, {pipeline_mode = #tpu.pipeline_mode<synchronous>, transform_indices = @transform_5, window_bounds = array<i64: 1, 96>}, {pipeline_mode = #tpu.pipeline_mode<synchronous>, transform_indices = @transform_6, window_bounds = array<i64: 4, 8, 32>}, {pipeline_mode = #tpu.pipeline_mode<synchronous>, transform_indices = @transform_7, window_bounds = array<i64: 1, 32>}, {pipeline_mode = #tpu.pipeline_mode<synchronous>, transform_indices = @transform_8, window_bounds = array<i64: 1, 32>}, {pipeline_mode = #tpu.pipeline_mode<synchronous>, transform_indices = @transform_9, window_bounds = array<i64: 1, 32>}, {pipeline_mode = #tpu.pipeline_mode<synchronous>, transform_indices = @transform_10, window_bounds = array<i64: 32, 32>}, {pipeline_mode = #tpu.pipeline_mode<synchronous>, transform_indices = @transform_11, window_bounds = array<i64: 1, 32>}, {pipeline_mode = #tpu.pipeline_mode<synchronous>, transform_indices = @transform_12, window_bounds = array<i64: 32, 64>}, {pipeline_mode = #tpu.pipeline_mode<synchronous>, transform_indices = @transform_13, window_bounds = array<i64: 1, 64>}, {pipeline_mode = #tpu.pipeline_mode<synchronous>, transform_indices = @transform_14, window_bounds = array<i64: 4, 8, 32>}, {pipeline_mode = #tpu.pipeline_mode<synchronous>, transform_indices = @transform_15, window_bounds = array<i64: 1, 32>}, {pipeline_mode = #tpu.pipeline_mode<synchronous>, transform_indices = @transform_16, window_bounds = array<i64: 1, 32>}, {pipeline_mode = #tpu.pipeline_mode<synchronous>, transform_indices = @transform_17, window_bounds = array<i64: 1, 32>}, {pipeline_mode = #tpu.pipeline_mode<synchronous>, transform_indices = @transform_18, window_bounds = array<i64: 32, 64>}, {pipeline_mode = #tpu.pipeline_mode<synchronous>, transform_indices = @transform_19, window_bounds = array<i64: 1, 64>}, {pipeline_mode = #tpu.pipeline_mode<synchronous>, transform_indices = @transform_20, window_bounds = array<i64: 64, 32>}, {pipeline_mode = #tpu.pipeline_mode<synchronous>, transform_indices = @transform_21, window_bounds = array<i64: 1, 32>}, {pipeline_mode = #tpu.pipeline_mode<synchronous>, transform_indices = @transform_22, window_bounds = array<i64: 1, 32>}, {pipeline_mode = #tpu.pipeline_mode<synchronous>, transform_indices = @transform_23, window_bounds = array<i64: 1, 32>}, {transform_indices = @transform_24, window_bounds = array<i64: 1, 8, 32>}]} {
    %c0 = arith.constant 0 : index
    %c0_0 = arith.constant 0 : index
    %c0_1 = arith.constant 0 : index
    %0 = vector.load %arg1[%c0, %c0_0, %c0_1] : memref<1x8x32xf32, #tpu.memory_space<vmem>>, vector<1x8x32xf32>
    %1 = vector.shape_cast %0 : vector<1x8x32xf32> to vector<8x32xf32>
    %c0_2 = arith.constant 0 : index
    %c0_3 = arith.constant 0 : index
    %c0_4 = arith.constant 0 : index
    %2 = vector.load %arg2[%c0_2, %c0_3, %c0_4] : memref<1x8x32xf32, #tpu.memory_space<vmem>>, vector<1x8x32xf32>
    %3 = vector.shape_cast %2 : vector<1x8x32xf32> to vector<8x32xf32>
    %c0_5 = arith.constant 0 : index
    %c0_6 = arith.constant 0 : index
    %4 = vector.load %arg3[%c0_5, %c0_6] : memref<1x32xf32, #tpu.memory_space<vmem>>, vector<1x32xf32>
    %c0_7 = arith.constant 0 : index
    %c0_8 = arith.constant 0 : index
    %5 = vector.load %arg4[%c0_7, %c0_8] : memref<1x32xf32, #tpu.memory_space<vmem>>, vector<1x32xf32>
    %cst = arith.constant dense<0.000000e+00> : vector<8xf32>
    %6 = vector.multi_reduction <add>, %1, %cst [1] : vector<8x32xf32> to vector<8xf32>
    %7 = vector.shape_cast %6 : vector<8xf32> to vector<8x1xf32>
    %cst_9 = arith.constant 3.200000e+01 : f32
    %8 = vector.broadcast %cst_9 : f32 to vector<8x1xf32>
    %9 = arith.divf %7, %8 : vector<8x1xf32>
    %10 = vector.broadcast %9 : vector<8x1xf32> to vector<8x32xf32>
    %11 = arith.subf %1, %10 : vector<8x32xf32>
    %12 = arith.mulf %11, %11 : vector<8x32xf32>
    %cst_10 = arith.constant dense<0.000000e+00> : vector<8xf32>
    %13 = vector.multi_reduction <add>, %12, %cst_10 [1] : vector<8x32xf32> to vector<8xf32>
    %14 = vector.shape_cast %13 : vector<8xf32> to vector<8x1xf32>
    %cst_11 = arith.constant 3.200000e+01 : f32
    %15 = vector.broadcast %cst_11 : f32 to vector<8x1xf32>
    %16 = arith.divf %14, %15 : vector<8x1xf32>
    %17 = vector.broadcast %9 : vector<8x1xf32> to vector<8x32xf32>
    %18 = arith.subf %1, %17 : vector<8x32xf32>
    %cst_12 = arith.constant 9.99999974E-6 : f32
    %19 = vector.broadcast %cst_12 : f32 to vector<8x1xf32>
    %20 = arith.addf %16, %19 : vector<8x1xf32>
    %21 = math.rsqrt %20 : vector<8x1xf32>
    %22 = vector.broadcast %21 : vector<8x1xf32> to vector<8x32xf32>
    %23 = arith.mulf %18, %22 : vector<8x32xf32>
    %24 = vector.broadcast %4 : vector<1x32xf32> to vector<8x32xf32>
    %25 = arith.mulf %23, %24 : vector<8x32xf32>
    %26 = vector.broadcast %5 : vector<1x32xf32> to vector<8x32xf32>
    %27 = arith.addf %25, %26 : vector<8x32xf32>
    %c0_13 = arith.constant 0 : index
    %c0_14 = arith.constant 0 : index
    %28 = vector.load %arg5[%c0_13, %c0_14] : memref<32x96xf32, #tpu.memory_space<vmem>>, vector<32x96xf32>
    %cst_15 = arith.constant dense<0.000000e+00> : vector<8x96xf32>
    %29 = tpu.matmul %27, %28, %cst_15 {dimension_numbers = #tpu.dot_dimension_numbers<[1], [0], [0], [1], [0, 0, 1, 1], [], []>} : vector<8x32xf32>, vector<32x96xf32>, vector<8x96xf32> -> vector<8x96xf32>
    %c0_16 = arith.constant 0 : index
    %c0_17 = arith.constant 0 : index
    %30 = vector.load %arg6[%c0_16, %c0_17] : memref<1x96xf32, #tpu.memory_space<vmem>>, vector<1x96xf32>
    %31 = vector.broadcast %30 : vector<1x96xf32> to vector<8x96xf32>
    %32 = arith.addf %29, %31 : vector<8x96xf32>
    %33 = vector.extract_strided_slice %32 {offsets = [0, 0], sizes = [8, 32], strides = [1, 1]} : vector<8x96xf32> to vector<8x32xf32>
    %34 = vector.extract_strided_slice %33 {offsets = [0, 0], sizes = [8, 8], strides = [1, 1]} : vector<8x32xf32> to vector<8x8xf32>
    %35 = vector.extract_strided_slice %33 {offsets = [0, 8], sizes = [8, 8], strides = [1, 1]} : vector<8x32xf32> to vector<8x8xf32>
    %36 = vector.extract_strided_slice %33 {offsets = [0, 16], sizes = [8, 8], strides = [1, 1]} : vector<8x32xf32> to vector<8x8xf32>
    %37 = vector.extract_strided_slice %33 {offsets = [0, 24], sizes = [8, 8], strides = [1, 1]} : vector<8x32xf32> to vector<8x8xf32>
    %38 = vector.shape_cast %34 : vector<8x8xf32> to vector<1x8x8xf32>
    %39 = vector.shape_cast %35 : vector<8x8xf32> to vector<1x8x8xf32>
    %40 = vector.shape_cast %36 : vector<8x8xf32> to vector<1x8x8xf32>
    %41 = vector.shape_cast %37 : vector<8x8xf32> to vector<1x8x8xf32>
    %42 = tpu.concatenate %38, %39, %40, %41 in 0 : vector<1x8x8xf32>, vector<1x8x8xf32>, vector<1x8x8xf32>, vector<1x8x8xf32> -> vector<4x8x8xf32>
    %43 = vector.extract_strided_slice %32 {offsets = [0, 32], sizes = [8, 32], strides = [1, 1]} : vector<8x96xf32> to vector<8x32xf32>
    %44 = vector.extract_strided_slice %43 {offsets = [0, 0], sizes = [8, 8], strides = [1, 1]} : vector<8x32xf32> to vector<8x8xf32>
    %45 = vector.extract_strided_slice %43 {offsets = [0, 8], sizes = [8, 8], strides = [1, 1]} : vector<8x32xf32> to vector<8x8xf32>
    %46 = vector.extract_strided_slice %43 {offsets = [0, 16], sizes = [8, 8], strides = [1, 1]} : vector<8x32xf32> to vector<8x8xf32>
    %47 = vector.extract_strided_slice %43 {offsets = [0, 24], sizes = [8, 8], strides = [1, 1]} : vector<8x32xf32> to vector<8x8xf32>
    %48 = vector.shape_cast %44 : vector<8x8xf32> to vector<1x8x8xf32>
    %49 = vector.shape_cast %45 : vector<8x8xf32> to vector<1x8x8xf32>
    %50 = vector.shape_cast %46 : vector<8x8xf32> to vector<1x8x8xf32>
    %51 = vector.shape_cast %47 : vector<8x8xf32> to vector<1x8x8xf32>
    %52 = tpu.concatenate %48, %49, %50, %51 in 0 : vector<1x8x8xf32>, vector<1x8x8xf32>, vector<1x8x8xf32>, vector<1x8x8xf32> -> vector<4x8x8xf32>
    %53 = vector.extract_strided_slice %32 {offsets = [0, 64], sizes = [8, 32], strides = [1, 1]} : vector<8x96xf32> to vector<8x32xf32>
    %54 = vector.extract_strided_slice %53 {offsets = [0, 0], sizes = [8, 8], strides = [1, 1]} : vector<8x32xf32> to vector<8x8xf32>
    %55 = vector.extract_strided_slice %53 {offsets = [0, 8], sizes = [8, 8], strides = [1, 1]} : vector<8x32xf32> to vector<8x8xf32>
    %56 = vector.extract_strided_slice %53 {offsets = [0, 16], sizes = [8, 8], strides = [1, 1]} : vector<8x32xf32> to vector<8x8xf32>
    %57 = vector.extract_strided_slice %53 {offsets = [0, 24], sizes = [8, 8], strides = [1, 1]} : vector<8x32xf32> to vector<8x8xf32>
    %58 = vector.shape_cast %54 : vector<8x8xf32> to vector<1x8x8xf32>
    %59 = vector.shape_cast %55 : vector<8x8xf32> to vector<1x8x8xf32>
    %60 = vector.shape_cast %56 : vector<8x8xf32> to vector<1x8x8xf32>
    %61 = vector.shape_cast %57 : vector<8x8xf32> to vector<1x8x8xf32>
    %62 = tpu.concatenate %58, %59, %60, %61 in 0 : vector<1x8x8xf32>, vector<1x8x8xf32>, vector<1x8x8xf32>, vector<1x8x8xf32> -> vector<4x8x8xf32>
    %c0_18 = arith.constant 0 : index
    %c0_19 = arith.constant 0 : index
    %c0_20 = arith.constant 0 : index
    %63 = vector.load %arg7[%c0_18, %c0_19, %c0_20] : memref<4x8x32xf32, #tpu.memory_space<vmem>>, vector<4x8x32xf32>
    %c0_21 = arith.constant 0 : index
    %c0_22 = arith.constant 0 : index
    %64 = vector.load %arg8[%c0_21, %c0_22] : memref<1x32xf32, #tpu.memory_space<vmem>>, vector<1x32xf32>
    %cst_23 = arith.constant dense<0.000000e+00> : vector<4x8x8xf32>
    %65 = tpu.matmul %42, %52, %cst_23 {dimension_numbers = #tpu.dot_dimension_numbers<[2], [2], [1], [1], [0, 0, 0, 1, 1, 1], [0], [0]>} : vector<4x8x8xf32>, vector<4x8x8xf32>, vector<4x8x8xf32> -> vector<4x8x8xf32>
    %cst_24 = arith.constant dense<0xFF800000> : vector<4x8xf32>
    %66 = vector.multi_reduction <maximumf>, %65, %cst_24 [2] : vector<4x8x8xf32> to vector<4x8xf32>
    %67 = vector.shape_cast %66 : vector<4x8xf32> to vector<4x8x1xf32>
    %68 = vector.broadcast %67 : vector<4x8x1xf32> to vector<4x8x8xf32>
    %69 = arith.subf %65, %68 : vector<4x8x8xf32>
    %70 = math.exp %69 : vector<4x8x8xf32>
    %cst_25 = arith.constant dense<0.000000e+00> : vector<4x8xf32>
    %71 = vector.multi_reduction <add>, %70, %cst_25 [2] : vector<4x8x8xf32> to vector<4x8xf32>
    %72 = vector.shape_cast %71 : vector<4x8xf32> to vector<4x8x1xf32>
    %73 = tpu.reciprocal %72 : vector<4x8x1xf32> -> vector<4x8x1xf32>
    %74 = vector.broadcast %73 : vector<4x8x1xf32> to vector<4x8x8xf32>
    %75 = arith.mulf %70, %74 : vector<4x8x8xf32>
    %cst_26 = arith.constant dense<0.000000e+00> : vector<4x8x8xf32>
    %76 = tpu.matmul %75, %62, %cst_26 {dimension_numbers = #tpu.dot_dimension_numbers<[2], [1], [1], [2], [0, 0, 0, 1, 1, 2], [0], [0]>} : vector<4x8x8xf32>, vector<4x8x8xf32>, vector<4x8x8xf32> -> vector<4x8x8xf32>
    %cst_27 = arith.constant dense<0.000000e+00> : vector<4x8x32xf32>
    %77 = tpu.matmul %76, %63, %cst_27 {dimension_numbers = #tpu.dot_dimension_numbers<[2], [1], [1], [2], [0, 0, 0, 1, 1, 2], [0], [0]>} : vector<4x8x8xf32>, vector<4x8x32xf32>, vector<4x8x32xf32> -> vector<4x8x32xf32>
    %cst_28 = arith.constant dense<0.000000e+00> : vector<8x32xf32>
    %78 = vector.multi_reduction <add>, %77, %cst_28 [0] : vector<4x8x32xf32> to vector<8x32xf32>
    %79 = vector.broadcast %64 : vector<1x32xf32> to vector<8x32xf32>
    %80 = arith.addf %78, %79 : vector<8x32xf32>
    %81 = arith.addf %1, %80 : vector<8x32xf32>
    %c0_29 = arith.constant 0 : index
    %c0_30 = arith.constant 0 : index
    %82 = vector.load %arg9[%c0_29, %c0_30] : memref<1x32xf32, #tpu.memory_space<vmem>>, vector<1x32xf32>
    %c0_31 = arith.constant 0 : index
    %c0_32 = arith.constant 0 : index
    %83 = vector.load %arg10[%c0_31, %c0_32] : memref<1x32xf32, #tpu.memory_space<vmem>>, vector<1x32xf32>
    %cst_33 = arith.constant dense<0.000000e+00> : vector<8xf32>
    %84 = vector.multi_reduction <add>, %81, %cst_33 [1] : vector<8x32xf32> to vector<8xf32>
    %85 = vector.shape_cast %84 : vector<8xf32> to vector<8x1xf32>
    %cst_34 = arith.constant 3.200000e+01 : f32
    %86 = vector.broadcast %cst_34 : f32 to vector<8x1xf32>
    %87 = arith.divf %85, %86 : vector<8x1xf32>
    %88 = vector.broadcast %87 : vector<8x1xf32> to vector<8x32xf32>
    %89 = arith.subf %81, %88 : vector<8x32xf32>
    %90 = arith.mulf %89, %89 : vector<8x32xf32>
    %cst_35 = arith.constant dense<0.000000e+00> : vector<8xf32>
    %91 = vector.multi_reduction <add>, %90, %cst_35 [1] : vector<8x32xf32> to vector<8xf32>
    %92 = vector.shape_cast %91 : vector<8xf32> to vector<8x1xf32>
    %cst_36 = arith.constant 3.200000e+01 : f32
    %93 = vector.broadcast %cst_36 : f32 to vector<8x1xf32>
    %94 = arith.divf %92, %93 : vector<8x1xf32>
    %95 = vector.broadcast %87 : vector<8x1xf32> to vector<8x32xf32>
    %96 = arith.subf %81, %95 : vector<8x32xf32>
    %cst_37 = arith.constant 9.99999974E-6 : f32
    %97 = vector.broadcast %cst_37 : f32 to vector<8x1xf32>
    %98 = arith.addf %94, %97 : vector<8x1xf32>
    %99 = math.rsqrt %98 : vector<8x1xf32>
    %100 = vector.broadcast %99 : vector<8x1xf32> to vector<8x32xf32>
    %101 = arith.mulf %96, %100 : vector<8x32xf32>
    %102 = vector.broadcast %82 : vector<1x32xf32> to vector<8x32xf32>
    %103 = arith.mulf %101, %102 : vector<8x32xf32>
    %104 = vector.broadcast %83 : vector<1x32xf32> to vector<8x32xf32>
    %105 = arith.addf %103, %104 : vector<8x32xf32>
    %c0_38 = arith.constant 0 : index
    %c0_39 = arith.constant 0 : index
    %106 = vector.load %arg11[%c0_38, %c0_39] : memref<32x32xf32, #tpu.memory_space<vmem>>, vector<32x32xf32>
    %cst_40 = arith.constant dense<0.000000e+00> : vector<8x32xf32>
    %107 = tpu.matmul %105, %106, %cst_40 {dimension_numbers = #tpu.dot_dimension_numbers<[1], [0], [0], [1], [0, 0, 1, 1], [], []>} : vector<8x32xf32>, vector<32x32xf32>, vector<8x32xf32> -> vector<8x32xf32>
    %c0_41 = arith.constant 0 : index
    %c0_42 = arith.constant 0 : index
    %108 = vector.load %arg12[%c0_41, %c0_42] : memref<1x32xf32, #tpu.memory_space<vmem>>, vector<1x32xf32>
    %109 = vector.broadcast %108 : vector<1x32xf32> to vector<8x32xf32>
    %110 = arith.addf %107, %109 : vector<8x32xf32>
    %c0_43 = arith.constant 0 : index
    %c0_44 = arith.constant 0 : index
    %111 = vector.load %arg13[%c0_43, %c0_44] : memref<32x64xf32, #tpu.memory_space<vmem>>, vector<32x64xf32>
    %cst_45 = arith.constant dense<0.000000e+00> : vector<8x64xf32>
    %112 = tpu.matmul %3, %111, %cst_45 {dimension_numbers = #tpu.dot_dimension_numbers<[1], [0], [0], [1], [0, 0, 1, 1], [], []>} : vector<8x32xf32>, vector<32x64xf32>, vector<8x64xf32> -> vector<8x64xf32>
    %c0_46 = arith.constant 0 : index
    %c0_47 = arith.constant 0 : index
    %113 = vector.load %arg14[%c0_46, %c0_47] : memref<1x64xf32, #tpu.memory_space<vmem>>, vector<1x64xf32>
    %114 = vector.broadcast %113 : vector<1x64xf32> to vector<8x64xf32>
    %115 = arith.addf %112, %114 : vector<8x64xf32>
    %116 = vector.extract_strided_slice %110 {offsets = [0, 0], sizes = [8, 8], strides = [1, 1]} : vector<8x32xf32> to vector<8x8xf32>
    %117 = vector.extract_strided_slice %110 {offsets = [0, 8], sizes = [8, 8], strides = [1, 1]} : vector<8x32xf32> to vector<8x8xf32>
    %118 = vector.extract_strided_slice %110 {offsets = [0, 16], sizes = [8, 8], strides = [1, 1]} : vector<8x32xf32> to vector<8x8xf32>
    %119 = vector.extract_strided_slice %110 {offsets = [0, 24], sizes = [8, 8], strides = [1, 1]} : vector<8x32xf32> to vector<8x8xf32>
    %120 = vector.shape_cast %116 : vector<8x8xf32> to vector<1x8x8xf32>
    %121 = vector.shape_cast %117 : vector<8x8xf32> to vector<1x8x8xf32>
    %122 = vector.shape_cast %118 : vector<8x8xf32> to vector<1x8x8xf32>
    %123 = vector.shape_cast %119 : vector<8x8xf32> to vector<1x8x8xf32>
    %124 = tpu.concatenate %120, %121, %122, %123 in 0 : vector<1x8x8xf32>, vector<1x8x8xf32>, vector<1x8x8xf32>, vector<1x8x8xf32> -> vector<4x8x8xf32>
    %125 = vector.extract_strided_slice %115 {offsets = [0, 0], sizes = [8, 32], strides = [1, 1]} : vector<8x64xf32> to vector<8x32xf32>
    %126 = vector.extract_strided_slice %125 {offsets = [0, 0], sizes = [8, 8], strides = [1, 1]} : vector<8x32xf32> to vector<8x8xf32>
    %127 = vector.extract_strided_slice %125 {offsets = [0, 8], sizes = [8, 8], strides = [1, 1]} : vector<8x32xf32> to vector<8x8xf32>
    %128 = vector.extract_strided_slice %125 {offsets = [0, 16], sizes = [8, 8], strides = [1, 1]} : vector<8x32xf32> to vector<8x8xf32>
    %129 = vector.extract_strided_slice %125 {offsets = [0, 24], sizes = [8, 8], strides = [1, 1]} : vector<8x32xf32> to vector<8x8xf32>
    %130 = vector.shape_cast %126 : vector<8x8xf32> to vector<1x8x8xf32>
    %131 = vector.shape_cast %127 : vector<8x8xf32> to vector<1x8x8xf32>
    %132 = vector.shape_cast %128 : vector<8x8xf32> to vector<1x8x8xf32>
    %133 = vector.shape_cast %129 : vector<8x8xf32> to vector<1x8x8xf32>
    %134 = tpu.concatenate %130, %131, %132, %133 in 0 : vector<1x8x8xf32>, vector<1x8x8xf32>, vector<1x8x8xf32>, vector<1x8x8xf32> -> vector<4x8x8xf32>
    %135 = vector.extract_strided_slice %115 {offsets = [0, 32], sizes = [8, 32], strides = [1, 1]} : vector<8x64xf32> to vector<8x32xf32>
    %136 = vector.extract_strided_slice %135 {offsets = [0, 0], sizes = [8, 8], strides = [1, 1]} : vector<8x32xf32> to vector<8x8xf32>
    %137 = vector.extract_strided_slice %135 {offsets = [0, 8], sizes = [8, 8], strides = [1, 1]} : vector<8x32xf32> to vector<8x8xf32>
    %138 = vector.extract_strided_slice %135 {offsets = [0, 16], sizes = [8, 8], strides = [1, 1]} : vector<8x32xf32> to vector<8x8xf32>
    %139 = vector.extract_strided_slice %135 {offsets = [0, 24], sizes = [8, 8], strides = [1, 1]} : vector<8x32xf32> to vector<8x8xf32>
    %140 = vector.shape_cast %136 : vector<8x8xf32> to vector<1x8x8xf32>
    %141 = vector.shape_cast %137 : vector<8x8xf32> to vector<1x8x8xf32>
    %142 = vector.shape_cast %138 : vector<8x8xf32> to vector<1x8x8xf32>
    %143 = vector.shape_cast %139 : vector<8x8xf32> to vector<1x8x8xf32>
    %144 = tpu.concatenate %140, %141, %142, %143 in 0 : vector<1x8x8xf32>, vector<1x8x8xf32>, vector<1x8x8xf32>, vector<1x8x8xf32> -> vector<4x8x8xf32>
    %c0_48 = arith.constant 0 : index
    %c0_49 = arith.constant 0 : index
    %c0_50 = arith.constant 0 : index
    %145 = vector.load %arg15[%c0_48, %c0_49, %c0_50] : memref<4x8x32xf32, #tpu.memory_space<vmem>>, vector<4x8x32xf32>
    %c0_51 = arith.constant 0 : index
    %c0_52 = arith.constant 0 : index
    %146 = vector.load %arg16[%c0_51, %c0_52] : memref<1x32xf32, #tpu.memory_space<vmem>>, vector<1x32xf32>
    %cst_53 = arith.constant dense<0.000000e+00> : vector<4x8x8xf32>
    %147 = tpu.matmul %124, %134, %cst_53 {dimension_numbers = #tpu.dot_dimension_numbers<[2], [2], [1], [1], [0, 0, 0, 1, 1, 1], [0], [0]>} : vector<4x8x8xf32>, vector<4x8x8xf32>, vector<4x8x8xf32> -> vector<4x8x8xf32>
    %cst_54 = arith.constant dense<0xFF800000> : vector<4x8xf32>
    %148 = vector.multi_reduction <maximumf>, %147, %cst_54 [2] : vector<4x8x8xf32> to vector<4x8xf32>
    %149 = vector.shape_cast %148 : vector<4x8xf32> to vector<4x8x1xf32>
    %150 = vector.broadcast %149 : vector<4x8x1xf32> to vector<4x8x8xf32>
    %151 = arith.subf %147, %150 : vector<4x8x8xf32>
    %152 = math.exp %151 : vector<4x8x8xf32>
    %cst_55 = arith.constant dense<0.000000e+00> : vector<4x8xf32>
    %153 = vector.multi_reduction <add>, %152, %cst_55 [2] : vector<4x8x8xf32> to vector<4x8xf32>
    %154 = vector.shape_cast %153 : vector<4x8xf32> to vector<4x8x1xf32>
    %155 = tpu.reciprocal %154 : vector<4x8x1xf32> -> vector<4x8x1xf32>
    %156 = vector.broadcast %155 : vector<4x8x1xf32> to vector<4x8x8xf32>
    %157 = arith.mulf %152, %156 : vector<4x8x8xf32>
    %cst_56 = arith.constant dense<0.000000e+00> : vector<4x8x8xf32>
    %158 = tpu.matmul %157, %144, %cst_56 {dimension_numbers = #tpu.dot_dimension_numbers<[2], [1], [1], [2], [0, 0, 0, 1, 1, 2], [0], [0]>} : vector<4x8x8xf32>, vector<4x8x8xf32>, vector<4x8x8xf32> -> vector<4x8x8xf32>
    %cst_57 = arith.constant dense<0.000000e+00> : vector<4x8x32xf32>
    %159 = tpu.matmul %158, %145, %cst_57 {dimension_numbers = #tpu.dot_dimension_numbers<[2], [1], [1], [2], [0, 0, 0, 1, 1, 2], [0], [0]>} : vector<4x8x8xf32>, vector<4x8x32xf32>, vector<4x8x32xf32> -> vector<4x8x32xf32>
    %cst_58 = arith.constant dense<0.000000e+00> : vector<8x32xf32>
    %160 = vector.multi_reduction <add>, %159, %cst_58 [0] : vector<4x8x32xf32> to vector<8x32xf32>
    %161 = vector.broadcast %146 : vector<1x32xf32> to vector<8x32xf32>
    %162 = arith.addf %160, %161 : vector<8x32xf32>
    %163 = arith.addf %81, %162 : vector<8x32xf32>
    %c0_59 = arith.constant 0 : index
    %c0_60 = arith.constant 0 : index
    %164 = vector.load %arg17[%c0_59, %c0_60] : memref<1x32xf32, #tpu.memory_space<vmem>>, vector<1x32xf32>
    %c0_61 = arith.constant 0 : index
    %c0_62 = arith.constant 0 : index
    %165 = vector.load %arg18[%c0_61, %c0_62] : memref<1x32xf32, #tpu.memory_space<vmem>>, vector<1x32xf32>
    %cst_63 = arith.constant dense<0.000000e+00> : vector<8xf32>
    %166 = vector.multi_reduction <add>, %163, %cst_63 [1] : vector<8x32xf32> to vector<8xf32>
    %167 = vector.shape_cast %166 : vector<8xf32> to vector<8x1xf32>
    %cst_64 = arith.constant 3.200000e+01 : f32
    %168 = vector.broadcast %cst_64 : f32 to vector<8x1xf32>
    %169 = arith.divf %167, %168 : vector<8x1xf32>
    %170 = vector.broadcast %169 : vector<8x1xf32> to vector<8x32xf32>
    %171 = arith.subf %163, %170 : vector<8x32xf32>
    %172 = arith.mulf %171, %171 : vector<8x32xf32>
    %cst_65 = arith.constant dense<0.000000e+00> : vector<8xf32>
    %173 = vector.multi_reduction <add>, %172, %cst_65 [1] : vector<8x32xf32> to vector<8xf32>
    %174 = vector.shape_cast %173 : vector<8xf32> to vector<8x1xf32>
    %cst_66 = arith.constant 3.200000e+01 : f32
    %175 = vector.broadcast %cst_66 : f32 to vector<8x1xf32>
    %176 = arith.divf %174, %175 : vector<8x1xf32>
    %177 = vector.broadcast %169 : vector<8x1xf32> to vector<8x32xf32>
    %178 = arith.subf %163, %177 : vector<8x32xf32>
    %cst_67 = arith.constant 9.99999974E-6 : f32
    %179 = vector.broadcast %cst_67 : f32 to vector<8x1xf32>
    %180 = arith.addf %176, %179 : vector<8x1xf32>
    %181 = math.rsqrt %180 : vector<8x1xf32>
    %182 = vector.broadcast %181 : vector<8x1xf32> to vector<8x32xf32>
    %183 = arith.mulf %178, %182 : vector<8x32xf32>
    %184 = vector.broadcast %164 : vector<1x32xf32> to vector<8x32xf32>
    %185 = arith.mulf %183, %184 : vector<8x32xf32>
    %186 = vector.broadcast %165 : vector<1x32xf32> to vector<8x32xf32>
    %187 = arith.addf %185, %186 : vector<8x32xf32>
    %c0_68 = arith.constant 0 : index
    %c0_69 = arith.constant 0 : index
    %188 = vector.load %arg19[%c0_68, %c0_69] : memref<32x64xf32, #tpu.memory_space<vmem>>, vector<32x64xf32>
    %cst_70 = arith.constant dense<0.000000e+00> : vector<8x64xf32>
    %189 = tpu.matmul %187, %188, %cst_70 {dimension_numbers = #tpu.dot_dimension_numbers<[1], [0], [0], [1], [0, 0, 1, 1], [], []>} : vector<8x32xf32>, vector<32x64xf32>, vector<8x64xf32> -> vector<8x64xf32>
    %c0_71 = arith.constant 0 : index
    %c0_72 = arith.constant 0 : index
    %190 = vector.load %arg20[%c0_71, %c0_72] : memref<1x64xf32, #tpu.memory_space<vmem>>, vector<1x64xf32>
    %191 = vector.broadcast %190 : vector<1x64xf32> to vector<8x64xf32>
    %192 = arith.addf %189, %191 : vector<8x64xf32>
    %cst_73 = arith.constant 0.000000e+00 : f32
    %193 = vector.broadcast %cst_73 : f32 to vector<8x64xf32>
    %194 = arith.maximumf %192, %193 : vector<8x64xf32>
    %c0_74 = arith.constant 0 : index
    %c0_75 = arith.constant 0 : index
    %195 = vector.load %arg21[%c0_74, %c0_75] : memref<64x32xf32, #tpu.memory_space<vmem>>, vector<64x32xf32>
    %cst_76 = arith.constant dense<0.000000e+00> : vector<8x32xf32>
    %196 = tpu.matmul %194, %195, %cst_76 {dimension_numbers = #tpu.dot_dimension_numbers<[1], [0], [0], [1], [0, 0, 1, 1], [], []>} : vector<8x64xf32>, vector<64x32xf32>, vector<8x32xf32> -> vector<8x32xf32>
    %197 = arith.addf %163, %196 : vector<8x32xf32>
    %c0_77 = arith.constant 0 : index
    %c0_78 = arith.constant 0 : index
    %198 = vector.load %arg22[%c0_77, %c0_78] : memref<1x32xf32, #tpu.memory_space<vmem>>, vector<1x32xf32>
    %199 = vector.broadcast %198 : vector<1x32xf32> to vector<8x32xf32>
    %200 = arith.addf %197, %199 : vector<8x32xf32>
    %c0_79 = arith.constant 0 : index
    %c0_80 = arith.constant 0 : index
    %201 = vector.load %arg23[%c0_79, %c0_80] : memref<1x32xf32, #tpu.memory_space<vmem>>, vector<1x32xf32>
    %c0_81 = arith.constant 0 : index
    %c0_82 = arith.constant 0 : index
    %202 = vector.load %arg24[%c0_81, %c0_82] : memref<1x32xf32, #tpu.memory_space<vmem>>, vector<1x32xf32>
    %cst_83 = arith.constant dense<0.000000e+00> : vector<8xf32>
    %203 = vector.multi_reduction <add>, %200, %cst_83 [1] : vector<8x32xf32> to vector<8xf32>
    %204 = vector.shape_cast %203 : vector<8xf32> to vector<8x1xf32>
    %cst_84 = arith.constant 3.200000e+01 : f32
    %205 = vector.broadcast %cst_84 : f32 to vector<8x1xf32>
    %206 = arith.divf %204, %205 : vector<8x1xf32>
    %207 = vector.broadcast %206 : vector<8x1xf32> to vector<8x32xf32>
    %208 = arith.subf %200, %207 : vector<8x32xf32>
    %209 = arith.mulf %208, %208 : vector<8x32xf32>
    %cst_85 = arith.constant dense<0.000000e+00> : vector<8xf32>
    %210 = vector.multi_reduction <add>, %209, %cst_85 [1] : vector<8x32xf32> to vector<8xf32>
    %211 = vector.shape_cast %210 : vector<8xf32> to vector<8x1xf32>
    %cst_86 = arith.constant 3.200000e+01 : f32
    %212 = vector.broadcast %cst_86 : f32 to vector<8x1xf32>
    %213 = arith.divf %211, %212 : vector<8x1xf32>
    %214 = vector.broadcast %206 : vector<8x1xf32> to vector<8x32xf32>
    %215 = arith.subf %200, %214 : vector<8x32xf32>
    %cst_87 = arith.constant 9.99999974E-6 : f32
    %216 = vector.broadcast %cst_87 : f32 to vector<8x1xf32>
    %217 = arith.addf %213, %216 : vector<8x1xf32>
    %218 = math.rsqrt %217 : vector<8x1xf32>
    %219 = vector.broadcast %218 : vector<8x1xf32> to vector<8x32xf32>
    %220 = arith.mulf %215, %219 : vector<8x32xf32>
    %221 = vector.broadcast %201 : vector<1x32xf32> to vector<8x32xf32>
    %222 = arith.mulf %220, %221 : vector<8x32xf32>
    %223 = vector.broadcast %202 : vector<1x32xf32> to vector<8x32xf32>
    %224 = arith.addf %222, %223 : vector<8x32xf32>
    %c0_88 = arith.constant 0 : index
    %c0_89 = arith.constant 0 : index
    %c0_90 = arith.constant 0 : index
    %225 = vector.load %arg25[%c0_88, %c0_89, %c0_90] : memref<1x8x32xf32, #tpu.memory_space<vmem>>, vector<1x8x32xf32>
    %226 = vector.shape_cast %225 : vector<1x8x32xf32> to vector<8x32xf32>
    %227 = vector.shape_cast %224 : vector<8x32xf32> to vector<1x8x32xf32>
    tpu.vector_store %arg25[%c0_88, %c0_89, %c0_90], %227 {strides = array<i32>} : memref<1x8x32xf32, #tpu.memory_space<vmem>>, vector<1x8x32xf32>,
    return
  }
  func.func @transform_0(%arg0: i32) -> (i32, i32, i32) {
    %c0_i32 = arith.constant 0 : i32
    %c0_i32_0 = arith.constant 0 : i32
    %c0_i32_1 = arith.constant 0 : i32
    return %arg0, %c0_i32, %c0_i32_0 : i32, i32, i32
  }
  func.func @transform_1(%arg0: i32) -> (i32, i32, i32) {
    %c0_i32 = arith.constant 0 : i32
    %c0_i32_0 = arith.constant 0 : i32
    %c0_i32_1 = arith.constant 0 : i32
    return %arg0, %c0_i32, %c0_i32_0 : i32, i32, i32
  }
  func.func @transform_2(%arg0: i32) -> (i32, i32) {
    %c0_i32 = arith.constant 0 : i32
    %c0_i32_0 = arith.constant 0 : i32
    %c0_i32_1 = arith.constant 0 : i32
    return %c0_i32, %c0_i32_0 : i32, i32
  }
  func.func @transform_3(%arg0: i32) -> (i32, i32) {
    %c0_i32 = arith.constant 0 : i32
    %c0_i32_0 = arith.constant 0 : i32
    %c0_i32_1 = arith.constant 0 : i32
    return %c0_i32, %c0_i32_0 : i32, i32
  }
  func.func @transform_4(%arg0: i32) -> (i32, i32) {
    %c0_i32 = arith.constant 0 : i32
    %c0_i32_0 = arith.constant 0 : i32
    %c0_i32_1 = arith.constant 0 : i32
    return %c0_i32, %c0_i32_0 : i32, i32
  }
  func.func @transform_5(%arg0: i32) -> (i32, i32) {
    %c0_i32 = arith.constant 0 : i32
    %c0_i32_0 = arith.constant 0 : i32
    %c0_i32_1 = arith.constant 0 : i32
    return %c0_i32, %c0_i32_0 : i32, i32
  }
  func.func @transform_6(%arg0: i32) -> (i32, i32, i32) {
    %c0_i32 = arith.constant 0 : i32
    %c0_i32_0 = arith.constant 0 : i32
    %c0_i32_1 = arith.constant 0 : i32
    %c0_i32_2 = arith.constant 0 : i32
    return %c0_i32, %c0_i32_0, %c0_i32_1 : i32, i32, i32
  }
  func.func @transform_7(%arg0: i32) -> (i32, i32) {
    %c0_i32 = arith.constant 0 : i32
    %c0_i32_0 = arith.constant 0 : i32
    %c0_i32_1 = arith.constant 0 : i32
    return %c0_i32, %c0_i32_0 : i32, i32
  }
  func.func @transform_8(%arg0: i32) -> (i32, i32) {
    %c0_i32 = arith.constant 0 : i32
    %c0_i32_0 = arith.constant 0 : i32
    %c0_i32_1 = arith.constant 0 : i32
    return %c0_i32, %c0_i32_0 : i32, i32
  }
  func.func @transform_9(%arg0: i32) -> (i32, i32) {
    %c0_i32 = arith.constant 0 : i32
    %c0_i32_0 = arith.constant 0 : i32
    %c0_i32_1 = arith.constant 0 : i32
    return %c0_i32, %c0_i32_0 : i32, i32
  }
  func.func @transform_10(%arg0: i32) -> (i32, i32) {
    %c0_i32 = arith.constant 0 : i32
    %c0_i32_0 = arith.constant 0 : i32
    %c0_i32_1 = arith.constant 0 : i32
    return %c0_i32, %c0_i32_0 : i32, i32
  }
  func.func @transform_11(%arg0: i32) -> (i32, i32) {
    %c0_i32 = arith.constant 0 : i32
    %c0_i32_0 = arith.constant 0 : i32
    %c0_i32_1 = arith.constant 0 : i32
    return %c0_i32, %c0_i32_0 : i32, i32
  }
  func.func @transform_12(%arg0: i32) -> (i32, i32) {
    %c0_i32 = arith.constant 0 : i32
    %c0_i32_0 = arith.constant 0 : i32
    %c0_i32_1 = arith.constant 0 : i32
    return %c0_i32, %c0_i32_0 : i32, i32
  }
  func.func @transform_13(%arg0: i32) -> (i32, i32) {
    %c0_i32 = arith.constant 0 : i32
    %c0_i32_0 = arith.constant 0 : i32
    %c0_i32_1 = arith.constant 0 : i32
    return %c0_i32, %c0_i32_0 : i32, i32
  }
  func.func @transform_14(%arg0: i32) -> (i32, i32, i32) {
    %c0_i32 = arith.constant 0 : i32
    %c0_i32_0 = arith.constant 0 : i32
    %c0_i32_1 = arith.constant 0 : i32
    %c0_i32_2 = arith.constant 0 : i32
    return %c0_i32, %c0_i32_0, %c0_i32_1 : i32, i32, i32
  }
  func.func @transform_15(%arg0: i32) -> (i32, i32) {
    %c0_i32 = arith.constant 0 : i32
    %c0_i32_0 = arith.constant 0 : i32
    %c0_i32_1 = arith.constant 0 : i32
    return %c0_i32, %c0_i32_0 : i32, i32
  }
  func.func @transform_16(%arg0: i32) -> (i32, i32) {
    %c0_i32 = arith.constant 0 : i32
    %c0_i32_0 = arith.constant 0 : i32
    %c0_i32_1 = arith.constant 0 : i32
    return %c0_i32, %c0_i32_0 : i32, i32
  }
  func.func @transform_17(%arg0: i32) -> (i32, i32) {
    %c0_i32 = arith.constant 0 : i32
    %c0_i32_0 = arith.constant 0 : i32
    %c0_i32_1 = arith.constant 0 : i32
    return %c0_i32, %c0_i32_0 : i32, i32
  }
  func.func @transform_18(%arg0: i32) -> (i32, i32) {
    %c0_i32 = arith.constant 0 : i32
    %c0_i32_0 = arith.constant 0 : i32
    %c0_i32_1 = arith.constant 0 : i32
    return %c0_i32, %c0_i32_0 : i32, i32
  }
  func.func @transform_19(%arg0: i32) -> (i32, i32) {
    %c0_i32 = arith.constant 0 : i32
    %c0_i32_0 = arith.constant 0 : i32
    %c0_i32_1 = arith.constant 0 : i32
    return %c0_i32, %c0_i32_0 : i32, i32
  }
  func.func @transform_20(%arg0: i32) -> (i32, i32) {
    %c0_i32 = arith.constant 0 : i32
    %c0_i32_0 = arith.constant 0 : i32
    %c0_i32_1 = arith.constant 0 : i32
    return %c0_i32, %c0_i32_0 : i32, i32
  }
  func.func @transform_21(%arg0: i32) -> (i32, i32) {
    %c0_i32 = arith.constant 0 : i32
    %c0_i32_0 = arith.constant 0 : i32
    %c0_i32_1 = arith.constant 0 : i32
    return %c0_i32, %c0_i32_0 : i32, i32
  }
  func.func @transform_22(%arg0: i32) -> (i32, i32) {
    %c0_i32 = arith.constant 0 : i32
    %c0_i32_0 = arith.constant 0 : i32
    %c0_i32_1 = arith.constant 0 : i32
    return %c0_i32, %c0_i32_0 : i32, i32
  }
  func.func @transform_23(%arg0: i32) -> (i32, i32) {
    %c0_i32 = arith.constant 0 : i32
    %c0_i32_0 = arith.constant 0 : i32
    %c0_i32_1 = arith.constant 0 : i32
    return %c0_i32, %c0_i32_0 : i32, i32
  }
  func.func @transform_24(%arg0: i32) -> (i32, i32, i32) {
    %c0_i32 = arith.constant 0 : i32
    %c0_i32_0 = arith.constant 0 : i32
    %c0_i32_1 = arith.constant 0 : i32
    return %arg0, %c0_i32, %c0_i32_0 : i32, i32, i32
  }
}

</mosaic_0001>

<llo_original>
// kernel: tpu_custom_call.1
$region0: #{tpu_custom_call.1}
  #allocation0 [shape = 'u32[]', space=smem, size = 0x4, offset = 0x4, fixed_abs, tag = 'smem constant byte address 0x4 - core index']
  #allocation1 [shape = 'u32[144,128]{1,0:T(1,128)}', space=vmem, size = 0x12000, scoped, tag = 'internal scratch']
  %s0 = inlined_call_operand.hbm [shape: f32[2,8,32], index: 0, kind: input, shape index: {}]
  %s1 = inlined_call_operand.hbm [shape: f32[2,8,32], index: 1, kind: input, shape index: {}]
  %s2 = inlined_call_operand.hbm [shape: f32[1,32], index: 2, kind: input, shape index: {}]
  %s3 = inlined_call_operand.hbm [shape: f32[1,32], index: 3, kind: input, shape index: {}]
  %s4 = inlined_call_operand.vmem [shape: f32[32,96], index: 4, kind: input, shape index: {}]
  %s5 = inlined_call_operand.hbm [shape: f32[1,96], index: 5, kind: input, shape index: {}]
  %s6 = inlined_call_operand.vmem [shape: f32[4,8,32], index: 6, kind: input, shape index: {}]
  %s7 = inlined_call_operand.hbm [shape: f32[1,32], index: 7, kind: input, shape index: {}]
  %s8 = inlined_call_operand.hbm [shape: f32[1,32], index: 8, kind: input, shape index: {}]
  %s9 = inlined_call_operand.hbm [shape: f32[1,32], index: 9, kind: input, shape index: {}]
  %s10 = inlined_call_operand.vmem [shape: f32[32,32], index: 10, kind: input, shape index: {}]
  %s11 = inlined_call_operand.hbm [shape: f32[1,32], index: 11, kind: input, shape index: {}]
  %s12 = inlined_call_operand.vmem [shape: f32[32,64], index: 12, kind: input, shape index: {}]
  %s13 = inlined_call_operand.hbm [shape: f32[1,64], index: 13, kind: input, shape index: {}]
  %s14 = inlined_call_operand.hbm [shape: f32[4,8,32], index: 14, kind: input, shape index: {}]
  %s15 = inlined_call_operand.hbm [shape: f32[1,32], index: 15, kind: input, shape index: {}]
  %s16 = inlined_call_operand.hbm [shape: f32[1,32], index: 16, kind: input, shape index: {}]
  %s17 = inlined_call_operand.hbm [shape: f32[1,32], index: 17, kind: input, shape index: {}]
  %s18 = inlined_call_operand.hbm [shape: f32[32,64], index: 18, kind: input, shape index: {}]
  %s19 = inlined_call_operand.vmem [shape: f32[1,64], index: 19, kind: input, shape index: {}]
  %s20 = inlined_call_operand.vmem [shape: f32[64,32], index: 20, kind: input, shape index: {}]
  %s21 = inlined_call_operand.vmem [shape: f32[1,32], index: 21, kind: input, shape index: {}]
  %s22 = inlined_call_operand.vmem [shape: f32[1,32], index: 22, kind: input, shape index: {}]
  %s23 = inlined_call_operand.vmem [shape: f32[1,32], index: 23, kind: input, shape index: {}]
  %s24 = inlined_call_operand.hbm [shape: f32[2,8,32], index: 24, kind: output, shape index: {}]
  %s25 = sld [smem:[#allocation0]]
  $region189: #{tpu_custom_call.1} parent=0
    _
  %s27 = ssub.s32 1, %s25
  %s28 = scalar_select 0, %s27, %s25
  $region1: #{tpu_custom_call.1} parent=0
    #allocation2 [shape = 'u8[8192]{0}', space=vmem, size = 0x2000, scoped, tag = 'input window, operand 0']
    #allocation3 [shape = 's32[2]{0}', space=sflag, size = 0x8, scoped, tag = 'scoped memory for tpu_custom_call.1']
    #allocation4 [shape = 's32[2]{0}', space=sflag, size = 0x8, scoped, tag = 'scoped memory for tpu_custom_call.1']
    #allocation5 [shape = 'u8[8192]{0}', space=vmem, size = 0x2000, scoped, tag = 'input window, operand 1']
    #allocation6 [shape = 's32[2]{0}', space=sflag, size = 0x8, scoped, tag = 'scoped memory for tpu_custom_call.1']
    #allocation7 [shape = 'u8[512]{0}', space=vmem, size = 0x400, scoped, tag = 'input window, operand 2, single buffered']
    #allocation8 [shape = 'u8[512]{0}', space=vmem, size = 0x400, scoped, tag = 'input window, operand 3, single buffered']
    #allocation9 [shape = 's32[1]{0}', space=sflag, size = 0x4, scoped, tag = 'scoped memory for tpu_custom_call.1']
    #allocation10 [shape = 'u8[512]{0}', space=vmem, size = 0x400, scoped, tag = 'input window, operand 5, single buffered']
    #allocation11 [shape = 'u8[512]{0}', space=vmem, size = 0x400, scoped, tag = 'input window, operand 7, single buffered']
    #allocation12 [shape = 's32[1]{0}', space=sflag, size = 0x4, scoped, tag = 'scoped memory for tpu_custom_call.1']
    #allocation13 [shape = 'u8[512]{0}', space=vmem, size = 0x400, scoped, tag = 'input window, operand 8, single buffered']
    #allocation14 [shape = 'u8[512]{0}', space=vmem, size = 0x400, scoped, tag = 'input window, operand 9, single buffered']
    #allocation15 [shape = 's32[1]{0}', space=sflag, size = 0x4, scoped, tag = 'scoped memory for tpu_custom_call.1']
    #allocation16 [shape = 'u8[512]{0}', space=vmem, size = 0x400, scoped, tag = 'input window, operand 11, single buffered']
    #allocation17 [shape = 'u8[512]{0}', space=vmem, size = 0x400, scoped, tag = 'input window, operand 13, single buffered']
    #allocation18 [shape = 's32[1]{0}', space=sflag, size = 0x4, scoped, tag = 'scoped memory for tpu_custom_call.1']
    #allocation19 [shape = 'u8[16384]{0}', space=vmem, size = 0x4000, scoped, tag = 'input window, operand 14, single buffered']
    #allocation20 [shape = 'u8[512]{0}', space=vmem, size = 0x400, scoped, tag = 'input window, operand 15, single buffered']
    #allocation21 [shape = 's32[1]{0}', space=sflag, size = 0x4, scoped, tag = 'scoped memory for tpu_custom_call.1']
    #allocation22 [shape = 'u8[512]{0}', space=vmem, size = 0x400, scoped, tag = 'input window, operand 16, single buffered']
    #allocation23 [shape = 'u8[512]{0}', space=vmem, size = 0x400, scoped, tag = 'input window, operand 17, single buffered']
    #allocation24 [shape = 's32[1]{0}', space=sflag, size = 0x4, scoped, tag = 'scoped memory for tpu_custom_call.1']
    #allocation25 [shape = 'u8[16384]{0}', space=vmem, size = 0x4000, scoped, tag = 'input window, operand 18, single buffered']
    #allocation26 [shape = 'u8[8192]{0}', space=vmem, size = 0x2000, scoped, tag = 'output window, operand 0']
    %29 = vsyncpa [#allocation3], 0
    %s30 = scalar_lea.sflag [#allocation3], 1
    %31 = vsyncpa %s30, 0
    %32 = vsyncpa [#allocation6], 0
    %s33 = scalar_lea.sflag [#allocation6], 1
    %34 = vsyncpa %s33, 0
    %35 = vsyncpa [#allocation9], 0
    %36 = vsyncpa [#allocation12], 0
    %37 = vsyncpa [#allocation15], 0
    %38 = vsyncpa [#allocation18], 0
    %39 = vsyncpa [#allocation21], 0
    %40 = vsyncpa [#allocation24], 0
    %41 = vsyncpa [#allocation4], 0
    %s42 = scalar_lea.sflag [#allocation4], 1
    %43 = vsyncpa %s42, 0
    loop: start=0, step=1, limit=4
    $region2: #{tpu_custom_call.1} parent=1 // loop_pre_header
      _
    $region3: #{tpu_custom_call.1} parent=1 // loop_header
      %s45 = sphi 0, %s49
      %p46 = scmp.ge.s32.totalorder %s45, 4
      %s55 = sphi 0, %s57
      %s58 = sphi 0, %s55
      %s59 = sphi 0, %s58
      %s75 = sphi 0, %s59
      %s81 = sphi 0, %s83
      %s84 = sphi 0, %s81
      %s85 = sphi 0, %s84
      %s101 = sphi 0, %s85
      %s105 = sphi 0, %s105
      %s107 = sphi 0, %s105
      %s108 = sphi 0, %s107
      %s122 = sphi 0, %s108
      %s126 = sphi 0, %s126
      %s128 = sphi 0, %s126
      %s129 = sphi 0, %s128
      %s143 = sphi 0, %s129
      %s147 = sphi 0, %s147
      %s149 = sphi 0, %s147
      %s150 = sphi 0, %s149
      %s164 = sphi 0, %s150
      %s168 = sphi 0, %s168
      %s170 = sphi 0, %s168
      %s171 = sphi 0, %s170
      %s185 = sphi 0, %s171
      %s189 = sphi 0, %s189
      %s191 = sphi 0, %s189
      %s192 = sphi 0, %s191
      %s206 = sphi 0, %s192
      %s210 = sphi 0, %s210
      %s212 = sphi 0, %s210
      %s213 = sphi 0, %s212
      %s227 = sphi 0, %s213
      %s231 = sphi 0, %s231
      %s233 = sphi 0, %s231
      %s234 = sphi 0, %s233
      %s248 = sphi 0, %s234
      %s252 = sphi 0, %s252
      %s254 = sphi 0, %s252
      %s255 = sphi 0, %s254
      %s269 = sphi 0, %s255
      %s273 = sphi 0, %s273
      %s275 = sphi 0, %s273
      %s276 = sphi 0, %s275
      %s290 = sphi 0, %s276
      %s294 = sphi 0, %s294
      %s296 = sphi 0, %s294
      %s297 = sphi 0, %s296
      %s311 = sphi 0, %s297
      %s315 = sphi 0, %s315
      %s317 = sphi 0, %s315
      %s318 = sphi 0, %s317
      %s332 = sphi 0, %s318
      %s336 = sphi 0, %s336
      %s338 = sphi 0, %s336
      %s339 = sphi 0, %s338
      %s353 = sphi 0, %s339
      %s357 = sphi 0, %s357
      %s359 = sphi 0, %s357
      %s360 = sphi 0, %s359
      %s374 = sphi 0, %s360
      %s378 = sphi 0, %s378
      %s380 = sphi 0, %s378
      %s381 = sphi 0, %s380
      %s395 = sphi 0, %s381
      %s399 = sphi 0, %s399
      %s401 = sphi 0, %s399
      %s402 = sphi 0, %s401
      %s416 = sphi 0, %s402
      %s420 = sphi 0, %s420
      %s422 = sphi 0, %s420
      %s423 = sphi 0, %s422
      %s437 = sphi 0, %s423
      %s441 = sphi 0, %s441
      %s443 = sphi 0, %s441
      %s444 = sphi 0, %s443
      %s458 = sphi 0, %s444
      %s462 = sphi 0, %s462
      %s464 = sphi 0, %s462
      %s465 = sphi 0, %s464
      %s479 = sphi 0, %s465
      %s483 = sphi 0, %s483
      %s485 = sphi 0, %s483
      %s486 = sphi 0, %s485
      %s500 = sphi 0, %s486
      %s504 = sphi 0, %s504
      %s506 = sphi 0, %s504
      %s507 = sphi 0, %s506
      %s521 = sphi 0, %s507
      %s525 = sphi 0, %s525
      %s527 = sphi 0, %s525
      %s528 = sphi 0, %s527
      %s542 = sphi 0, %s528
      %s546 = sphi 0, %s546
      %s548 = sphi 0, %s546
      %s549 = sphi 0, %s548
      %s563 = sphi 0, %s549
      %s569 = sphi 0, %s571
      %s572 = sphi 0, %s569
      %s573 = sphi 0, %s572
      %s589 = sphi 0, %s573
    $region4: #{tpu_custom_call.1} parent=1 // loop_header_branch
      %48 = sbr.rel (%p46) target = $region8
    $region5: #{tpu_custom_call.1} parent=1 // loop_body
      %s50 = ssub.s32 %s45, 1
      %s51 = ssub.s32 %s45, 2
      %s52 = sadd.s32 %s45, 1
      %s53 = ssub.s32 %s45, %s52
      %p54 = scmp.eq.s32.totalorder %s53, 0
      %s56 = sadd.s32 %s55, 1
      %s57 = scalar_select %p54, %s55, %s56
      %p60 = pneg %p54
      %p61 = scmp.eq.s32.totalorder %s45, 1
      %p62 = por %p60, %p61
      %p63 = scmp.ne.s32.totalorder %s55, %s58
      %p64 = scmp.eq.s32.totalorder %s45, 0
      %p65 = por %p63, %p64
      %p66 = scmp.ne.s32.totalorder %s55, %s58
      %p67 = scmp.eq.s32.totalorder %s50, 1
      %p68 = por %p66, %p67
      %p69 = scmp.ne.s32.totalorder %s58, %s59
      %p70 = scmp.eq.s32.totalorder %s50, 0
      %p71 = por %p69, %p70
      %p72 = scmp.ne.s32.totalorder %s58, %s59
      %p73 = scmp.eq.s32.totalorder %s51, 1
      %p74 = por %p72, %p73
      %p76 = scmp.ne.s32.totalorder %s59, %s75
      %p77 = scmp.eq.s32.totalorder %s51, 0
      %p78 = por %p76, %p77
      %s79 = ssub.s32 %s45, %s52
      %p80 = scmp.eq.s32.totalorder %s79, 0
      %s82 = sadd.s32 %s81, 1
      %s83 = scalar_select %p80, %s81, %s82
      %p86 = pneg %p80
      %p87 = scmp.eq.s32.totalorder %s45, 1
      %p88 = por %p86, %p87
      %p89 = scmp.ne.s32.totalorder %s81, %s84
      %p90 = scmp.eq.s32.totalorder %s45, 0
      %p91 = por %p89, %p90
      %p92 = scmp.ne.s32.totalorder %s81, %s84
      %p93 = scmp.eq.s32.totalorder %s50, 1
      %p94 = por %p92, %p93
      %p95 = scmp.ne.s32.totalorder %s84, %s85
      %p96 = scmp.eq.s32.totalorder %s50, 0
      %p97 = por %p95, %p96
      %p98 = scmp.ne.s32.totalorder %s84, %s85
      %p99 = scmp.eq.s32.totalorder %s51, 1
      %p100 = por %p98, %p99
      %p102 = scmp.ne.s32.totalorder %s85, %s101
      %p103 = scmp.eq.s32.totalorder %s51, 0
      %p104 = por %p102, %p103
      %s106 = sadd.s32 %s105, 1
      %p109 = scmp.eq.s32.totalorder %s45, 1
      %p110 = scmp.ne.s32.totalorder %s105, %s107
      %p111 = scmp.eq.s32.totalorder %s45, 0
      %p112 = por %p110, %p111
      %p113 = scmp.ne.s32.totalorder %s105, %s107
      %p114 = scmp.eq.s32.totalorder %s50, 1
      %p115 = por %p113, %p114
      %p116 = scmp.ne.s32.totalorder %s107, %s108
      %p117 = scmp.eq.s32.totalorder %s50, 0
      %p118 = por %p116, %p117
      %p119 = scmp.ne.s32.totalorder %s107, %s108
      %p120 = scmp.eq.s32.totalorder %s51, 1
      %p121 = por %p119, %p120
      %p123 = scmp.ne.s32.totalorder %s108, %s122
      %p124 = scmp.eq.s32.totalorder %s51, 0
      %p125 = por %p123, %p124
      %s127 = sadd.s32 %s126, 1
      %p130 = scmp.eq.s32.totalorder %s45, 1
      %p131 = scmp.ne.s32.totalorder %s126, %s128
      %p132 = scmp.eq.s32.totalorder %s45, 0
      %p133 = por %p131, %p132
      %p134 = scmp.ne.s32.totalorder %s126, %s128
      %p135 = scmp.eq.s32.totalorder %s50, 1
      %p136 = por %p134, %p135
      %p137 = scmp.ne.s32.totalorder %s128, %s129
      %p138 = scmp.eq.s32.totalorder %s50, 0
      %p139 = por %p137, %p138
      %p140 = scmp.ne.s32.totalorder %s128, %s129
      %p141 = scmp.eq.s32.totalorder %s51, 1
      %p142 = por %p140, %p141
      %p144 = scmp.ne.s32.totalorder %s129, %s143
      %p145 = scmp.eq.s32.totalorder %s51, 0
      %p146 = por %p144, %p145
      %s148 = sadd.s32 %s147, 1
      %p151 = scmp.eq.s32.totalorder %s45, 1
      %p152 = scmp.ne.s32.totalorder %s147, %s149
      %p153 = scmp.eq.s32.totalorder %s45, 0
      %p154 = por %p152, %p153
      %p155 = scmp.ne.s32.totalorder %s147, %s149
      %p156 = scmp.eq.s32.totalorder %s50, 1
      %p157 = por %p155, %p156
      %p158 = scmp.ne.s32.totalorder %s149, %s150
      %p159 = scmp.eq.s32.totalorder %s50, 0
      %p160 = por %p158, %p159
      %p161 = scmp.ne.s32.totalorder %s149, %s150
      %p162 = scmp.eq.s32.totalorder %s51, 1
      %p163 = por %p161, %p162
      %p165 = scmp.ne.s32.totalorder %s150, %s164
      %p166 = scmp.eq.s32.totalorder %s51, 0
      %p167 = por %p165, %p166
      %s169 = sadd.s32 %s168, 1
      %p172 = scmp.eq.s32.totalorder %s45, 1
      %p173 = scmp.ne.s32.totalorder %s168, %s170
      %p174 = scmp.eq.s32.totalorder %s45, 0
      %p175 = por %p173, %p174
      %p176 = scmp.ne.s32.totalorder %s168, %s170
      %p177 = scmp.eq.s32.totalorder %s50, 1
      %p178 = por %p176, %p177
      %p179 = scmp.ne.s32.totalorder %s170, %s171
      %p180 = scmp.eq.s32.totalorder %s50, 0
      %p181 = por %p179, %p180
      %p182 = scmp.ne.s32.totalorder %s170, %s171
      %p183 = scmp.eq.s32.totalorder %s51, 1
      %p184 = por %p182, %p183
      %p186 = scmp.ne.s32.totalorder %s171, %s185
      %p187 = scmp.eq.s32.totalorder %s51, 0
      %p188 = por %p186, %p187
      %s190 = sadd.s32 %s189, 1
      %p193 = scmp.eq.s32.totalorder %s45, 1
      %p194 = scmp.ne.s32.totalorder %s189, %s191
      %p195 = scmp.eq.s32.totalorder %s45, 0
      %p196 = por %p194, %p195
      %p197 = scmp.ne.s32.totalorder %s189, %s191
      %p198 = scmp.eq.s32.totalorder %s50, 1
      %p199 = por %p197, %p198
      %p200 = scmp.ne.s32.totalorder %s191, %s192
      %p201 = scmp.eq.s32.totalorder %s50, 0
      %p202 = por %p200, %p201
      %p203 = scmp.ne.s32.totalorder %s191, %s192
      %p204 = scmp.eq.s32.totalorder %s51, 1
      %p205 = por %p203, %p204
      %p207 = scmp.ne.s32.totalorder %s192, %s206
      %p208 = scmp.eq.s32.totalorder %s51, 0
      %p209 = por %p207, %p208
      %s211 = sadd.s32 %s210, 1
      %p214 = scmp.eq.s32.totalorder %s45, 1
      %p215 = scmp.ne.s32.totalorder %s210, %s212
      %p216 = scmp.eq.s32.totalorder %s45, 0
      %p217 = por %p215, %p216
      %p218 = scmp.ne.s32.totalorder %s210, %s212
      %p219 = scmp.eq.s32.totalorder %s50, 1
      %p220 = por %p218, %p219
      %p221 = scmp.ne.s32.totalorder %s212, %s213
      %p222 = scmp.eq.s32.totalorder %s50, 0
      %p223 = por %p221, %p222
      %p224 = scmp.ne.s32.totalorder %s212, %s213
      %p225 = scmp.eq.s32.totalorder %s51, 1
      %p226 = por %p224, %p225
      %p228 = scmp.ne.s32.totalorder %s213, %s227
      %p229 = scmp.eq.s32.totalorder %s51, 0
      %p230 = por %p228, %p229
      %s232 = sadd.s32 %s231, 1
      %p235 = scmp.eq.s32.totalorder %s45, 1
      %p236 = scmp.ne.s32.totalorder %s231, %s233
      %p237 = scmp.eq.s32.totalorder %s45, 0
      %p238 = por %p236, %p237
      %p239 = scmp.ne.s32.totalorder %s231, %s233
      %p240 = scmp.eq.s32.totalorder %s50, 1
      %p241 = por %p239, %p240
      %p242 = scmp.ne.s32.totalorder %s233, %s234
      %p243 = scmp.eq.s32.totalorder %s50, 0
      %p244 = por %p242, %p243
      %p245 = scmp.ne.s32.totalorder %s233, %s234
      %p246 = scmp.eq.s32.totalorder %s51, 1
      %p247 = por %p245, %p246
      %p249 = scmp.ne.s32.totalorder %s234, %s248
      %p250 = scmp.eq.s32.totalorder %s51, 0
      %p251 = por %p249, %p250
      %s253 = sadd.s32 %s252, 1
      %p256 = scmp.eq.s32.totalorder %s45, 1
      %p257 = scmp.ne.s32.totalorder %s252, %s254
      %p258 = scmp.eq.s32.totalorder %s45, 0
      %p259 = por %p257, %p258
      %p260 = scmp.ne.s32.totalorder %s252, %s254
      %p261 = scmp.eq.s32.totalorder %s50, 1
      %p262 = por %p260, %p261
      %p263 = scmp.ne.s32.totalorder %s254, %s255
      %p264 = scmp.eq.s32.totalorder %s50, 0
      %p265 = por %p263, %p264
      %p266 = scmp.ne.s32.totalorder %s254, %s255
      %p267 = scmp.eq.s32.totalorder %s51, 1
      %p268 = por %p266, %p267
      %p270 = scmp.ne.s32.totalorder %s255, %s269
      %p271 = scmp.eq.s32.totalorder %s51, 0
      %p272 = por %p270, %p271
      %s274 = sadd.s32 %s273, 1
      %p277 = scmp.eq.s32.totalorder %s45, 1
      %p278 = scmp.ne.s32.totalorder %s273, %s275
      %p279 = scmp.eq.s32.totalorder %s45, 0
      %p280 = por %p278, %p279
      %p281 = scmp.ne.s32.totalorder %s273, %s275
      %p282 = scmp.eq.s32.totalorder %s50, 1
      %p283 = por %p281, %p282
      %p284 = scmp.ne.s32.totalorder %s275, %s276
      %p285 = scmp.eq.s32.totalorder %s50, 0
      %p286 = por %p284, %p285
      %p287 = scmp.ne.s32.totalorder %s275, %s276
      %p288 = scmp.eq.s32.totalorder %s51, 1
      %p289 = por %p287, %p288
      %p291 = scmp.ne.s32.totalorder %s276, %s290
      %p292 = scmp.eq.s32.totalorder %s51, 0
      %p293 = por %p291, %p292
      %s295 = sadd.s32 %s294, 1
      %p298 = scmp.eq.s32.totalorder %s45, 1
      %p299 = scmp.ne.s32.totalorder %s294, %s296
      %p300 = scmp.eq.s32.totalorder %s45, 0
      %p301 = por %p299, %p300
      %p302 = scmp.ne.s32.totalorder %s294, %s296
      %p303 = scmp.eq.s32.totalorder %s50, 1
      %p304 = por %p302, %p303
      %p305 = scmp.ne.s32.totalorder %s296, %s297
      %p306 = scmp.eq.s32.totalorder %s50, 0
      %p307 = por %p305, %p306
      %p308 = scmp.ne.s32.totalorder %s296, %s297
      %p309 = scmp.eq.s32.totalorder %s51, 1
      %p310 = por %p308, %p309
      %p312 = scmp.ne.s32.totalorder %s297, %s311
      %p313 = scmp.eq.s32.totalorder %s51, 0
      %p314 = por %p312, %p313
      %s316 = sadd.s32 %s315, 1
      %p319 = scmp.eq.s32.totalorder %s45, 1
      %p320 = scmp.ne.s32.totalorder %s315, %s317
      %p321 = scmp.eq.s32.totalorder %s45, 0
      %p322 = por %p320, %p321
      %p323 = scmp.ne.s32.totalorder %s315, %s317
      %p324 = scmp.eq.s32.totalorder %s50, 1
      %p325 = por %p323, %p324
      %p326 = scmp.ne.s32.totalorder %s317, %s318
      %p327 = scmp.eq.s32.totalorder %s50, 0
      %p328 = por %p326, %p327
      %p329 = scmp.ne.s32.totalorder %s317, %s318
      %p330 = scmp.eq.s32.totalorder %s51, 1
      %p331 = por %p329, %p330
      %p333 = scmp.ne.s32.totalorder %s318, %s332
      %p334 = scmp.eq.s32.totalorder %s51, 0
      %p335 = por %p333, %p334
      %s337 = sadd.s32 %s336, 1
      %p340 = scmp.eq.s32.totalorder %s45, 1
      %p341 = scmp.ne.s32.totalorder %s336, %s338
      %p342 = scmp.eq.s32.totalorder %s45, 0
      %p343 = por %p341, %p342
      %p344 = scmp.ne.s32.totalorder %s336, %s338
      %p345 = scmp.eq.s32.totalorder %s50, 1
      %p346 = por %p344, %p345
      %p347 = scmp.ne.s32.totalorder %s338, %s339
      %p348 = scmp.eq.s32.totalorder %s50, 0
      %p349 = por %p347, %p348
      %p350 = scmp.ne.s32.totalorder %s338, %s339
      %p351 = scmp.eq.s32.totalorder %s51, 1
      %p352 = por %p350, %p351
      %p354 = scmp.ne.s32.totalorder %s339, %s353
      %p355 = scmp.eq.s32.totalorder %s51, 0
      %p356 = por %p354, %p355
      %s358 = sadd.s32 %s357, 1
      %p361 = scmp.eq.s32.totalorder %s45, 1
      %p362 = scmp.ne.s32.totalorder %s357, %s359
      %p363 = scmp.eq.s32.totalorder %s45, 0
      %p364 = por %p362, %p363
      %p365 = scmp.ne.s32.totalorder %s357, %s359
      %p366 = scmp.eq.s32.totalorder %s50, 1
      %p367 = por %p365, %p366
      %p368 = scmp.ne.s32.totalorder %s359, %s360
      %p369 = scmp.eq.s32.totalorder %s50, 0
      %p370 = por %p368, %p369
      %p371 = scmp.ne.s32.totalorder %s359, %s360
      %p372 = scmp.eq.s32.totalorder %s51, 1
      %p373 = por %p371, %p372
      %p375 = scmp.ne.s32.totalorder %s360, %s374
      %p376 = scmp.eq.s32.totalorder %s51, 0
      %p377 = por %p375, %p376
      %s379 = sadd.s32 %s378, 1
      %p382 = scmp.eq.s32.totalorder %s45, 1
      %p383 = scmp.ne.s32.totalorder %s378, %s380
      %p384 = scmp.eq.s32.totalorder %s45, 0
      %p385 = por %p383, %p384
      %p386 = scmp.ne.s32.totalorder %s378, %s380
      %p387 = scmp.eq.s32.totalorder %s50, 1
      %p388 = por %p386, %p387
      %p389 = scmp.ne.s32.totalorder %s380, %s381
      %p390 = scmp.eq.s32.totalorder %s50, 0
      %p391 = por %p389, %p390
      %p392 = scmp.ne.s32.totalorder %s380, %s381
      %p393 = scmp.eq.s32.totalorder %s51, 1
      %p394 = por %p392, %p393
      %p396 = scmp.ne.s32.totalorder %s381, %s395
      %p397 = scmp.eq.s32.totalorder %s51, 0
      %p398 = por %p396, %p397
      %s400 = sadd.s32 %s399, 1
      %p403 = scmp.eq.s32.totalorder %s45, 1
      %p404 = scmp.ne.s32.totalorder %s399, %s401
      %p405 = scmp.eq.s32.totalorder %s45, 0
      %p406 = por %p404, %p405
      %p407 = scmp.ne.s32.totalorder %s399, %s401
      %p408 = scmp.eq.s32.totalorder %s50, 1
      %p409 = por %p407, %p408
      %p410 = scmp.ne.s32.totalorder %s401, %s402
      %p411 = scmp.eq.s32.totalorder %s50, 0
      %p412 = por %p410, %p411
      %p413 = scmp.ne.s32.totalorder %s401, %s402
      %p414 = scmp.eq.s32.totalorder %s51, 1
      %p415 = por %p413, %p414
      %p417 = scmp.ne.s32.totalorder %s402, %s416
      %p418 = scmp.eq.s32.totalorder %s51, 0
      %p419 = por %p417, %p418
      %s421 = sadd.s32 %s420, 1
      %p424 = scmp.eq.s32.totalorder %s45, 1
      %p425 = scmp.ne.s32.totalorder %s420, %s422
      %p426 = scmp.eq.s32.totalorder %s45, 0
      %p427 = por %p425, %p426
      %p428 = scmp.ne.s32.totalorder %s420, %s422
      %p429 = scmp.eq.s32.totalorder %s50, 1
      %p430 = por %p428, %p429
      %p431 = scmp.ne.s32.totalorder %s422, %s423
      %p432 = scmp.eq.s32.totalorder %s50, 0
      %p433 = por %p431, %p432
      %p434 = scmp.ne.s32.totalorder %s422, %s423
      %p435 = scmp.eq.s32.totalorder %s51, 1
      %p436 = por %p434, %p435
      %p438 = scmp.ne.s32.totalorder %s423, %s437
      %p439 = scmp.eq.s32.totalorder %s51, 0
      %p440 = por %p438, %p439
      %s442 = sadd.s32 %s441, 1
      %p445 = scmp.eq.s32.totalorder %s45, 1
      %p446 = scmp.ne.s32.totalorder %s441, %s443
      %p447 = scmp.eq.s32.totalorder %s45, 0
      %p448 = por %p446, %p447
      %p449 = scmp.ne.s32.totalorder %s441, %s443
      %p450 = scmp.eq.s32.totalorder %s50, 1
      %p451 = por %p449, %p450
      %p452 = scmp.ne.s32.totalorder %s443, %s444
      %p453 = scmp.eq.s32.totalorder %s50, 0
      %p454 = por %p452, %p453
      %p455 = scmp.ne.s32.totalorder %s443, %s444
      %p456 = scmp.eq.s32.totalorder %s51, 1
      %p457 = por %p455, %p456
      %p459 = scmp.ne.s32.totalorder %s444, %s458
      %p460 = scmp.eq.s32.totalorder %s51, 0
      %p461 = por %p459, %p460
      %s463 = sadd.s32 %s462, 1
      %p466 = scmp.eq.s32.totalorder %s45, 1
      %p467 = scmp.ne.s32.totalorder %s462, %s464
      %p468 = scmp.eq.s32.totalorder %s45, 0
      %p469 = por %p467, %p468
      %p470 = scmp.ne.s32.totalorder %s462, %s464
      %p471 = scmp.eq.s32.totalorder %s50, 1
      %p472 = por %p470, %p471
      %p473 = scmp.ne.s32.totalorder %s464, %s465
      %p474 = scmp.eq.s32.totalorder %s50, 0
      %p475 = por %p473, %p474
      %p476 = scmp.ne.s32.totalorder %s464, %s465
      %p477 = scmp.eq.s32.totalorder %s51, 1
      %p478 = por %p476, %p477
      %p480 = scmp.ne.s32.totalorder %s465, %s479
      %p481 = scmp.eq.s32.totalorder %s51, 0
      %p482 = por %p480, %p481
      %s484 = sadd.s32 %s483, 1
      %p487 = scmp.eq.s32.totalorder %s45, 1
      %p488 = scmp.ne.s32.totalorder %s483, %s485
      %p489 = scmp.eq.s32.totalorder %s45, 0
      %p490 = por %p488, %p489
      %p491 = scmp.ne.s32.totalorder %s483, %s485
      %p492 = scmp.eq.s32.totalorder %s50, 1
      %p493 = por %p491, %p492
      %p494 = scmp.ne.s32.totalorder %s485, %s486
      %p495 = scmp.eq.s32.totalorder %s50, 0
      %p496 = por %p494, %p495
      %p497 = scmp.ne.s32.totalorder %s485, %s486
      %p498 = scmp.eq.s32.totalorder %s51, 1
      %p499 = por %p497, %p498
      %p501 = scmp.ne.s32.totalorder %s486, %s500
      %p502 = scmp.eq.s32.totalorder %s51, 0
      %p503 = por %p501, %p502
      %s505 = sadd.s32 %s504, 1
      %p508 = scmp.eq.s32.totalorder %s45, 1
      %p509 = scmp.ne.s32.totalorder %s504, %s506
      %p510 = scmp.eq.s32.totalorder %s45, 0
      %p511 = por %p509, %p510
      %p512 = scmp.ne.s32.totalorder %s504, %s506
      %p513 = scmp.eq.s32.totalorder %s50, 1
      %p514 = por %p512, %p513
      %p515 = scmp.ne.s32.totalorder %s506, %s507
      %p516 = scmp.eq.s32.totalorder %s50, 0
      %p517 = por %p515, %p516
      %p518 = scmp.ne.s32.totalorder %s506, %s507
      %p519 = scmp.eq.s32.totalorder %s51, 1
      %p520 = por %p518, %p519
      %p522 = scmp.ne.s32.totalorder %s507, %s521
      %p523 = scmp.eq.s32.totalorder %s51, 0
      %p524 = por %p522, %p523
      %s526 = sadd.s32 %s525, 1
      %p529 = scmp.eq.s32.totalorder %s45, 1
      %p530 = scmp.ne.s32.totalorder %s525, %s527
      %p531 = scmp.eq.s32.totalorder %s45, 0
      %p532 = por %p530, %p531
      %p533 = scmp.ne.s32.totalorder %s525, %s527
      %p534 = scmp.eq.s32.totalorder %s50, 1
      %p535 = por %p533, %p534
      %p536 = scmp.ne.s32.totalorder %s527, %s528
      %p537 = scmp.eq.s32.totalorder %s50, 0
      %p538 = por %p536, %p537
      %p539 = scmp.ne.s32.totalorder %s527, %s528
      %p540 = scmp.eq.s32.totalorder %s51, 1
      %p541 = por %p539, %p540
      %p543 = scmp.ne.s32.totalorder %s528, %s542
      %p544 = scmp.eq.s32.totalorder %s51, 0
      %p545 = por %p543, %p544
      %s547 = sadd.s32 %s546, 1
      %p550 = scmp.eq.s32.totalorder %s45, 1
      %p551 = scmp.ne.s32.totalorder %s546, %s548
      %p552 = scmp.eq.s32.totalorder %s45, 0
      %p553 = por %p551, %p552
      %p554 = scmp.ne.s32.totalorder %s546, %s548
      %p555 = scmp.eq.s32.totalorder %s50, 1
      %p556 = por %p554, %p555
      %p557 = scmp.ne.s32.totalorder %s548, %s549
      %p558 = scmp.eq.s32.totalorder %s50, 0
      %p559 = por %p557, %p558
      %p560 = scmp.ne.s32.totalorder %s548, %s549
      %p561 = scmp.eq.s32.totalorder %s51, 1
      %p562 = por %p560, %p561
      %p564 = scmp.ne.s32.totalorder %s549, %s563
      %p565 = scmp.eq.s32.totalorder %s51, 0
      %p566 = por %p564, %p565
      %s567 = ssub.s32 %s45, %s52
      %p568 = scmp.eq.s32.totalorder %s567, 0
      %s570 = sadd.s32 %s569, 1
      %s571 = scalar_select %p568, %s569, %s570
      %p574 = pneg %p568
      %p575 = scmp.eq.s32.totalorder %s45, 1
      %p576 = por %p574, %p575
      %p577 = scmp.ne.s32.totalorder %s569, %s572
      %p578 = scmp.eq.s32.totalorder %s45, 0
      %p579 = por %p577, %p578
      %p580 = scmp.ne.s32.totalorder %s569, %s572
      %p581 = scmp.eq.s32.totalorder %s50, 1
      %p582 = por %p580, %p581
      %p583 = scmp.ne.s32.totalorder %s572, %s573
      %p584 = scmp.eq.s32.totalorder %s50, 0
      %p585 = por %p583, %p584
      %p586 = scmp.ne.s32.totalorder %s572, %s573
      %p587 = scmp.eq.s32.totalorder %s51, 1
      %p588 = por %p586, %p587
      %p590 = scmp.ne.s32.totalorder %s573, %s589
      %p591 = scmp.eq.s32.totalorder %s51, 0
      %p592 = por %p590, %p591
      %p593 = scmp.le.s32.totalorder 1, %s45
      %p594 = scmp.lt.s32.totalorder %s45, 3
      %p595 = pnand %p593, %p594
      %p596 = pneg %p595
      // Predicated region
      $region9: #{tpu_custom_call.1} parent=5 // pred_check
        _
      $region10: #{tpu_custom_call.1} parent=5 // pred_check_branch
        %598 = sbr.rel (%p595) target = $region12
      $region11: #{tpu_custom_call.1} parent=5 // pred_region
        %s599 = ssub.s32 %s45, 1
        // Predicated region
        $region13: #{tpu_custom_call.1} parent=11 // pred_check
          %p600 = pneg %p118
        $region14: #{tpu_custom_call.1} parent=11 // pred_check_branch
          %602 = sbr.rel (%p600) target = $region16
        $region15: #{tpu_custom_call.1} parent=11 // pred_region
          %s604 = ssub.s32 16, 16
          %605 = vsyncadd [#allocation6], %s604
          %s607 = sshll.u32 [#allocation7], 4
          %s608 = int_to_ptr.vmem [resolvable:$true] %s607
          %610 = dma.hbm_to_vmem [thread:$0]  %s2, 16, %s608, [#allocation6]
        $region16: #{tpu_custom_call.1} parent=11 // pred_fallthru
          _
        // Predicated region
        $region17: #{tpu_custom_call.1} parent=11 // pred_check
          %p611 = pneg %p139
        $region18: #{tpu_custom_call.1} parent=11 // pred_check_branch
          %613 = sbr.rel (%p611) target = $region20
        $region19: #{tpu_custom_call.1} parent=11 // pred_region
          %s615 = ssub.s32 16, 16
          %616 = vsyncadd [#allocation9], %s615
          %s618 = sshll.u32 [#allocation8], 4
          %s619 = int_to_ptr.vmem [resolvable:$true] %s618
          %621 = dma.hbm_to_vmem [thread:$0]  %s3, 16, %s619, [#allocation9]
        $region20: #{tpu_custom_call.1} parent=11 // pred_fallthru
          _
        // Predicated region
        $region21: #{tpu_custom_call.1} parent=11 // pred_check
          %p622 = pneg %p160
        $region22: #{tpu_custom_call.1} parent=11 // pred_check_branch
          %624 = sbr.rel (%p622) target = $region24
        $region23: #{tpu_custom_call.1} parent=11 // pred_region
          _
        $region24: #{tpu_custom_call.1} parent=11 // pred_fallthru
          _
        // Predicated region
        $region25: #{tpu_custom_call.1} parent=11 // pred_check
          %p625 = pneg %p181
        $region26: #{tpu_custom_call.1} parent=11 // pred_check_branch
          %627 = sbr.rel (%p625) target = $region28
        $region27: #{tpu_custom_call.1} parent=11 // pred_region
          %s629 = ssub.s32 16, 16
          %630 = vsyncadd [#allocation9], %s629
          %s632 = sshll.u32 [#allocation10], 4
          %s633 = int_to_ptr.vmem [resolvable:$true] %s632
          %635 = dma.hbm_to_vmem [thread:$0]  %s5, 16, %s633, [#allocation9]
        $region28: #{tpu_custom_call.1} parent=11 // pred_fallthru
          _
        // Predicated region
        $region29: #{tpu_custom_call.1} parent=11 // pred_check
          %p636 = pneg %p202
        $region30: #{tpu_custom_call.1} parent=11 // pred_check_branch
          %638 = sbr.rel (%p636) target = $region32
        $region31: #{tpu_custom_call.1} parent=11 // pred_region
          _
        $region32: #{tpu_custom_call.1} parent=11 // pred_fallthru
          _
        // Predicated region
        $region33: #{tpu_custom_call.1} parent=11 // pred_check
          %p639 = pneg %p223
        $region34: #{tpu_custom_call.1} parent=11 // pred_check_branch
          %641 = sbr.rel (%p639) target = $region36
        $region35: #{tpu_custom_call.1} parent=11 // pred_region
          %s643 = ssub.s32 16, 16
          %644 = vsyncadd [#allocation12], %s643
          %s646 = sshll.u32 [#allocation11], 4
          %s647 = int_to_ptr.vmem [resolvable:$true] %s646
          %649 = dma.hbm_to_vmem [thread:$0]  %s7, 16, %s647, [#allocation12]
        $region36: #{tpu_custom_call.1} parent=11 // pred_fallthru
          _
        // Predicated region
        $region37: #{tpu_custom_call.1} parent=11 // pred_check
          %p650 = pneg %p244
        $region38: #{tpu_custom_call.1} parent=11 // pred_check_branch
          %652 = sbr.rel (%p650) target = $region40
        $region39: #{tpu_custom_call.1} parent=11 // pred_region
          %s654 = ssub.s32 16, 16
          %655 = vsyncadd [#allocation12], %s654
          %s657 = sshll.u32 [#allocation13], 4
          %s658 = int_to_ptr.vmem [resolvable:$true] %s657
          %660 = dma.hbm_to_vmem [thread:$0]  %s8, 16, %s658, [#allocation12]
        $region40: #{tpu_custom_call.1} parent=11 // pred_fallthru
          _
        // Predicated region
        $region41: #{tpu_custom_call.1} parent=11 // pred_check
          %p661 = pneg %p265
        $region42: #{tpu_custom_call.1} parent=11 // pred_check_branch
          %663 = sbr.rel (%p661) target = $region44
        $region43: #{tpu_custom_call.1} parent=11 // pred_region
          %s665 = ssub.s32 16, 16
          %666 = vsyncadd [#allocation15], %s665
          %s668 = sshll.u32 [#allocation14], 4
          %s669 = int_to_ptr.vmem [resolvable:$true] %s668
          %671 = dma.hbm_to_vmem [thread:$0]  %s9, 16, %s669, [#allocation15]
        $region44: #{tpu_custom_call.1} parent=11 // pred_fallthru
          _
        // Predicated region
        $region45: #{tpu_custom_call.1} parent=11 // pred_check
          %p672 = pneg %p286
        $region46: #{tpu_custom_call.1} parent=11 // pred_check_branch
          %674 = sbr.rel (%p672) target = $region48
        $region47: #{tpu_custom_call.1} parent=11 // pred_region
          _
        $region48: #{tpu_custom_call.1} parent=11 // pred_fallthru
          _
        // Predicated region
        $region49: #{tpu_custom_call.1} parent=11 // pred_check
          %p675 = pneg %p307
        $region50: #{tpu_custom_call.1} parent=11 // pred_check_branch
          %677 = sbr.rel (%p675) target = $region52
        $region51: #{tpu_custom_call.1} parent=11 // pred_region
          %s679 = ssub.s32 16, 16
          %680 = vsyncadd [#allocation15], %s679
          %s682 = sshll.u32 [#allocation16], 4
          %s683 = int_to_ptr.vmem [resolvable:$true] %s682
          %685 = dma.hbm_to_vmem [thread:$0]  %s11, 16, %s683, [#allocation15]
        $region52: #{tpu_custom_call.1} parent=11 // pred_fallthru
          _
        // Predicated region
        $region53: #{tpu_custom_call.1} parent=11 // pred_check
          %p686 = pneg %p328
        $region54: #{tpu_custom_call.1} parent=11 // pred_check_branch
          %688 = sbr.rel (%p686) target = $region56
        $region55: #{tpu_custom_call.1} parent=11 // pred_region
          _
        $region56: #{tpu_custom_call.1} parent=11 // pred_fallthru
          _
        // Predicated region
        $region57: #{tpu_custom_call.1} parent=11 // pred_check
          %p689 = pneg %p349
        $region58: #{tpu_custom_call.1} parent=11 // pred_check_branch
          %691 = sbr.rel (%p689) target = $region60
        $region59: #{tpu_custom_call.1} parent=11 // pred_region
          %s693 = ssub.s32 16, 16
          %694 = vsyncadd [#allocation18], %s693
          %s696 = sshll.u32 [#allocation17], 4
          %s697 = int_to_ptr.vmem [resolvable:$true] %s696
          %699 = dma.hbm_to_vmem [thread:$0]  %s13, 16, %s697, [#allocation18]
        $region60: #{tpu_custom_call.1} parent=11 // pred_fallthru
          _
        // Predicated region
        $region61: #{tpu_custom_call.1} parent=11 // pred_check
          %p700 = pneg %p370
        $region62: #{tpu_custom_call.1} parent=11 // pred_check_branch
          %702 = sbr.rel (%p700) target = $region64
        $region63: #{tpu_custom_call.1} parent=11 // pred_region
          %s704 = ssub.s32 512, 512
          %705 = vsyncadd [#allocation18], %s704
          %s706 = sshll.u32 [#allocation19], 4
          %s707 = int_to_ptr.vmem [resolvable:$true] %s706
          %712 = dma.hbm_to_vmem [thread:$0]  %s14, 512, %s707, [#allocation18], 128, 128, 8
        $region64: #{tpu_custom_call.1} parent=11 // pred_fallthru
          _
        // Predicated region
        $region65: #{tpu_custom_call.1} parent=11 // pred_check
          %p713 = pneg %p391
        $region66: #{tpu_custom_call.1} parent=11 // pred_check_branch
          %715 = sbr.rel (%p713) target = $region68
        $region67: #{tpu_custom_call.1} parent=11 // pred_region
          %s717 = ssub.s32 16, 16
          %718 = vsyncadd [#allocation21], %s717
          %s720 = sshll.u32 [#allocation20], 4
          %s721 = int_to_ptr.vmem [resolvable:$true] %s720
          %723 = dma.hbm_to_vmem [thread:$0]  %s15, 16, %s721, [#allocation21]
        $region68: #{tpu_custom_call.1} parent=11 // pred_fallthru
          _
        // Predicated region
        $region69: #{tpu_custom_call.1} parent=11 // pred_check
          %p724 = pneg %p412
        $region70: #{tpu_custom_call.1} parent=11 // pred_check_branch
          %726 = sbr.rel (%p724) target = $region72
        $region71: #{tpu_custom_call.1} parent=11 // pred_region
          %s728 = ssub.s32 16, 16
          %729 = vsyncadd [#allocation21], %s728
          %s731 = sshll.u32 [#allocation22], 4
          %s732 = int_to_ptr.vmem [resolvable:$true] %s731
          %734 = dma.hbm_to_vmem [thread:$0]  %s16, 16, %s732, [#allocation21]
        $region72: #{tpu_custom_call.1} parent=11 // pred_fallthru
          _
        // Predicated region
        $region73: #{tpu_custom_call.1} parent=11 // pred_check
          %p735 = pneg %p433
        $region74: #{tpu_custom_call.1} parent=11 // pred_check_branch
          %737 = sbr.rel (%p735) target = $region76
        $region75: #{tpu_custom_call.1} parent=11 // pred_region
          %s739 = ssub.s32 16, 16
          %740 = vsyncadd [#allocation24], %s739
          %s742 = sshll.u32 [#allocation23], 4
          %s743 = int_to_ptr.vmem [resolvable:$true] %s742
          %745 = dma.hbm_to_vmem [thread:$0]  %s17, 16, %s743, [#allocation24]
        $region76: #{tpu_custom_call.1} parent=11 // pred_fallthru
          _
        // Predicated region
        $region77: #{tpu_custom_call.1} parent=11 // pred_check
          %p746 = pneg %p454
        $region78: #{tpu_custom_call.1} parent=11 // pred_check_branch
          %748 = sbr.rel (%p746) target = $region80
        $region79: #{tpu_custom_call.1} parent=11 // pred_region
          %s750 = ssub.s32 512, 512
          %751 = vsyncadd [#allocation24], %s750
          %s752 = sshll.u32 [#allocation25], 4
          %s753 = int_to_ptr.vmem [resolvable:$true] %s752
          %758 = dma.hbm_to_vmem [thread:$0]  %s18, 512, %s753, [#allocation24], 128, 128, 8
        $region80: #{tpu_custom_call.1} parent=11 // pred_fallthru
          _
        // Predicated region
        $region81: #{tpu_custom_call.1} parent=11 // pred_check
          %p759 = pneg %p475
        $region82: #{tpu_custom_call.1} parent=11 // pred_check_branch
          %761 = sbr.rel (%p759) target = $region84
        $region83: #{tpu_custom_call.1} parent=11 // pred_region
          _
        $region84: #{tpu_custom_call.1} parent=11 // pred_fallthru
          _
        // Predicated region
        $region85: #{tpu_custom_call.1} parent=11 // pred_check
          %p762 = pneg %p496
        $region86: #{tpu_custom_call.1} parent=11 // pred_check_branch
          %764 = sbr.rel (%p762) target = $region88
        $region87: #{tpu_custom_call.1} parent=11 // pred_region
          _
        $region88: #{tpu_custom_call.1} parent=11 // pred_fallthru
          _
        // Predicated region
        $region89: #{tpu_custom_call.1} parent=11 // pred_check
          %p765 = pneg %p517
        $region90: #{tpu_custom_call.1} parent=11 // pred_check_branch
          %767 = sbr.rel (%p765) target = $region92
        $region91: #{tpu_custom_call.1} parent=11 // pred_region
          _
        $region92: #{tpu_custom_call.1} parent=11 // pred_fallthru
          _
        // Predicated region
        $region93: #{tpu_custom_call.1} parent=11 // pred_check
          %p768 = pneg %p538
        $region94: #{tpu_custom_call.1} parent=11 // pred_check_branch
          %770 = sbr.rel (%p768) target = $region96
        $region95: #{tpu_custom_call.1} parent=11 // pred_region
          _
        $region96: #{tpu_custom_call.1} parent=11 // pred_fallthru
          _
        // Predicated region
        $region97: #{tpu_custom_call.1} parent=11 // pred_check
          %p771 = pneg %p559
        $region98: #{tpu_custom_call.1} parent=11 // pred_check_branch
          %773 = sbr.rel (%p771) target = $region100
        $region99: #{tpu_custom_call.1} parent=11 // pred_region
          _
        $region100: #{tpu_custom_call.1} parent=11 // pred_fallthru
          _
      $region12: #{tpu_custom_call.1} parent=5 // pred_fallthru
        _
      %p774 = scmp.lt.s32.totalorder %s45, 2
      // Predicated region
      $region101: #{tpu_custom_call.1} parent=5 // pred_check
        %p775 = pneg %p774
      $region102: #{tpu_custom_call.1} parent=5 // pred_check_branch
        %777 = sbr.rel (%p775) target = $region104
      $region103: #{tpu_custom_call.1} parent=5 // pred_region
        // Predicated region
        $region105: #{tpu_custom_call.1} parent=103 // pred_check
          %p778 = pneg %p65
        $region106: #{tpu_custom_call.1} parent=103 // pred_check_branch
          %780 = sbr.rel (%p778) target = $region108
        $region107: #{tpu_custom_call.1} parent=103 // pred_region
          %s781 = sand.u32 %s55, 1
          %s782 = scalar_lea.sflag [#allocation3], %s781
          %s783 = sand.u32 %s55, 1
          %s784 = smul.addr %s783, 8
          %s785 = scalar_lea.vmem [#allocation2], %s784
          %s787 = ssub.s32 128, 128
          %788 = vsyncadd %s782, %s787
          %s789 = smul.addr %s45, 128
          %s790 = scalar_lea.hbm %s0, %s789
          %s792 = sshll.u32 %s785, 4
          %s793 = int_to_ptr.vmem [resolvable:$true] %s792
          %795 = dma.hbm_to_vmem [thread:$0]  %s790, 128, %s793, %s782
        $region108: #{tpu_custom_call.1} parent=103 // pred_fallthru
          _
        // Predicated region
        $region109: #{tpu_custom_call.1} parent=103 // pred_check
          %p796 = pneg %p91
        $region110: #{tpu_custom_call.1} parent=103 // pred_check_branch
          %798 = sbr.rel (%p796) target = $region112
        $region111: #{tpu_custom_call.1} parent=103 // pred_region
          %s799 = sand.u32 %s45, 1
          %s800 = scalar_lea.sflag [#allocation6], %s799
          %s801 = sand.u32 %s81, 1
          %s802 = smul.addr %s801, 8
          %s803 = scalar_lea.vmem [#allocation5], %s802
          %s805 = ssub.s32 128, 128
          %806 = vsyncadd %s800, %s805
          %s807 = smul.addr %s45, 128
          %s808 = scalar_lea.hbm %s1, %s807
          %s810 = sshll.u32 %s803, 4
          %s811 = int_to_ptr.vmem [resolvable:$true] %s810
          %813 = dma.hbm_to_vmem [thread:$0]  %s808, 128, %s811, %s800
        $region112: #{tpu_custom_call.1} parent=103 // pred_fallthru
          _
      $region104: #{tpu_custom_call.1} parent=5 // pred_fallthru
        _
      %p814 = scmp.le.s32.totalorder 1, %s45
      %p815 = scmp.lt.s32.totalorder %s45, 3
      %p816 = pnand %p814, %p815
      %p817 = pneg %p816
      // Predicated region
      $region113: #{tpu_custom_call.1} parent=5 // pred_check
        _
      $region114: #{tpu_custom_call.1} parent=5 // pred_check_branch
        %819 = sbr.rel (%p816) target = $region116
      $region115: #{tpu_custom_call.1} parent=5 // pred_region
        %s820 = ssub.s32 %s45, 1
        %s821 = sand.u32 %s58, 1
        %s822 = scalar_lea.sflag [#allocation3], %s821
        %s823 = sand.u32 %s58, 1
        %s824 = smul.addr %s823, 8
        %s825 = scalar_lea.vmem [#allocation2], %s824
        // Predicated region
        $region117: #{tpu_custom_call.1} parent=115 // pred_check
          %p826 = pneg %p71
        $region118: #{tpu_custom_call.1} parent=115 // pred_check_branch
          %828 = sbr.rel (%p826) target = $region120
        $region119: #{tpu_custom_call.1} parent=115 // pred_region
          %829 = dma.done %s822, 128
        $region120: #{tpu_custom_call.1} parent=115 // pred_fallthru
          _
        %s830 = sand.u32 %s50, 1
        %s831 = scalar_lea.sflag [#allocation6], %s830
        %s832 = sand.u32 %s84, 1
        %s833 = smul.addr %s832, 8
        %s834 = scalar_lea.vmem [#allocation5], %s833
        // Predicated region
        $region121: #{tpu_custom_call.1} parent=115 // pred_check
          %p835 = pneg %p97
        $region122: #{tpu_custom_call.1} parent=115 // pred_check_branch
          %837 = sbr.rel (%p835) target = $region124
        $region123: #{tpu_custom_call.1} parent=115 // pred_region
          %838 = dma.done %s831, 128
        $region124: #{tpu_custom_call.1} parent=115 // pred_fallthru
          _
        // Predicated region
        $region125: #{tpu_custom_call.1} parent=115 // pred_check
          %p839 = pneg %p118
        $region126: #{tpu_custom_call.1} parent=115 // pred_check_branch
          %841 = sbr.rel (%p839) target = $region128
        $region127: #{tpu_custom_call.1} parent=115 // pred_region
          %842 = dma.done [#allocation6], 16
        $region128: #{tpu_custom_call.1} parent=115 // pred_fallthru
          _
        // Predicated region
        $region129: #{tpu_custom_call.1} parent=115 // pred_check
          %p843 = pneg %p139
        $region130: #{tpu_custom_call.1} parent=115 // pred_check_branch
          %845 = sbr.rel (%p843) target = $region132
        $region131: #{tpu_custom_call.1} parent=115 // pred_region
          %846 = dma.done [#allocation9], 16
        $region132: #{tpu_custom_call.1} parent=115 // pred_fallthru
          _
        // Predicated region
        $region133: #{tpu_custom_call.1} parent=115 // pred_check
          %p847 = pneg %p181
        $region134: #{tpu_custom_call.1} parent=115 // pred_check_branch
          %849 = sbr.rel (%p847) target = $region136
        $region135: #{tpu_custom_call.1} parent=115 // pred_region
          %850 = dma.done [#allocation9], 16
        $region136: #{tpu_custom_call.1} parent=115 // pred_fallthru
          _
        // Predicated region
        $region137: #{tpu_custom_call.1} parent=115 // pred_check
          %p851 = pneg %p223
        $region138: #{tpu_custom_call.1} parent=115 // pred_check_branch
          %853 = sbr.rel (%p851) target = $region140
        $region139: #{tpu_custom_call.1} parent=115 // pred_region
          %854 = dma.done [#allocation12], 16
        $region140: #{tpu_custom_call.1} parent=115 // pred_fallthru
          _
        // Predicated region
        $region141: #{tpu_custom_call.1} parent=115 // pred_check
          %p855 = pneg %p244
        $region142: #{tpu_custom_call.1} parent=115 // pred_check_branch
          %857 = sbr.rel (%p855) target = $region144
        $region143: #{tpu_custom_call.1} parent=115 // pred_region
          %858 = dma.done [#allocation12], 16
        $region144: #{tpu_custom_call.1} parent=115 // pred_fallthru
          _
        // Predicated region
        $region145: #{tpu_custom_call.1} parent=115 // pred_check
          %p859 = pneg %p265
        $region146: #{tpu_custom_call.1} parent=115 // pred_check_branch
          %861 = sbr.rel (%p859) target = $region148
        $region147: #{tpu_custom_call.1} parent=115 // pred_region
          %862 = dma.done [#allocation15], 16
        $region148: #{tpu_custom_call.1} parent=115 // pred_fallthru
          _
        // Predicated region
        $region149: #{tpu_custom_call.1} parent=115 // pred_check
          %p863 = pneg %p307
        $region150: #{tpu_custom_call.1} parent=115 // pred_check_branch
          %865 = sbr.rel (%p863) target = $region152
        $region151: #{tpu_custom_call.1} parent=115 // pred_region
          %866 = dma.done [#allocation15], 16
        $region152: #{tpu_custom_call.1} parent=115 // pred_fallthru
          _
        // Predicated region
        $region153: #{tpu_custom_call.1} parent=115 // pred_check
          %p867 = pneg %p349
        $region154: #{tpu_custom_call.1} parent=115 // pred_check_branch
          %869 = sbr.rel (%p867) target = $region156
        $region155: #{tpu_custom_call.1} parent=115 // pred_region
          %870 = dma.done [#allocation18], 16
        $region156: #{tpu_custom_call.1} parent=115 // pred_fallthru
          _
        // Predicated region
        $region157: #{tpu_custom_call.1} parent=115 // pred_check
          %p871 = pneg %p370
        $region158: #{tpu_custom_call.1} parent=115 // pred_check_branch
          %873 = sbr.rel (%p871) target = $region160
        $region159: #{tpu_custom_call.1} parent=115 // pred_region
          %874 = dma.done [#allocation18], 512
        $region160: #{tpu_custom_call.1} parent=115 // pred_fallthru
          _
        // Predicated region
        $region161: #{tpu_custom_call.1} parent=115 // pred_check
          %p875 = pneg %p391
        $region162: #{tpu_custom_call.1} parent=115 // pred_check_branch
          %877 = sbr.rel (%p875) target = $region164
        $region163: #{tpu_custom_call.1} parent=115 // pred_region
          %878 = dma.done [#allocation21], 16
        $region164: #{tpu_custom_call.1} parent=115 // pred_fallthru
          _
        // Predicated region
        $region165: #{tpu_custom_call.1} parent=115 // pred_check
          %p879 = pneg %p412
        $region166: #{tpu_custom_call.1} parent=115 // pred_check_branch
          %881 = sbr.rel (%p879) target = $region168
        $region167: #{tpu_custom_call.1} parent=115 // pred_region
          %882 = dma.done [#allocation21], 16
        $region168: #{tpu_custom_call.1} parent=115 // pred_fallthru
          _
        // Predicated region
        $region169: #{tpu_custom_call.1} parent=115 // pred_check
          %p883 = pneg %p433
        $region170: #{tpu_custom_call.1} parent=115 // pred_check_branch
          %885 = sbr.rel (%p883) target = $region172
        $region171: #{tpu_custom_call.1} parent=115 // pred_region
          %886 = dma.done [#allocation24], 16
        $region172: #{tpu_custom_call.1} parent=115 // pred_fallthru
          _
        // Predicated region
        $region173: #{tpu_custom_call.1} parent=115 // pred_check
          %p887 = pneg %p454
        $region174: #{tpu_custom_call.1} parent=115 // pred_check_branch
          %889 = sbr.rel (%p887) target = $region176
        $region175: #{tpu_custom_call.1} parent=115 // pred_region
          %890 = dma.done [#allocation24], 512
        $region176: #{tpu_custom_call.1} parent=115 // pred_fallthru
          _
        %s891 = sand.u32 %s58, 1
        %s892 = scalar_lea.sflag [#allocation3], %s891
        %s893 = sand.u32 %s58, 1
        %s894 = smul.addr %s893, 8
        %s895 = scalar_lea.vmem [#allocation2], %s894
        %p896 = pneg %p71
        %p897 = pneg %p68
        %s898 = sand.u32 %s50, 1
        %s899 = scalar_lea.sflag [#allocation6], %s898
        %s900 = sand.u32 %s84, 1
        %s901 = smul.addr %s900, 8
        %s902 = scalar_lea.vmem [#allocation5], %s901
        %p903 = pneg %p97
        %p904 = pneg %p94
        %p905 = pneg %p118
        %p906 = pneg %p115
        %p907 = pneg %p139
        %p908 = pneg %p136
        %p909 = pneg %p160
        %p910 = pneg %p157
        %p911 = pneg %p181
        %p912 = pneg %p178
        %p913 = pneg %p202
        %p914 = pneg %p199
        %p915 = pneg %p223
        %p916 = pneg %p220
        %p917 = pneg %p244
        %p918 = pneg %p241
        %p919 = pneg %p265
        %p920 = pneg %p262
        %p921 = pneg %p286
        %p922 = pneg %p283
        %p923 = pneg %p307
        %p924 = pneg %p304
        %p925 = pneg %p328
        %p926 = pneg %p325
        %p927 = pneg %p349
        %p928 = pneg %p346
        %p929 = pneg %p370
        %p930 = pneg %p367
        %p931 = pneg %p391
        %p932 = pneg %p388
        %p933 = pneg %p412
        %p934 = pneg %p409
        %p935 = pneg %p433
        %p936 = pneg %p430
        %p937 = pneg %p454
        %p938 = pneg %p451
        %p939 = pneg %p475
        %p940 = pneg %p472
        %p941 = pneg %p496
        %p942 = pneg %p493
        %p943 = pneg %p517
        %p944 = pneg %p514
        %p945 = pneg %p538
        %p946 = pneg %p535
        %p947 = pneg %p559
        %p948 = pneg %p556
        %p949 = pneg %p585
        %p950 = pneg %p582
        %s951 = sand.u32 %s572, 1
        %s952 = scalar_lea.sflag [#allocation4], %s951
        %s953 = sand.u32 %s572, 1
        %s954 = smul.addr %s953, 8
        %s955 = scalar_lea.vmem [#allocation26], %s954
        %v956 = vld [vmem:[%s825] sm:$0xff]
        %v957 = vld [vmem:[%s834] sm:$0xff]
        %v958 = vld [vmem:[#allocation7] sm:$0x1]
        %v959 = vld [vmem:[#allocation8] sm:$0x1]
        %vm960 = vcmask 261120
        %v961 = vsel %vm960, %v956, 0.0
        %962 = vadd.xlane.f32.xlu0 %v961
        %v963 = vpop.xlane.xlu0 %962
        %v964 = vrcp.pop 32.0
        %v965 = vmul.f32 %v963, %v964
        %v966 = vsub.f32 %v956, %v965
        %v967 = vmul.f32 %v966, %v966
        %v968 = vsel %vm960, %v967, 0.0
        %969 = vadd.xlane.f32.xlu0 %v968
        %v970 = vpop.xlane.xlu0 %969
        %v971 = vmul.f32 %v970, %v964
        %v972 = vadd.f32 %v971, 1e-05
        %v973 = vrsqrt.pop %v972
        %v974 = vmul.f32 %v966, %v973
        %v976 = vlaneseq
        %v977 = vshrl.u32 %v976, 7
        %v978 = vsub.s32 0, %v977
        %v979 = vrot.slane %v958, %v978
        %v981 = vmul.f32 %v974, %v979
        %v983 = vlaneseq
        %v984 = vshrl.u32 %v983, 7
        %v985 = vsub.s32 0, %v984
        %v986 = vrot.slane %v959, %v985
        %v988 = vadd.f32 %v981, %v986
        %v989 = vld [vmem:[%s4] sm:$0xff]
        %v990 = vld [vmem:[%s4 + $0x8] sm:$0xff]
        %v991 = vld [vmem:[%s4 + $0x10] sm:$0xff]
        %v992 = vld [vmem:[%s4 + $0x18] sm:$0xff]
        %v993 = vld [vmem:[#allocation10] sm:$0x1]
        %v995 = vlaneseq
        %v996 = vshrl.u32 %v995, 7
        %v997 = vsub.s32 0, %v996
        %v998 = vrot.slane %v993, %v997
        %v1001 = vsel %vm960, %v988, 0
        %1003 = vmatprep.subr.mxu0 0.0
        %1004 = vmatpush1.msra.mxu0 %v989
        %1005 = vmatprep.subr.mxu0 0.0
        %1006 = vmatpush1.msra.mxu0 %v990
        %1007 = vmatprep.subr.mxu0 0.0
        %1008 = vmatpush1.msra.mxu0 %v991
        %1009 = vmatprep.subr.mxu0 0.0
        %1010 = vmatpush1.msra.mxu0 %v992
        %1011 = vmatprep.subr.mxu0 0.0
        %1012 = vmatpush1.msra.mxu0 0.0
        %1013 = vmatprep.subr.mxu0 0.0
        %1014 = vmatpush1.msra.mxu0 0.0
        %1015 = vmatprep.subr.mxu0 0.0
        %1016 = vmatpush1.msra.mxu0 0.0
        %1017 = vmatprep.subr.mxu0 0.0
        %1018 = vmatpush1.msra.mxu0 0.0
        %1019 = vmatprep.subr.mxu0 0.0
        %1020 = vmatpush1.msra.mxu0 0.0
        %1021 = vmatprep.subr.mxu0 0.0
        %1022 = vmatpush1.msra.mxu0 0.0
        %1023 = vmatprep.subr.mxu0 0.0
        %1024 = vmatpush1.msra.mxu0 0.0
        %1025 = vmatprep.subr.mxu0 0.0
        %1026 = vmatpush1.msra.mxu0 0.0
        %1027 = vmatprep.subr.mxu0 0.0
        %1028 = vmatpush1.msra.mxu0 0.0
        %1029 = vmatprep.subr.mxu0 0.0
        %1030 = vmatpush1.msra.mxu0 0.0
        %1031 = vmatprep.subr.mxu0 0.0
        %1032 = vmatpush1.msra.mxu0 0.0
        %1033 = vmatprep.subr.mxu0 0.0
        %1034 = vmatpush1.msra.mxu0 0.0
        %1035 = vmatprep.subr.mxu0 0.0
        %1036 = vmatpush1.msra.mxu0 0.0
        %1037 = vmatprep.subr.mxu0 0.0
        %1038 = vmatpush1.msra.mxu0 0.0
        %1039 = vmatprep.subr.mxu0 0.0
        %1040 = vmatpush1.msra.mxu0 0.0
        %1041 = vmatprep.subr.mxu0 0.0
        %1042 = vmatpush1.msra.mxu0 0.0
        %1043 = vmatprep.subr.mxu0 0.0
        %1044 = vmatpush1.msra.mxu0 0.0
        %1045 = vmatprep.subr.mxu0 0.0
        %1046 = vmatpush1.msra.mxu0 0.0
        %1047 = vmatprep.subr.mxu0 0.0
        %1048 = vmatpush1.msra.mxu0 0.0
        %1049 = vmatprep.subr.mxu0 0.0
        %1050 = vmatpush1.msra.mxu0 0.0
        %1051 = vmatprep.subr.mxu0 0.0
        %1052 = vmatpush1.msra.mxu0 0.0
        %1053 = vmatprep.subr.mxu0 0.0
        %1054 = vmatpush1.msra.mxu0 0.0
        %1055 = vmatprep.subr.mxu0 0.0
        %1056 = vmatpush1.msra.mxu0 0.0
        %1057 = vmatprep.subr.mxu0 0.0
        %1058 = vmatpush1.msra.mxu0 0.0
        %1059 = vmatprep.subr.mxu0 0.0
        %1060 = vmatpush1.msra.mxu0 0.0
        %1061 = vmatprep.subr.mxu0 0.0
        %1062 = vmatpush1.msra.mxu0 0.0
        %1063 = vmatprep.subr.mxu0 0.0
        %1064 = vmatpush1.msra.mxu0 0.0
        %1065 = vmatprep.subr.mxu0 0.0
        %1066 = vmatpush1.msra.mxu0 0.0
        %1067 = vmatprep.mubr.f32.mxu0 0.0
        %1068 = vmatmul.mubr.f32.gmra.mrb[0].mxu0 %v1001
        %v1069 = vpop.f32.mrb[0].mxu0
        %v1070 = vadd.f32 %v998, %v1069
        %v1071 = vpop.f32.mrb[0].mxu0
        %1072 = vdwg.mxu0
        %1074 = vrot.lane.b32.xlu0 %v1070, 120
        %v1075 = vpop.permute.xlu0 %1074
        %1076 = vrot.lane.b32.xlu0 %v1070, 112
        %v1077 = vpop.permute.xlu0 %1076
        %1078 = vrot.lane.b32.xlu0 %v1070, 104
        %v1079 = vpop.permute.xlu0 %1078
        %v1080 = vld [vmem:[%s6] sm:$0xff]
        %v1081 = vld [vmem:[%s6 + $0x8] sm:$0xff]
        %v1082 = vld [vmem:[%s6 + $0x10] sm:$0xff]
        %v1083 = vld [vmem:[%s6 + $0x18] sm:$0xff]
        %v1084 = vld [vmem:[#allocation11] sm:$0x1]
        %1085 = vrot.lane.b32.xlu0 %v1070, 96
        %v1086 = vpop.permute.xlu0 %1085
        %vm1087 = vcmask 64512
        %v1088 = vsel %vm1087, %v1070, 0
        %v1090 = vsel %vm1087, %v1086, 0
        %1092 = vmatprep.subr.mxu0 0.0
        %1093 = vmatpush1.xpose.msra.mxu0 %v1090
        %1094 = vmatprep.subr.mxu0 0.0
        %1095 = vmatpush1.xpose.msra.mxu0 0.0
        %1096 = vmatprep.subr.mxu0 0.0
        %1097 = vmatpush1.xpose.msra.mxu0 0.0
        %1098 = vmatprep.subr.mxu0 0.0
        %1099 = vmatpush1.xpose.msra.mxu0 0.0
        %1100 = vmatprep.subr.mxu0 0.0
        %1101 = vmatpush1.xpose.msra.mxu0 0.0
        %1102 = vmatprep.subr.mxu0 0.0
        %1103 = vmatpush1.xpose.msra.mxu0 0.0
        %1104 = vmatprep.subr.mxu0 0.0
        %1105 = vmatpush1.xpose.msra.mxu0 0.0
        %1106 = vmatprep.subr.mxu0 0.0
        %1107 = vmatpush1.xpose.msra.mxu0 0.0
        %1108 = vmatprep.subr.mxu0 0.0
        %1109 = vmatpush1.xpose.msra.mxu0 0.0
        %1110 = vmatprep.subr.mxu0 0.0
        %1111 = vmatpush1.xpose.msra.mxu0 0.0
        %1112 = vmatprep.subr.mxu0 0.0
        %1113 = vmatpush1.xpose.msra.mxu0 0.0
        %1114 = vmatprep.subr.mxu0 0.0
        %1115 = vmatpush1.xpose.msra.mxu0 0.0
        %1116 = vmatprep.subr.mxu0 0.0
        %1117 = vmatpush1.xpose.msra.mxu0 0.0
        %1118 = vmatprep.subr.mxu0 0.0
        %1119 = vmatpush1.xpose.msra.mxu0 0.0
        %1120 = vmatprep.subr.mxu0 0.0
        %1121 = vmatpush1.xpose.msra.mxu0 0.0
        %1122 = vmatprep.subr.mxu0 0.0
        %1123 = vmatpush1.xpose.msra.mxu0 0.0
        %1124 = vmatprep.subr.mxu0 0.0
        %1125 = vmatpush1.xpose.msra.mxu0 0.0
        %1126 = vmatprep.subr.mxu0 0.0
        %1127 = vmatpush1.xpose.msra.mxu0 0.0
        %1128 = vmatprep.subr.mxu0 0.0
        %1129 = vmatpush1.xpose.msra.mxu0 0.0
        %1130 = vmatprep.subr.mxu0 0.0
        %1131 = vmatpush1.xpose.msra.mxu0 0.0
        %1132 = vmatprep.subr.mxu0 0.0
        %1133 = vmatpush1.xpose.msra.mxu0 0.0
        %1134 = vmatprep.subr.mxu0 0.0
        %1135 = vmatpush1.xpose.msra.mxu0 0.0
        %1136 = vmatprep.subr.mxu0 0.0
        %1137 = vmatpush1.xpose.msra.mxu0 0.0
        %1138 = vmatprep.subr.mxu0 0.0
        %1139 = vmatpush1.xpose.msra.mxu0 0.0
        %1140 = vmatprep.subr.mxu0 0.0
        %1141 = vmatpush1.xpose.msra.mxu0 0.0
        %1142 = vmatprep.subr.mxu0 0.0
        %1143 = vmatpush1.xpose.msra.mxu0 0.0
        %1144 = vmatprep.subr.mxu0 0.0
        %1145 = vmatpush1.xpose.msra.mxu0 0.0
        %1146 = vmatprep.subr.mxu0 0.0
        %1147 = vmatpush1.xpose.msra.mxu0 0.0
        %1148 = vmatprep.subr.mxu0 0.0
        %1149 = vmatpush1.xpose.msra.mxu0 0.0
        %1150 = vmatprep.subr.mxu0 0.0
        %1151 = vmatpush1.xpose.msra.mxu0 0.0
        %1152 = vmatprep.subr.mxu0 0.0
        %1153 = vmatpush1.xpose.msra.mxu0 0.0
        %1154 = vmatprep.subr.mxu0 0.0
        %1155 = vmatpush1.xpose.msra.mxu0 0.0
        %1156 = vmatprep.mubr.f32.mxu0 0.0
        %1157 = vmatmul.mubr.f32.gmra.mrb[0].mxu0 %v1088
        %v1158 = vpop.f32.mrb[0].mxu0
        %v1159 = vadd.f32 0.0, %v1158
        %v1160 = vpop.f32.mrb[0].mxu0
        %1161 = vdwg.mxu0
        %1162 = vrot.lane.b32.xlu0 %v1075, 96
        %v1163 = vpop.permute.xlu0 %1162
        %v1164 = vsel %vm1087, %v1075, 0
        %v1166 = vsel %vm1087, %v1163, 0
        %1168 = vmatprep.subr.mxu0 0.0
        %1169 = vmatpush1.xpose.msra.mxu0 %v1166
        %1170 = vmatprep.subr.mxu0 0.0
        %1171 = vmatpush1.xpose.msra.mxu0 0.0
        %1172 = vmatprep.subr.mxu0 0.0
        %1173 = vmatpush1.xpose.msra.mxu0 0.0
        %1174 = vmatprep.subr.mxu0 0.0
        %1175 = vmatpush1.xpose.msra.mxu0 0.0
        %1176 = vmatprep.subr.mxu0 0.0
        %1177 = vmatpush1.xpose.msra.mxu0 0.0
        %1178 = vmatprep.subr.mxu0 0.0
        %1179 = vmatpush1.xpose.msra.mxu0 0.0
        %1180 = vmatprep.subr.mxu0 0.0
        %1181 = vmatpush1.xpose.msra.mxu0 0.0
        %1182 = vmatprep.subr.mxu0 0.0
        %1183 = vmatpush1.xpose.msra.mxu0 0.0
        %1184 = vmatprep.subr.mxu0 0.0
        %1185 = vmatpush1.xpose.msra.mxu0 0.0
        %1186 = vmatprep.subr.mxu0 0.0
        %1187 = vmatpush1.xpose.msra.mxu0 0.0
        %1188 = vmatprep.subr.mxu0 0.0
        %1189 = vmatpush1.xpose.msra.mxu0 0.0
        %1190 = vmatprep.subr.mxu0 0.0
        %1191 = vmatpush1.xpose.msra.mxu0 0.0
        %1192 = vmatprep.subr.mxu0 0.0
        %1193 = vmatpush1.xpose.msra.mxu0 0.0
        %1194 = vmatprep.subr.mxu0 0.0
        %1195 = vmatpush1.xpose.msra.mxu0 0.0
        %1196 = vmatprep.subr.mxu0 0.0
        %1197 = vmatpush1.xpose.msra.mxu0 0.0
        %1198 = vmatprep.subr.mxu0 0.0
        %1199 = vmatpush1.xpose.msra.mxu0 0.0
        %1200 = vmatprep.subr.mxu0 0.0
        %1201 = vmatpush1.xpose.msra.mxu0 0.0
        %1202 = vmatprep.subr.mxu0 0.0
        %1203 = vmatpush1.xpose.msra.mxu0 0.0
        %1204 = vmatprep.subr.mxu0 0.0
        %1205 = vmatpush1.xpose.msra.mxu0 0.0
        %1206 = vmatprep.subr.mxu0 0.0
        %1207 = vmatpush1.xpose.msra.mxu0 0.0
        %1208 = vmatprep.subr.mxu0 0.0
        %1209 = vmatpush1.xpose.msra.mxu0 0.0
        %1210 = vmatprep.subr.mxu0 0.0
        %1211 = vmatpush1.xpose.msra.mxu0 0.0
        %1212 = vmatprep.subr.mxu0 0.0
        %1213 = vmatpush1.xpose.msra.mxu0 0.0
        %1214 = vmatprep.subr.mxu0 0.0
        %1215 = vmatpush1.xpose.msra.mxu0 0.0
        %1216 = vmatprep.subr.mxu0 0.0
        %1217 = vmatpush1.xpose.msra.mxu0 0.0
        %1218 = vmatprep.subr.mxu0 0.0
        %1219 = vmatpush1.xpose.msra.mxu0 0.0
        %1220 = vmatprep.subr.mxu0 0.0
        %1221 = vmatpush1.xpose.msra.mxu0 0.0
        %1222 = vmatprep.subr.mxu0 0.0
        %1223 = vmatpush1.xpose.msra.mxu0 0.0
        %1224 = vmatprep.subr.mxu0 0.0
        %1225 = vmatpush1.xpose.msra.mxu0 0.0
        %1226 = vmatprep.subr.mxu0 0.0
        %1227 = vmatpush1.xpose.msra.mxu0 0.0
        %1228 = vmatprep.subr.mxu0 0.0
        %1229 = vmatpush1.xpose.msra.mxu0 0.0
        %1230 = vmatprep.subr.mxu0 0.0
        %1231 = vmatpush1.xpose.msra.mxu0 0.0
        %1232 = vmatprep.mubr.f32.mxu0 0.0
        %1233 = vmatmul.mubr.f32.gmra.mrb[0].mxu0 %v1164
        %v1234 = vpop.f32.mrb[0].mxu0
        %v1235 = vadd.f32 0.0, %v1234
        %v1236 = vpop.f32.mrb[0].mxu0
        %1237 = vdwg.mxu0
        %1238 = vrot.lane.b32.xlu0 %v1077, 96
        %v1239 = vpop.permute.xlu0 %1238
        %v1240 = vsel %vm1087, %v1077, 0
        %v1242 = vsel %vm1087, %v1239, 0
        %1244 = vmatprep.subr.mxu0 0.0
        %1245 = vmatpush1.xpose.msra.mxu0 %v1242
        %1246 = vmatprep.subr.mxu0 0.0
        %1247 = vmatpush1.xpose.msra.mxu0 0.0
        %1248 = vmatprep.subr.mxu0 0.0
        %1249 = vmatpush1.xpose.msra.mxu0 0.0
        %1250 = vmatprep.subr.mxu0 0.0
        %1251 = vmatpush1.xpose.msra.mxu0 0.0
        %1252 = vmatprep.subr.mxu0 0.0
        %1253 = vmatpush1.xpose.msra.mxu0 0.0
        %1254 = vmatprep.subr.mxu0 0.0
        %1255 = vmatpush1.xpose.msra.mxu0 0.0
        %1256 = vmatprep.subr.mxu0 0.0
        %1257 = vmatpush1.xpose.msra.mxu0 0.0
        %1258 = vmatprep.subr.mxu0 0.0
        %1259 = vmatpush1.xpose.msra.mxu0 0.0
        %1260 = vmatprep.subr.mxu0 0.0
        %1261 = vmatpush1.xpose.msra.mxu0 0.0
        %1262 = vmatprep.subr.mxu0 0.0
        %1263 = vmatpush1.xpose.msra.mxu0 0.0
        %1264 = vmatprep.subr.mxu0 0.0
        %1265 = vmatpush1.xpose.msra.mxu0 0.0
        %1266 = vmatprep.subr.mxu0 0.0
        %1267 = vmatpush1.xpose.msra.mxu0 0.0
        %1268 = vmatprep.subr.mxu0 0.0
        %1269 = vmatpush1.xpose.msra.mxu0 0.0
        %1270 = vmatprep.subr.mxu0 0.0
        %1271 = vmatpush1.xpose.msra.mxu0 0.0
        %1272 = vmatprep.subr.mxu0 0.0
        %1273 = vmatpush1.xpose.msra.mxu0 0.0
        %1274 = vmatprep.subr.mxu0 0.0
        %1275 = vmatpush1.xpose.msra.mxu0 0.0
        %1276 = vmatprep.subr.mxu0 0.0
        %1277 = vmatpush1.xpose.msra.mxu0 0.0
        %1278 = vmatprep.subr.mxu0 0.0
        %1279 = vmatpush1.xpose.msra.mxu0 0.0
        %1280 = vmatprep.subr.mxu0 0.0
        %1281 = vmatpush1.xpose.msra.mxu0 0.0
        %1282 = vmatprep.subr.mxu0 0.0
        %1283 = vmatpush1.xpose.msra.mxu0 0.0
        %1284 = vmatprep.subr.mxu0 0.0
        %1285 = vmatpush1.xpose.msra.mxu0 0.0
        %1286 = vmatprep.subr.mxu0 0.0
        %1287 = vmatpush1.xpose.msra.mxu0 0.0
        %1288 = vmatprep.subr.mxu0 0.0
        %1289 = vmatpush1.xpose.msra.mxu0 0.0
        %1290 = vmatprep.subr.mxu0 0.0
        %1291 = vmatpush1.xpose.msra.mxu0 0.0
        %1292 = vmatprep.subr.mxu0 0.0
        %1293 = vmatpush1.xpose.msra.mxu0 0.0
        %1294 = vmatprep.subr.mxu0 0.0
        %1295 = vmatpush1.xpose.msra.mxu0 0.0
        %1296 = vmatprep.subr.mxu0 0.0
        %1297 = vmatpush1.xpose.msra.mxu0 0.0
        %1298 = vmatprep.subr.mxu0 0.0
        %1299 = vmatpush1.xpose.msra.mxu0 0.0
        %1300 = vmatprep.subr.mxu0 0.0
        %1301 = vmatpush1.xpose.msra.mxu0 0.0
        %1302 = vmatprep.subr.mxu0 0.0
        %1303 = vmatpush1.xpose.msra.mxu0 0.0
        %1304 = vmatprep.subr.mxu0 0.0
        %1305 = vmatpush1.xpose.msra.mxu0 0.0
        %1306 = vmatprep.subr.mxu0 0.0
        %1307 = vmatpush1.xpose.msra.mxu0 0.0
        %1308 = vmatprep.mubr.f32.mxu0 0.0
        %1309 = vmatmul.mubr.f32.gmra.mrb[0].mxu0 %v1240
        %v1310 = vpop.f32.mrb[0].mxu0
        %v1311 = vadd.f32 0.0, %v1310
        %v1312 = vpop.f32.mrb[0].mxu0
        %1313 = vdwg.mxu0
        %1314 = vrot.lane.b32.xlu0 %v1079, 96
        %v1315 = vpop.permute.xlu0 %1314
        %v1316 = vsel %vm1087, %v1079, 0
        %v1318 = vsel %vm1087, %v1315, 0
        %1320 = vmatprep.subr.mxu0 0.0
        %1321 = vmatpush1.xpose.msra.mxu0 %v1318
        %1322 = vmatprep.subr.mxu0 0.0
        %1323 = vmatpush1.xpose.msra.mxu0 0.0
        %1324 = vmatprep.subr.mxu0 0.0
        %1325 = vmatpush1.xpose.msra.mxu0 0.0
        %1326 = vmatprep.subr.mxu0 0.0
        %1327 = vmatpush1.xpose.msra.mxu0 0.0
        %1328 = vmatprep.subr.mxu0 0.0
        %1329 = vmatpush1.xpose.msra.mxu0 0.0
        %1330 = vmatprep.subr.mxu0 0.0
        %1331 = vmatpush1.xpose.msra.mxu0 0.0
        %1332 = vmatprep.subr.mxu0 0.0
        %1333 = vmatpush1.xpose.msra.mxu0 0.0
        %1334 = vmatprep.subr.mxu0 0.0
        %1335 = vmatpush1.xpose.msra.mxu0 0.0
        %1336 = vmatprep.subr.mxu0 0.0
        %1337 = vmatpush1.xpose.msra.mxu0 0.0
        %1338 = vmatprep.subr.mxu0 0.0
        %1339 = vmatpush1.xpose.msra.mxu0 0.0
        %1340 = vmatprep.subr.mxu0 0.0
        %1341 = vmatpush1.xpose.msra.mxu0 0.0
        %1342 = vmatprep.subr.mxu0 0.0
        %1343 = vmatpush1.xpose.msra.mxu0 0.0
        %1344 = vmatprep.subr.mxu0 0.0
        %1345 = vmatpush1.xpose.msra.mxu0 0.0
        %1346 = vmatprep.subr.mxu0 0.0
        %1347 = vmatpush1.xpose.msra.mxu0 0.0
        %1348 = vmatprep.subr.mxu0 0.0
        %1349 = vmatpush1.xpose.msra.mxu0 0.0
        %1350 = vmatprep.subr.mxu0 0.0
        %1351 = vmatpush1.xpose.msra.mxu0 0.0
        %1352 = vmatprep.subr.mxu0 0.0
        %1353 = vmatpush1.xpose.msra.mxu0 0.0
        %1354 = vmatprep.subr.mxu0 0.0
        %1355 = vmatpush1.xpose.msra.mxu0 0.0
        %1356 = vmatprep.subr.mxu0 0.0
        %1357 = vmatpush1.xpose.msra.mxu0 0.0
        %1358 = vmatprep.subr.mxu0 0.0
        %1359 = vmatpush1.xpose.msra.mxu0 0.0
        %1360 = vmatprep.subr.mxu0 0.0
        %1361 = vmatpush1.xpose.msra.mxu0 0.0
        %1362 = vmatprep.subr.mxu0 0.0
        %1363 = vmatpush1.xpose.msra.mxu0 0.0
        %1364 = vmatprep.subr.mxu0 0.0
        %1365 = vmatpush1.xpose.msra.mxu0 0.0
        %1366 = vmatprep.subr.mxu0 0.0
        %1367 = vmatpush1.xpose.msra.mxu0 0.0
        %1368 = vmatprep.subr.mxu0 0.0
        %1369 = vmatpush1.xpose.msra.mxu0 0.0
        %1370 = vmatprep.subr.mxu0 0.0
        %1371 = vmatpush1.xpose.msra.mxu0 0.0
        %1372 = vmatprep.subr.mxu0 0.0
        %1373 = vmatpush1.xpose.msra.mxu0 0.0
        %1374 = vmatprep.subr.mxu0 0.0
        %1375 = vmatpush1.xpose.msra.mxu0 0.0
        %1376 = vmatprep.subr.mxu0 0.0
        %1377 = vmatpush1.xpose.msra.mxu0 0.0
        %1378 = vmatprep.subr.mxu0 0.0
        %1379 = vmatpush1.xpose.msra.mxu0 0.0
        %1380 = vmatprep.subr.mxu0 0.0
        %1381 = vmatpush1.xpose.msra.mxu0 0.0
        %1382 = vmatprep.subr.mxu0 0.0
        %1383 = vmatpush1.xpose.msra.mxu0 0.0
        %1384 = vmatprep.mubr.f32.mxu0 0.0
        %1385 = vmatmul.mubr.f32.gmra.mrb[0].mxu0 %v1316
        %v1386 = vpop.f32.mrb[0].mxu0
        %v1387 = vadd.f32 0.0, %v1386
        %v1388 = vpop.f32.mrb[0].mxu0
        %1389 = vdwg.mxu0
        %v1390 = vsel %vm1087, %v1159, -inf
        %1391 = vmax.xlane.f32.xlu0 %v1390
        %v1392 = vpop.xlane.xlu0 %1391
        %v1393 = vsel %vm1087, %v1235, -inf
        %1394 = vmax.xlane.f32.xlu0 %v1393
        %v1395 = vpop.xlane.xlu0 %1394
        %v1396 = vsel %vm1087, %v1311, -inf
        %1397 = vmax.xlane.f32.xlu0 %v1396
        %v1398 = vpop.xlane.xlu0 %1397
        %v1399 = vsel %vm1087, %v1387, -inf
        %1400 = vmax.xlane.f32.xlu0 %v1399
        %v1401 = vpop.xlane.xlu0 %1400
        %v1402 = vsub.f32 %v1159, %v1392
        %v1403 = vsub.f32 %v1235, %v1395
        %v1404 = vsub.f32 %v1311, %v1398
        %v1405 = vsub.f32 %v1387, %v1401
        %v1406 = vmul.f32 %v1402, 1.442695
        %v1407 = vpow.pop %v1406
        %v1408 = vmul.f32 %v1403, 1.442695
        %v1409 = vpow.pop %v1408
        %v1410 = vmul.f32 %v1404, 1.442695
        %v1411 = vpow.pop %v1410
        %v1412 = vmul.f32 %v1405, 1.442695
        %v1413 = vpow.pop %v1412
        %v1414 = vsel %vm1087, %v1407, 0.0
        %1415 = vadd.xlane.f32.xlu0 %v1414
        %v1416 = vpop.xlane.xlu0 %1415
        %v1417 = vsel %vm1087, %v1409, 0.0
        %1418 = vadd.xlane.f32.xlu0 %v1417
        %v1419 = vpop.xlane.xlu0 %1418
        %v1420 = vsel %vm1087, %v1411, 0.0
        %1421 = vadd.xlane.f32.xlu0 %v1420
        %v1422 = vpop.xlane.xlu0 %1421
        %v1423 = vsel %vm1087, %v1413, 0.0
        %1424 = vadd.xlane.f32.xlu0 %v1423
        %v1425 = vpop.xlane.xlu0 %1424
        %v1426 = vrcp.pop %v1416
        %v1427 = vrcp.pop %v1419
        %v1428 = vrcp.pop %v1422
        %v1429 = vrcp.pop %v1425
        %v1430 = vmul.f32 %v1407, %v1426
        %v1431 = vmul.f32 %v1409, %v1427
        %v1432 = vmul.f32 %v1411, %v1428
        %v1433 = vmul.f32 %v1413, %v1429
        %1434 = vrot.lane.b32.xlu0 %v1070, 64
        %v1435 = vpop.permute.xlu0 %1434
        %v1438 = vsel %vm1087, %v1430, 0
        %1440 = vmatprep.subr.mxu0 0.0
        %1441 = vmatpush1.msra.mxu0 %v1435
        %1442 = vmatprep.subr.mxu0 0.0
        %1443 = vmatpush1.msra.mxu0 0.0
        %1444 = vmatprep.subr.mxu0 0.0
        %1445 = vmatpush1.msra.mxu0 0.0
        %1446 = vmatprep.subr.mxu0 0.0
        %1447 = vmatpush1.msra.mxu0 0.0
        %1448 = vmatprep.subr.mxu0 0.0
        %1449 = vmatpush1.msra.mxu0 0.0
        %1450 = vmatprep.subr.mxu0 0.0
        %1451 = vmatpush1.msra.mxu0 0.0
        %1452 = vmatprep.subr.mxu0 0.0
        %1453 = vmatpush1.msra.mxu0 0.0
        %1454 = vmatprep.subr.mxu0 0.0
        %1455 = vmatpush1.msra.mxu0 0.0
        %1456 = vmatprep.subr.mxu0 0.0
        %1457 = vmatpush1.msra.mxu0 0.0
        %1458 = vmatprep.subr.mxu0 0.0
        %1459 = vmatpush1.msra.mxu0 0.0
        %1460 = vmatprep.subr.mxu0 0.0
        %1461 = vmatpush1.msra.mxu0 0.0
        %1462 = vmatprep.subr.mxu0 0.0
        %1463 = vmatpush1.msra.mxu0 0.0
        %1464 = vmatprep.subr.mxu0 0.0
        %1465 = vmatpush1.msra.mxu0 0.0
        %1466 = vmatprep.subr.mxu0 0.0
        %1467 = vmatpush1.msra.mxu0 0.0
        %1468 = vmatprep.subr.mxu0 0.0
        %1469 = vmatpush1.msra.mxu0 0.0
        %1470 = vmatprep.subr.mxu0 0.0
        %1471 = vmatpush1.msra.mxu0 0.0
        %1472 = vmatprep.subr.mxu0 0.0
        %1473 = vmatpush1.msra.mxu0 0.0
        %1474 = vmatprep.subr.mxu0 0.0
        %1475 = vmatpush1.msra.mxu0 0.0
        %1476 = vmatprep.subr.mxu0 0.0
        %1477 = vmatpush1.msra.mxu0 0.0
        %1478 = vmatprep.subr.mxu0 0.0
        %1479 = vmatpush1.msra.mxu0 0.0
        %1480 = vmatprep.subr.mxu0 0.0
        %1481 = vmatpush1.msra.mxu0 0.0
        %1482 = vmatprep.subr.mxu0 0.0
        %1483 = vmatpush1.msra.mxu0 0.0
        %1484 = vmatprep.subr.mxu0 0.0
        %1485 = vmatpush1.msra.mxu0 0.0
        %1486 = vmatprep.subr.mxu0 0.0
        %1487 = vmatpush1.msra.mxu0 0.0
        %1488 = vmatprep.subr.mxu0 0.0
        %1489 = vmatpush1.msra.mxu0 0.0
        %1490 = vmatprep.subr.mxu0 0.0
        %1491 = vmatpush1.msra.mxu0 0.0
        %1492 = vmatprep.subr.mxu0 0.0
        %1493 = vmatpush1.msra.mxu0 0.0
        %1494 = vmatprep.subr.mxu0 0.0
        %1495 = vmatpush1.msra.mxu0 0.0
        %1496 = vmatprep.subr.mxu0 0.0
        %1497 = vmatpush1.msra.mxu0 0.0
        %1498 = vmatprep.subr.mxu0 0.0
        %1499 = vmatpush1.msra.mxu0 0.0
        %1500 = vmatprep.subr.mxu0 0.0
        %1501 = vmatpush1.msra.mxu0 0.0
        %1502 = vmatprep.subr.mxu0 0.0
        %1503 = vmatpush1.msra.mxu0 0.0
        %1504 = vmatprep.mubr.f32.mxu0 0.0
        %1505 = vmatmul.mubr.f32.gmra.mrb[0].mxu0 %v1438
        %v1506 = vpop.f32.mrb[0].mxu0
        %v1507 = vadd.f32 0.0, %v1506
        %v1508 = vpop.f32.mrb[0].mxu0
        %1509 = vdwg.mxu0
        %1510 = vrot.lane.b32.xlu0 %v1075, 64
        %v1511 = vpop.permute.xlu0 %1510
        %v1514 = vsel %vm1087, %v1431, 0
        %1516 = vmatprep.subr.mxu0 0.0
        %1517 = vmatpush1.msra.mxu0 %v1511
        %1518 = vmatprep.subr.mxu0 0.0
        %1519 = vmatpush1.msra.mxu0 0.0
        %1520 = vmatprep.subr.mxu0 0.0
        %1521 = vmatpush1.msra.mxu0 0.0
        %1522 = vmatprep.subr.mxu0 0.0
        %1523 = vmatpush1.msra.mxu0 0.0
        %1524 = vmatprep.subr.mxu0 0.0
        %1525 = vmatpush1.msra.mxu0 0.0
        %1526 = vmatprep.subr.mxu0 0.0
        %1527 = vmatpush1.msra.mxu0 0.0
        %1528 = vmatprep.subr.mxu0 0.0
        %1529 = vmatpush1.msra.mxu0 0.0
        %1530 = vmatprep.subr.mxu0 0.0
        %1531 = vmatpush1.msra.mxu0 0.0
        %1532 = vmatprep.subr.mxu0 0.0
        %1533 = vmatpush1.msra.mxu0 0.0
        %1534 = vmatprep.subr.mxu0 0.0
        %1535 = vmatpush1.msra.mxu0 0.0
        %1536 = vmatprep.subr.mxu0 0.0
        %1537 = vmatpush1.msra.mxu0 0.0
        %1538 = vmatprep.subr.mxu0 0.0
        %1539 = vmatpush1.msra.mxu0 0.0
        %1540 = vmatprep.subr.mxu0 0.0
        %1541 = vmatpush1.msra.mxu0 0.0
        %1542 = vmatprep.subr.mxu0 0.0
        %1543 = vmatpush1.msra.mxu0 0.0
        %1544 = vmatprep.subr.mxu0 0.0
        %1545 = vmatpush1.msra.mxu0 0.0
        %1546 = vmatprep.subr.mxu0 0.0
        %1547 = vmatpush1.msra.mxu0 0.0
        %1548 = vmatprep.subr.mxu0 0.0
        %1549 = vmatpush1.msra.mxu0 0.0
        %1550 = vmatprep.subr.mxu0 0.0
        %1551 = vmatpush1.msra.mxu0 0.0
        %1552 = vmatprep.subr.mxu0 0.0
        %1553 = vmatpush1.msra.mxu0 0.0
        %1554 = vmatprep.subr.mxu0 0.0
        %1555 = vmatpush1.msra.mxu0 0.0
        %1556 = vmatprep.subr.mxu0 0.0
        %1557 = vmatpush1.msra.mxu0 0.0
        %1558 = vmatprep.subr.mxu0 0.0
        %1559 = vmatpush1.msra.mxu0 0.0
        %1560 = vmatprep.subr.mxu0 0.0
        %1561 = vmatpush1.msra.mxu0 0.0
        %1562 = vmatprep.subr.mxu0 0.0
        %1563 = vmatpush1.msra.mxu0 0.0
        %1564 = vmatprep.subr.mxu0 0.0
        %1565 = vmatpush1.msra.mxu0 0.0
        %1566 = vmatprep.subr.mxu0 0.0
        %1567 = vmatpush1.msra.mxu0 0.0
        %1568 = vmatprep.subr.mxu0 0.0
        %1569 = vmatpush1.msra.mxu0 0.0
        %1570 = vmatprep.subr.mxu0 0.0
        %1571 = vmatpush1.msra.mxu0 0.0
        %1572 = vmatprep.subr.mxu0 0.0
        %1573 = vmatpush1.msra.mxu0 0.0
        %1574 = vmatprep.subr.mxu0 0.0
        %1575 = vmatpush1.msra.mxu0 0.0
        %1576 = vmatprep.subr.mxu0 0.0
        %1577 = vmatpush1.msra.mxu0 0.0
        %1578 = vmatprep.subr.mxu0 0.0
        %1579 = vmatpush1.msra.mxu0 0.0
        %1580 = vmatprep.mubr.f32.mxu0 0.0
        %1581 = vmatmul.mubr.f32.gmra.mrb[0].mxu0 %v1514
        %v1582 = vpop.f32.mrb[0].mxu0
        %v1583 = vadd.f32 0.0, %v1582
        %v1584 = vpop.f32.mrb[0].mxu0
        %1585 = vdwg.mxu0
        %1586 = vrot.lane.b32.xlu0 %v1077, 64
        %v1587 = vpop.permute.xlu0 %1586
        %v1590 = vsel %vm1087, %v1432, 0
        %1592 = vmatprep.subr.mxu0 0.0
        %1593 = vmatpush1.msra.mxu0 %v1587
        %1594 = vmatprep.subr.mxu0 0.0
        %1595 = vmatpush1.msra.mxu0 0.0
        %1596 = vmatprep.subr.mxu0 0.0
        %1597 = vmatpush1.msra.mxu0 0.0
        %1598 = vmatprep.subr.mxu0 0.0
        %1599 = vmatpush1.msra.mxu0 0.0
        %1600 = vmatprep.subr.mxu0 0.0
        %1601 = vmatpush1.msra.mxu0 0.0
        %1602 = vmatprep.subr.mxu0 0.0
        %1603 = vmatpush1.msra.mxu0 0.0
        %1604 = vmatprep.subr.mxu0 0.0
        %1605 = vmatpush1.msra.mxu0 0.0
        %1606 = vmatprep.subr.mxu0 0.0
        %1607 = vmatpush1.msra.mxu0 0.0
        %1608 = vmatprep.subr.mxu0 0.0
        %1609 = vmatpush1.msra.mxu0 0.0
        %1610 = vmatprep.subr.mxu0 0.0
        %1611 = vmatpush1.msra.mxu0 0.0
        %1612 = vmatprep.subr.mxu0 0.0
        %1613 = vmatpush1.msra.mxu0 0.0
        %1614 = vmatprep.subr.mxu0 0.0
        %1615 = vmatpush1.msra.mxu0 0.0
        %1616 = vmatprep.subr.mxu0 0.0
        %1617 = vmatpush1.msra.mxu0 0.0
        %1618 = vmatprep.subr.mxu0 0.0
        %1619 = vmatpush1.msra.mxu0 0.0
        %1620 = vmatprep.subr.mxu0 0.0
        %1621 = vmatpush1.msra.mxu0 0.0
        %1622 = vmatprep.subr.mxu0 0.0
        %1623 = vmatpush1.msra.mxu0 0.0
        %1624 = vmatprep.subr.mxu0 0.0
        %1625 = vmatpush1.msra.mxu0 0.0
        %1626 = vmatprep.subr.mxu0 0.0
        %1627 = vmatpush1.msra.mxu0 0.0
        %1628 = vmatprep.subr.mxu0 0.0
        %1629 = vmatpush1.msra.mxu0 0.0
        %1630 = vmatprep.subr.mxu0 0.0
        %1631 = vmatpush1.msra.mxu0 0.0
        %1632 = vmatprep.subr.mxu0 0.0
        %1633 = vmatpush1.msra.mxu0 0.0
        %1634 = vmatprep.subr.mxu0 0.0
        %1635 = vmatpush1.msra.mxu0 0.0
        %1636 = vmatprep.subr.mxu0 0.0
        %1637 = vmatpush1.msra.mxu0 0.0
        %1638 = vmatprep.subr.mxu0 0.0
        %1639 = vmatpush1.msra.mxu0 0.0
        %1640 = vmatprep.subr.mxu0 0.0
        %1641 = vmatpush1.msra.mxu0 0.0
        %1642 = vmatprep.subr.mxu0 0.0
        %1643 = vmatpush1.msra.mxu0 0.0
        %1644 = vmatprep.subr.mxu0 0.0
        %1645 = vmatpush1.msra.mxu0 0.0
        %1646 = vmatprep.subr.mxu0 0.0
        %1647 = vmatpush1.msra.mxu0 0.0
        %1648 = vmatprep.subr.mxu0 0.0
        %1649 = vmatpush1.msra.mxu0 0.0
        %1650 = vmatprep.subr.mxu0 0.0
        %1651 = vmatpush1.msra.mxu0 0.0
        %1652 = vmatprep.subr.mxu0 0.0
        %1653 = vmatpush1.msra.mxu0 0.0
        %1654 = vmatprep.subr.mxu0 0.0
        %1655 = vmatpush1.msra.mxu0 0.0
        %1656 = vmatprep.mubr.f32.mxu0 0.0
        %1657 = vmatmul.mubr.f32.gmra.mrb[0].mxu0 %v1590
        %v1658 = vpop.f32.mrb[0].mxu0
        %v1659 = vadd.f32 0.0, %v1658
        %v1660 = vpop.f32.mrb[0].mxu0
        %1661 = vdwg.mxu0
        %1662 = vrot.lane.b32.xlu0 %v1079, 64
        %v1663 = vpop.permute.xlu0 %1662
        %v1666 = vsel %vm1087, %v1433, 0
        %1668 = vmatprep.subr.mxu0 0.0
        %1669 = vmatpush1.msra.mxu0 %v1663
        %1670 = vmatprep.subr.mxu0 0.0
        %1671 = vmatpush1.msra.mxu0 0.0
        %1672 = vmatprep.subr.mxu0 0.0
        %1673 = vmatpush1.msra.mxu0 0.0
        %1674 = vmatprep.subr.mxu0 0.0
        %1675 = vmatpush1.msra.mxu0 0.0
        %1676 = vmatprep.subr.mxu0 0.0
        %1677 = vmatpush1.msra.mxu0 0.0
        %1678 = vmatprep.subr.mxu0 0.0
        %1679 = vmatpush1.msra.mxu0 0.0
        %1680 = vmatprep.subr.mxu0 0.0
        %1681 = vmatpush1.msra.mxu0 0.0
        %1682 = vmatprep.subr.mxu0 0.0
        %1683 = vmatpush1.msra.mxu0 0.0
        %1684 = vmatprep.subr.mxu0 0.0
        %1685 = vmatpush1.msra.mxu0 0.0
        %1686 = vmatprep.subr.mxu0 0.0
        %1687 = vmatpush1.msra.mxu0 0.0
        %1688 = vmatprep.subr.mxu0 0.0
        %1689 = vmatpush1.msra.mxu0 0.0
        %1690 = vmatprep.subr.mxu0 0.0
        %1691 = vmatpush1.msra.mxu0 0.0
        %1692 = vmatprep.subr.mxu0 0.0
        %1693 = vmatpush1.msra.mxu0 0.0
        %1694 = vmatprep.subr.mxu0 0.0
        %1695 = vmatpush1.msra.mxu0 0.0
        %1696 = vmatprep.subr.mxu0 0.0
        %1697 = vmatpush1.msra.mxu0 0.0
        %1698 = vmatprep.subr.mxu0 0.0
        %1699 = vmatpush1.msra.mxu0 0.0
        %1700 = vmatprep.subr.mxu0 0.0
        %1701 = vmatpush1.msra.mxu0 0.0
        %1702 = vmatprep.subr.mxu0 0.0
        %1703 = vmatpush1.msra.mxu0 0.0
        %1704 = vmatprep.subr.mxu0 0.0
        %1705 = vmatpush1.msra.mxu0 0.0
        %1706 = vmatprep.subr.mxu0 0.0
        %1707 = vmatpush1.msra.mxu0 0.0
        %1708 = vmatprep.subr.mxu0 0.0
        %1709 = vmatpush1.msra.mxu0 0.0
        %1710 = vmatprep.subr.mxu0 0.0
        %1711 = vmatpush1.msra.mxu0 0.0
        %1712 = vmatprep.subr.mxu0 0.0
        %1713 = vmatpush1.msra.mxu0 0.0
        %1714 = vmatprep.subr.mxu0 0.0
        %1715 = vmatpush1.msra.mxu0 0.0
        %1716 = vmatprep.subr.mxu0 0.0
        %1717 = vmatpush1.msra.mxu0 0.0
        %1718 = vmatprep.subr.mxu0 0.0
        %1719 = vmatpush1.msra.mxu0 0.0
        %1720 = vmatprep.subr.mxu0 0.0
        %1721 = vmatpush1.msra.mxu0 0.0
        %1722 = vmatprep.subr.mxu0 0.0
        %1723 = vmatpush1.msra.mxu0 0.0
        %1724 = vmatprep.subr.mxu0 0.0
        %1725 = vmatpush1.msra.mxu0 0.0
        %1726 = vmatprep.subr.mxu0 0.0
        %1727 = vmatpush1.msra.mxu0 0.0
        %1728 = vmatprep.subr.mxu0 0.0
        %1729 = vmatpush1.msra.mxu0 0.0
        %1730 = vmatprep.subr.mxu0 0.0
        %1731 = vmatpush1.msra.mxu0 0.0
        %1732 = vmatprep.mubr.f32.mxu0 0.0
        %1733 = vmatmul.mubr.f32.gmra.mrb[0].mxu0 %v1666
        %v1734 = vpop.f32.mrb[0].mxu0
        %v1735 = vadd.f32 0.0, %v1734
        %v1736 = vpop.f32.mrb[0].mxu0
        %1737 = vdwg.mxu0
        %v1739 = vsel %vm1087, %v1507, 0
        %1741 = vmatprep.subr.mxu0 0.0
        %1742 = vmatpush1.msra.mxu0 %v1080
        %1743 = vmatprep.subr.mxu0 0.0
        %1744 = vmatpush1.msra.mxu0 0.0
        %1745 = vmatprep.subr.mxu0 0.0
        %1746 = vmatpush1.msra.mxu0 0.0
        %1747 = vmatprep.subr.mxu0 0.0
        %1748 = vmatpush1.msra.mxu0 0.0
        %1749 = vmatprep.subr.mxu0 0.0
        %1750 = vmatpush1.msra.mxu0 0.0
        %1751 = vmatprep.subr.mxu0 0.0
        %1752 = vmatpush1.msra.mxu0 0.0
        %1753 = vmatprep.subr.mxu0 0.0
        %1754 = vmatpush1.msra.mxu0 0.0
        %1755 = vmatprep.subr.mxu0 0.0
        %1756 = vmatpush1.msra.mxu0 0.0
        %1757 = vmatprep.subr.mxu0 0.0
        %1758 = vmatpush1.msra.mxu0 0.0
        %1759 = vmatprep.subr.mxu0 0.0
        %1760 = vmatpush1.msra.mxu0 0.0
        %1761 = vmatprep.subr.mxu0 0.0
        %1762 = vmatpush1.msra.mxu0 0.0
        %1763 = vmatprep.subr.mxu0 0.0
        %1764 = vmatpush1.msra.mxu0 0.0
        %1765 = vmatprep.subr.mxu0 0.0
        %1766 = vmatpush1.msra.mxu0 0.0
        %1767 = vmatprep.subr.mxu0 0.0
        %1768 = vmatpush1.msra.mxu0 0.0
        %1769 = vmatprep.subr.mxu0 0.0
        %1770 = vmatpush1.msra.mxu0 0.0
        %1771 = vmatprep.subr.mxu0 0.0
        %1772 = vmatpush1.msra.mxu0 0.0
        %1773 = vmatprep.subr.mxu0 0.0
        %1774 = vmatpush1.msra.mxu0 0.0
        %1775 = vmatprep.subr.mxu0 0.0
        %1776 = vmatpush1.msra.mxu0 0.0
        %1777 = vmatprep.subr.mxu0 0.0
        %1778 = vmatpush1.msra.mxu0 0.0
        %1779 = vmatprep.subr.mxu0 0.0
        %1780 = vmatpush1.msra.mxu0 0.0
        %1781 = vmatprep.subr.mxu0 0.0
        %1782 = vmatpush1.msra.mxu0 0.0
        %1783 = vmatprep.subr.mxu0 0.0
        %1784 = vmatpush1.msra.mxu0 0.0
        %1785 = vmatprep.subr.mxu0 0.0
        %1786 = vmatpush1.msra.mxu0 0.0
        %1787 = vmatprep.subr.mxu0 0.0
        %1788 = vmatpush1.msra.mxu0 0.0
        %1789 = vmatprep.subr.mxu0 0.0
        %1790 = vmatpush1.msra.mxu0 0.0
        %1791 = vmatprep.subr.mxu0 0.0
        %1792 = vmatpush1.msra.mxu0 0.0
        %1793 = vmatprep.subr.mxu0 0.0
        %1794 = vmatpush1.msra.mxu0 0.0
        %1795 = vmatprep.subr.mxu0 0.0
        %1796 = vmatpush1.msra.mxu0 0.0
        %1797 = vmatprep.subr.mxu0 0.0
        %1798 = vmatpush1.msra.mxu0 0.0
        %1799 = vmatprep.subr.mxu0 0.0
        %1800 = vmatpush1.msra.mxu0 0.0
        %1801 = vmatprep.subr.mxu0 0.0
        %1802 = vmatpush1.msra.mxu0 0.0
        %1803 = vmatprep.subr.mxu0 0.0
        %1804 = vmatpush1.msra.mxu0 0.0
        %1805 = vmatprep.mubr.f32.mxu0 0.0
        %1806 = vmatmul.mubr.f32.gmra.mrb[0].mxu0 %v1739
        %v1807 = vpop.f32.mrb[0].mxu0
        %v1808 = vadd.f32 0.0, %v1807
        %v1809 = vpop.f32.mrb[0].mxu0
        %1810 = vdwg.mxu0
        %v1812 = vsel %vm1087, %v1583, 0
        %1814 = vmatprep.subr.mxu0 0.0
        %1815 = vmatpush1.msra.mxu0 %v1081
        %1816 = vmatprep.subr.mxu0 0.0
        %1817 = vmatpush1.msra.mxu0 0.0
        %1818 = vmatprep.subr.mxu0 0.0
        %1819 = vmatpush1.msra.mxu0 0.0
        %1820 = vmatprep.subr.mxu0 0.0
        %1821 = vmatpush1.msra.mxu0 0.0
        %1822 = vmatprep.subr.mxu0 0.0
        %1823 = vmatpush1.msra.mxu0 0.0
        %1824 = vmatprep.subr.mxu0 0.0
        %1825 = vmatpush1.msra.mxu0 0.0
        %1826 = vmatprep.subr.mxu0 0.0
        %1827 = vmatpush1.msra.mxu0 0.0
        %1828 = vmatprep.subr.mxu0 0.0
        %1829 = vmatpush1.msra.mxu0 0.0
        %1830 = vmatprep.subr.mxu0 0.0
        %1831 = vmatpush1.msra.mxu0 0.0
        %1832 = vmatprep.subr.mxu0 0.0
        %1833 = vmatpush1.msra.mxu0 0.0
        %1834 = vmatprep.subr.mxu0 0.0
        %1835 = vmatpush1.msra.mxu0 0.0
        %1836 = vmatprep.subr.mxu0 0.0
        %1837 = vmatpush1.msra.mxu0 0.0
        %1838 = vmatprep.subr.mxu0 0.0
        %1839 = vmatpush1.msra.mxu0 0.0
        %1840 = vmatprep.subr.mxu0 0.0
        %1841 = vmatpush1.msra.mxu0 0.0
        %1842 = vmatprep.subr.mxu0 0.0
        %1843 = vmatpush1.msra.mxu0 0.0
        %1844 = vmatprep.subr.mxu0 0.0
        %1845 = vmatpush1.msra.mxu0 0.0
        %1846 = vmatprep.subr.mxu0 0.0
        %1847 = vmatpush1.msra.mxu0 0.0
        %1848 = vmatprep.subr.mxu0 0.0
        %1849 = vmatpush1.msra.mxu0 0.0
        %1850 = vmatprep.subr.mxu0 0.0
        %1851 = vmatpush1.msra.mxu0 0.0
        %1852 = vmatprep.subr.mxu0 0.0
        %1853 = vmatpush1.msra.mxu0 0.0
        %1854 = vmatprep.subr.mxu0 0.0
        %1855 = vmatpush1.msra.mxu0 0.0
        %1856 = vmatprep.subr.mxu0 0.0
        %1857 = vmatpush1.msra.mxu0 0.0
        %1858 = vmatprep.subr.mxu0 0.0
        %1859 = vmatpush1.msra.mxu0 0.0
        %1860 = vmatprep.subr.mxu0 0.0
        %1861 = vmatpush1.msra.mxu0 0.0
        %1862 = vmatprep.subr.mxu0 0.0
        %1863 = vmatpush1.msra.mxu0 0.0
        %1864 = vmatprep.subr.mxu0 0.0
        %1865 = vmatpush1.msra.mxu0 0.0
        %1866 = vmatprep.subr.mxu0 0.0
        %1867 = vmatpush1.msra.mxu0 0.0
        %1868 = vmatprep.subr.mxu0 0.0
        %1869 = vmatpush1.msra.mxu0 0.0
        %1870 = vmatprep.subr.mxu0 0.0
        %1871 = vmatpush1.msra.mxu0 0.0
        %1872 = vmatprep.subr.mxu0 0.0
        %1873 = vmatpush1.msra.mxu0 0.0
        %1874 = vmatprep.subr.mxu0 0.0
        %1875 = vmatpush1.msra.mxu0 0.0
        %1876 = vmatprep.subr.mxu0 0.0
        %1877 = vmatpush1.msra.mxu0 0.0
        %1878 = vmatprep.mubr.f32.mxu0 0.0
        %1879 = vmatmul.mubr.f32.gmra.mrb[0].mxu0 %v1812
        %v1880 = vpop.f32.mrb[0].mxu0
        %v1881 = vadd.f32 0.0, %v1880
        %v1882 = vpop.f32.mrb[0].mxu0
        %1883 = vdwg.mxu0
        %v1885 = vsel %vm1087, %v1659, 0
        %1887 = vmatprep.subr.mxu0 0.0
        %1888 = vmatpush1.msra.mxu0 %v1082
        %1889 = vmatprep.subr.mxu0 0.0
        %1890 = vmatpush1.msra.mxu0 0.0
        %1891 = vmatprep.subr.mxu0 0.0
        %1892 = vmatpush1.msra.mxu0 0.0
        %1893 = vmatprep.subr.mxu0 0.0
        %1894 = vmatpush1.msra.mxu0 0.0
        %1895 = vmatprep.subr.mxu0 0.0
        %1896 = vmatpush1.msra.mxu0 0.0
        %1897 = vmatprep.subr.mxu0 0.0
        %1898 = vmatpush1.msra.mxu0 0.0
        %1899 = vmatprep.subr.mxu0 0.0
        %1900 = vmatpush1.msra.mxu0 0.0
        %1901 = vmatprep.subr.mxu0 0.0
        %1902 = vmatpush1.msra.mxu0 0.0
        %1903 = vmatprep.subr.mxu0 0.0
        %1904 = vmatpush1.msra.mxu0 0.0
        %1905 = vmatprep.subr.mxu0 0.0
        %1906 = vmatpush1.msra.mxu0 0.0
        %1907 = vmatprep.subr.mxu0 0.0
        %1908 = vmatpush1.msra.mxu0 0.0
        %1909 = vmatprep.subr.mxu0 0.0
        %1910 = vmatpush1.msra.mxu0 0.0
        %1911 = vmatprep.subr.mxu0 0.0
        %1912 = vmatpush1.msra.mxu0 0.0
        %1913 = vmatprep.subr.mxu0 0.0
        %1914 = vmatpush1.msra.mxu0 0.0
        %1915 = vmatprep.subr.mxu0 0.0
        %1916 = vmatpush1.msra.mxu0 0.0
        %1917 = vmatprep.subr.mxu0 0.0
        %1918 = vmatpush1.msra.mxu0 0.0
        %1919 = vmatprep.subr.mxu0 0.0
        %1920 = vmatpush1.msra.mxu0 0.0
        %1921 = vmatprep.subr.mxu0 0.0
        %1922 = vmatpush1.msra.mxu0 0.0
        %1923 = vmatprep.subr.mxu0 0.0
        %1924 = vmatpush1.msra.mxu0 0.0
        %1925 = vmatprep.subr.mxu0 0.0
        %1926 = vmatpush1.msra.mxu0 0.0
        %1927 = vmatprep.subr.mxu0 0.0
        %1928 = vmatpush1.msra.mxu0 0.0
        %1929 = vmatprep.subr.mxu0 0.0
        %1930 = vmatpush1.msra.mxu0 0.0
        %1931 = vmatprep.subr.mxu0 0.0
        %1932 = vmatpush1.msra.mxu0 0.0
        %1933 = vmatprep.subr.mxu0 0.0
        %1934 = vmatpush1.msra.mxu0 0.0
        %1935 = vmatprep.subr.mxu0 0.0
        %1936 = vmatpush1.msra.mxu0 0.0
        %1937 = vmatprep.subr.mxu0 0.0
        %1938 = vmatpush1.msra.mxu0 0.0
        %1939 = vmatprep.subr.mxu0 0.0
        %1940 = vmatpush1.msra.mxu0 0.0
        %1941 = vmatprep.subr.mxu0 0.0
        %1942 = vmatpush1.msra.mxu0 0.0
        %1943 = vmatprep.subr.mxu0 0.0
        %1944 = vmatpush1.msra.mxu0 0.0
        %1945 = vmatprep.subr.mxu0 0.0
        %1946 = vmatpush1.msra.mxu0 0.0
        %1947 = vmatprep.subr.mxu0 0.0
        %1948 = vmatpush1.msra.mxu0 0.0
        %1949 = vmatprep.subr.mxu0 0.0
        %1950 = vmatpush1.msra.mxu0 0.0
        %1951 = vmatprep.mubr.f32.mxu0 0.0
        %1952 = vmatmul.mubr.f32.gmra.mrb[0].mxu0 %v1885
        %v1953 = vpop.f32.mrb[0].mxu0
        %v1954 = vadd.f32 0.0, %v1953
        %v1955 = vpop.f32.mrb[0].mxu0
        %1956 = vdwg.mxu0
        %v1958 = vsel %vm1087, %v1735, 0
        %1960 = vmatprep.subr.mxu0 0.0
        %1961 = vmatpush1.msra.mxu0 %v1083
        %1962 = vmatprep.subr.mxu0 0.0
        %1963 = vmatpush1.msra.mxu0 0.0
        %1964 = vmatprep.subr.mxu0 0.0
        %1965 = vmatpush1.msra.mxu0 0.0
        %1966 = vmatprep.subr.mxu0 0.0
        %1967 = vmatpush1.msra.mxu0 0.0
        %1968 = vmatprep.subr.mxu0 0.0
        %1969 = vmatpush1.msra.mxu0 0.0
        %1970 = vmatprep.subr.mxu0 0.0
        %1971 = vmatpush1.msra.mxu0 0.0
        %1972 = vmatprep.subr.mxu0 0.0
        %1973 = vmatpush1.msra.mxu0 0.0
        %1974 = vmatprep.subr.mxu0 0.0
        %1975 = vmatpush1.msra.mxu0 0.0
        %1976 = vmatprep.subr.mxu0 0.0
        %1977 = vmatpush1.msra.mxu0 0.0
        %1978 = vmatprep.subr.mxu0 0.0
        %1979 = vmatpush1.msra.mxu0 0.0
        %1980 = vmatprep.subr.mxu0 0.0
        %1981 = vmatpush1.msra.mxu0 0.0
        %1982 = vmatprep.subr.mxu0 0.0
        %1983 = vmatpush1.msra.mxu0 0.0
        %1984 = vmatprep.subr.mxu0 0.0
        %1985 = vmatpush1.msra.mxu0 0.0
        %1986 = vmatprep.subr.mxu0 0.0
        %1987 = vmatpush1.msra.mxu0 0.0
        %1988 = vmatprep.subr.mxu0 0.0
        %1989 = vmatpush1.msra.mxu0 0.0
        %1990 = vmatprep.subr.mxu0 0.0
        %1991 = vmatpush1.msra.mxu0 0.0
        %1992 = vmatprep.subr.mxu0 0.0
        %1993 = vmatpush1.msra.mxu0 0.0
        %1994 = vmatprep.subr.mxu0 0.0
        %1995 = vmatpush1.msra.mxu0 0.0
        %1996 = vmatprep.subr.mxu0 0.0
        %1997 = vmatpush1.msra.mxu0 0.0
        %1998 = vmatprep.subr.mxu0 0.0
        %1999 = vmatpush1.msra.mxu0 0.0
        %2000 = vmatprep.subr.mxu0 0.0
        %2001 = vmatpush1.msra.mxu0 0.0
        %2002 = vmatprep.subr.mxu0 0.0
        %2003 = vmatpush1.msra.mxu0 0.0
        %2004 = vmatprep.subr.mxu0 0.0
        %2005 = vmatpush1.msra.mxu0 0.0
        %2006 = vmatprep.subr.mxu0 0.0
        %2007 = vmatpush1.msra.mxu0 0.0
        %2008 = vmatprep.subr.mxu0 0.0
        %2009 = vmatpush1.msra.mxu0 0.0
        %2010 = vmatprep.subr.mxu0 0.0
        %2011 = vmatpush1.msra.mxu0 0.0
        %2012 = vmatprep.subr.mxu0 0.0
        %2013 = vmatpush1.msra.mxu0 0.0
        %2014 = vmatprep.subr.mxu0 0.0
        %2015 = vmatpush1.msra.mxu0 0.0
        %2016 = vmatprep.subr.mxu0 0.0
        %2017 = vmatpush1.msra.mxu0 0.0
        %2018 = vmatprep.subr.mxu0 0.0
        %2019 = vmatpush1.msra.mxu0 0.0
        %2020 = vmatprep.subr.mxu0 0.0
        %2021 = vmatpush1.msra.mxu0 0.0
        %2022 = vmatprep.subr.mxu0 0.0
        %2023 = vmatpush1.msra.mxu0 0.0
        %2024 = vmatprep.mubr.f32.mxu0 0.0
        %2025 = vmatmul.mubr.f32.gmra.mrb[0].mxu0 %v1958
        %v2026 = vpop.f32.mrb[0].mxu0
        %v2027 = vadd.f32 0.0, %v2026
        %v2028 = vpop.f32.mrb[0].mxu0
        %2029 = vdwg.mxu0
        %v2030 = vsel %vm960, %v1808, 0.0
        %v2031 = vsel %vm960, %v1881, 0.0
        %v2032 = vadd.f32 %v2030, %v2031
        %v2033 = vsel %vm960, %v1954, 0.0
        %v2034 = vadd.f32 %v2032, %v2033
        %v2035 = vsel %vm960, %v2027, 0.0
        %v2036 = vadd.f32 %v2034, %v2035
        %v2038 = vlaneseq
        %v2039 = vshrl.u32 %v2038, 7
        %v2040 = vsub.s32 0, %v2039
        %v2041 = vrot.slane %v1084, %v2040
        %v2043 = vadd.f32 %v2036, %v2041
        %v2044 = vadd.f32 %v956, %v2043
        %v2045 = vld [vmem:[#allocation13] sm:$0x1]
        %v2046 = vld [vmem:[#allocation14] sm:$0x1]
        %v2047 = vsel %vm960, %v2044, 0.0
        %2048 = vadd.xlane.f32.xlu0 %v2047
        %v2049 = vpop.xlane.xlu0 %2048
        %v2050 = vmul.f32 %v2049, %v964
        %v2051 = vsub.f32 %v2044, %v2050
        %v2052 = vmul.f32 %v2051, %v2051
        %v2053 = vsel %vm960, %v2052, 0.0
        %2054 = vadd.xlane.f32.xlu0 %v2053
        %v2055 = vpop.xlane.xlu0 %2054
        %v2056 = vmul.f32 %v2055, %v964
        %v2057 = vadd.f32 %v2056, 1e-05
        %v2058 = vrsqrt.pop %v2057
        %v2059 = vmul.f32 %v2051, %v2058
        %v2061 = vlaneseq
        %v2062 = vshrl.u32 %v2061, 7
        %v2063 = vsub.s32 0, %v2062
        %v2064 = vrot.slane %v2045, %v2063
        %v2066 = vmul.f32 %v2059, %v2064
        %v2068 = vlaneseq
        %v2069 = vshrl.u32 %v2068, 7
        %v2070 = vsub.s32 0, %v2069
        %v2071 = vrot.slane %v2046, %v2070
        %v2073 = vadd.f32 %v2066, %v2071
        %v2074 = vld [vmem:[%s10] sm:$0xff]
        %v2075 = vld [vmem:[%s10 + $0x8] sm:$0xff]
        %v2076 = vld [vmem:[%s10 + $0x10] sm:$0xff]
        %v2077 = vld [vmem:[%s10 + $0x18] sm:$0xff]
        %v2078 = vld [vmem:[#allocation16] sm:$0x1]
        %v2080 = vlaneseq
        %v2081 = vshrl.u32 %v2080, 7
        %v2082 = vsub.s32 0, %v2081
        %v2083 = vrot.slane %v2078, %v2082
        %v2086 = vsel %vm960, %v2073, 0
        %2088 = vmatprep.subr.mxu0 0.0
        %2089 = vmatpush1.msra.mxu0 %v2074
        %2090 = vmatprep.subr.mxu0 0.0
        %2091 = vmatpush1.msra.mxu0 %v2075
        %2092 = vmatprep.subr.mxu0 0.0
        %2093 = vmatpush1.msra.mxu0 %v2076
        %2094 = vmatprep.subr.mxu0 0.0
        %2095 = vmatpush1.msra.mxu0 %v2077
        %2096 = vmatprep.subr.mxu0 0.0
        %2097 = vmatpush1.msra.mxu0 0.0
        %2098 = vmatprep.subr.mxu0 0.0
        %2099 = vmatpush1.msra.mxu0 0.0
        %2100 = vmatprep.subr.mxu0 0.0
        %2101 = vmatpush1.msra.mxu0 0.0
        %2102 = vmatprep.subr.mxu0 0.0
        %2103 = vmatpush1.msra.mxu0 0.0
        %2104 = vmatprep.subr.mxu0 0.0
        %2105 = vmatpush1.msra.mxu0 0.0
        %2106 = vmatprep.subr.mxu0 0.0
        %2107 = vmatpush1.msra.mxu0 0.0
        %2108 = vmatprep.subr.mxu0 0.0
        %2109 = vmatpush1.msra.mxu0 0.0
        %2110 = vmatprep.subr.mxu0 0.0
        %2111 = vmatpush1.msra.mxu0 0.0
        %2112 = vmatprep.subr.mxu0 0.0
        %2113 = vmatpush1.msra.mxu0 0.0
        %2114 = vmatprep.subr.mxu0 0.0
        %2115 = vmatpush1.msra.mxu0 0.0
        %2116 = vmatprep.subr.mxu0 0.0
        %2117 = vmatpush1.msra.mxu0 0.0
        %2118 = vmatprep.subr.mxu0 0.0
        %2119 = vmatpush1.msra.mxu0 0.0
        %2120 = vmatprep.subr.mxu0 0.0
        %2121 = vmatpush1.msra.mxu0 0.0
        %2122 = vmatprep.subr.mxu0 0.0
        %2123 = vmatpush1.msra.mxu0 0.0
        %2124 = vmatprep.subr.mxu0 0.0
        %2125 = vmatpush1.msra.mxu0 0.0
        %2126 = vmatprep.subr.mxu0 0.0
        %2127 = vmatpush1.msra.mxu0 0.0
        %2128 = vmatprep.subr.mxu0 0.0
        %2129 = vmatpush1.msra.mxu0 0.0
        %2130 = vmatprep.subr.mxu0 0.0
        %2131 = vmatpush1.msra.mxu0 0.0
        %2132 = vmatprep.subr.mxu0 0.0
        %2133 = vmatpush1.msra.mxu0 0.0
        %2134 = vmatprep.subr.mxu0 0.0
        %2135 = vmatpush1.msra.mxu0 0.0
        %2136 = vmatprep.subr.mxu0 0.0
        %2137 = vmatpush1.msra.mxu0 0.0
        %2138 = vmatprep.subr.mxu0 0.0
        %2139 = vmatpush1.msra.mxu0 0.0
        %2140 = vmatprep.subr.mxu0 0.0
        %2141 = vmatpush1.msra.mxu0 0.0
        %2142 = vmatprep.subr.mxu0 0.0
        %2143 = vmatpush1.msra.mxu0 0.0
        %2144 = vmatprep.subr.mxu0 0.0
        %2145 = vmatpush1.msra.mxu0 0.0
        %2146 = vmatprep.subr.mxu0 0.0
        %2147 = vmatpush1.msra.mxu0 0.0
        %2148 = vmatprep.subr.mxu0 0.0
        %2149 = vmatpush1.msra.mxu0 0.0
        %2150 = vmatprep.subr.mxu0 0.0
        %2151 = vmatpush1.msra.mxu0 0.0
        %2152 = vmatprep.mubr.f32.mxu0 0.0
        %2153 = vmatmul.mubr.f32.gmra.mrb[0].mxu0 %v2086
        %v2154 = vpop.f32.mrb[0].mxu0
        %v2155 = vadd.f32 %v2083, %v2154
        %v2156 = vpop.f32.mrb[0].mxu0
        %2157 = vdwg.mxu0
        %v2158 = vld [vmem:[%s12] sm:$0xff]
        %v2159 = vld [vmem:[%s12 + $0x8] sm:$0xff]
        %v2160 = vld [vmem:[%s12 + $0x10] sm:$0xff]
        %v2161 = vld [vmem:[%s12 + $0x18] sm:$0xff]
        %v2162 = vld [vmem:[#allocation17] sm:$0x1]
        %v2164 = vlaneseq
        %v2165 = vshrl.u32 %v2164, 7
        %v2166 = vsub.s32 0, %v2165
        %v2167 = vrot.slane %v2162, %v2166
        %v2170 = vsel %vm960, %v957, 0
        %2172 = vmatprep.subr.mxu0 0.0
        %2173 = vmatpush1.msra.mxu0 %v2158
        %2174 = vmatprep.subr.mxu0 0.0
        %2175 = vmatpush1.msra.mxu0 %v2159
        %2176 = vmatprep.subr.mxu0 0.0
        %2177 = vmatpush1.msra.mxu0 %v2160
        %2178 = vmatprep.subr.mxu0 0.0
        %2179 = vmatpush1.msra.mxu0 %v2161
        %2180 = vmatprep.subr.mxu0 0.0
        %2181 = vmatpush1.msra.mxu0 0.0
        %2182 = vmatprep.subr.mxu0 0.0
        %2183 = vmatpush1.msra.mxu0 0.0
        %2184 = vmatprep.subr.mxu0 0.0
        %2185 = vmatpush1.msra.mxu0 0.0
        %2186 = vmatprep.subr.mxu0 0.0
        %2187 = vmatpush1.msra.mxu0 0.0
        %2188 = vmatprep.subr.mxu0 0.0
        %2189 = vmatpush1.msra.mxu0 0.0
        %2190 = vmatprep.subr.mxu0 0.0
        %2191 = vmatpush1.msra.mxu0 0.0
        %2192 = vmatprep.subr.mxu0 0.0
        %2193 = vmatpush1.msra.mxu0 0.0
        %2194 = vmatprep.subr.mxu0 0.0
        %2195 = vmatpush1.msra.mxu0 0.0
        %2196 = vmatprep.subr.mxu0 0.0
        %2197 = vmatpush1.msra.mxu0 0.0
        %2198 = vmatprep.subr.mxu0 0.0
        %2199 = vmatpush1.msra.mxu0 0.0
        %2200 = vmatprep.subr.mxu0 0.0
        %2201 = vmatpush1.msra.mxu0 0.0
        %2202 = vmatprep.subr.mxu0 0.0
        %2203 = vmatpush1.msra.mxu0 0.0
        %2204 = vmatprep.subr.mxu0 0.0
        %2205 = vmatpush1.msra.mxu0 0.0
        %2206 = vmatprep.subr.mxu0 0.0
        %2207 = vmatpush1.msra.mxu0 0.0
        %2208 = vmatprep.subr.mxu0 0.0
        %2209 = vmatpush1.msra.mxu0 0.0
        %2210 = vmatprep.subr.mxu0 0.0
        %2211 = vmatpush1.msra.mxu0 0.0
        %2212 = vmatprep.subr.mxu0 0.0
        %2213 = vmatpush1.msra.mxu0 0.0
        %2214 = vmatprep.subr.mxu0 0.0
        %2215 = vmatpush1.msra.mxu0 0.0
        %2216 = vmatprep.subr.mxu0 0.0
        %2217 = vmatpush1.msra.mxu0 0.0
        %2218 = vmatprep.subr.mxu0 0.0
        %2219 = vmatpush1.msra.mxu0 0.0
        %2220 = vmatprep.subr.mxu0 0.0
        %2221 = vmatpush1.msra.mxu0 0.0
        %2222 = vmatprep.subr.mxu0 0.0
        %2223 = vmatpush1.msra.mxu0 0.0
        %2224 = vmatprep.subr.mxu0 0.0
        %2225 = vmatpush1.msra.mxu0 0.0
        %2226 = vmatprep.subr.mxu0 0.0
        %2227 = vmatpush1.msra.mxu0 0.0
        %2228 = vmatprep.subr.mxu0 0.0
        %2229 = vmatpush1.msra.mxu0 0.0
        %2230 = vmatprep.subr.mxu0 0.0
        %2231 = vmatpush1.msra.mxu0 0.0
        %2232 = vmatprep.subr.mxu0 0.0
        %2233 = vmatpush1.msra.mxu0 0.0
        %2234 = vmatprep.subr.mxu0 0.0
        %2235 = vmatpush1.msra.mxu0 0.0
        %2236 = vmatprep.mubr.f32.mxu0 0.0
        %2237 = vmatmul.mubr.f32.gmra.mrb[0].mxu0 %v2170
        %v2238 = vpop.f32.mrb[0].mxu0
        %v2239 = vadd.f32 %v2167, %v2238
        %v2240 = vpop.f32.mrb[0].mxu0
        %2241 = vdwg.mxu0
        %2243 = vrot.lane.b32.xlu0 %v2155, 120
        %v2244 = vpop.permute.xlu0 %2243
        %2245 = vrot.lane.b32.xlu0 %v2155, 112
        %v2246 = vpop.permute.xlu0 %2245
        %2247 = vrot.lane.b32.xlu0 %v2155, 104
        %v2248 = vpop.permute.xlu0 %2247
        %2250 = vrot.lane.b32.xlu0 %v2239, 120
        %v2251 = vpop.permute.xlu0 %2250
        %2252 = vrot.lane.b32.xlu0 %v2239, 112
        %v2253 = vpop.permute.xlu0 %2252
        %2254 = vrot.lane.b32.xlu0 %v2239, 104
        %v2255 = vpop.permute.xlu0 %2254
        %v2256 = vld [vmem:[#allocation19] sm:$0xff]
        %v2257 = vld [vmem:[#allocation19 + $0x8] sm:$0xff]
        %v2258 = vld [vmem:[#allocation19 + $0x10] sm:$0xff]
        %v2259 = vld [vmem:[#allocation19 + $0x18] sm:$0xff]
        %v2260 = vld [vmem:[#allocation20] sm:$0x1]
        %v2261 = vsel %vm1087, %v2155, 0
        %v2263 = vsel %vm1087, %v2239, 0
        %2265 = vmatprep.subr.mxu0 0.0
        %2266 = vmatpush1.xpose.msra.mxu0 %v2263
        %2267 = vmatprep.subr.mxu0 0.0
        %2268 = vmatpush1.xpose.msra.mxu0 0.0
        %2269 = vmatprep.subr.mxu0 0.0
        %2270 = vmatpush1.xpose.msra.mxu0 0.0
        %2271 = vmatprep.subr.mxu0 0.0
        %2272 = vmatpush1.xpose.msra.mxu0 0.0
        %2273 = vmatprep.subr.mxu0 0.0
        %2274 = vmatpush1.xpose.msra.mxu0 0.0
        %2275 = vmatprep.subr.mxu0 0.0
        %2276 = vmatpush1.xpose.msra.mxu0 0.0
        %2277 = vmatprep.subr.mxu0 0.0
        %2278 = vmatpush1.xpose.msra.mxu0 0.0
        %2279 = vmatprep.subr.mxu0 0.0
        %2280 = vmatpush1.xpose.msra.mxu0 0.0
        %2281 = vmatprep.subr.mxu0 0.0
        %2282 = vmatpush1.xpose.msra.mxu0 0.0
        %2283 = vmatprep.subr.mxu0 0.0
        %2284 = vmatpush1.xpose.msra.mxu0 0.0
        %2285 = vmatprep.subr.mxu0 0.0
        %2286 = vmatpush1.xpose.msra.mxu0 0.0
        %2287 = vmatprep.subr.mxu0 0.0
        %2288 = vmatpush1.xpose.msra.mxu0 0.0
        %2289 = vmatprep.subr.mxu0 0.0
        %2290 = vmatpush1.xpose.msra.mxu0 0.0
        %2291 = vmatprep.subr.mxu0 0.0
        %2292 = vmatpush1.xpose.msra.mxu0 0.0
        %2293 = vmatprep.subr.mxu0 0.0
        %2294 = vmatpush1.xpose.msra.mxu0 0.0
        %2295 = vmatprep.subr.mxu0 0.0
        %2296 = vmatpush1.xpose.msra.mxu0 0.0
        %2297 = vmatprep.subr.mxu0 0.0
        %2298 = vmatpush1.xpose.msra.mxu0 0.0
        %2299 = vmatprep.subr.mxu0 0.0
        %2300 = vmatpush1.xpose.msra.mxu0 0.0
        %2301 = vmatprep.subr.mxu0 0.0
        %2302 = vmatpush1.xpose.msra.mxu0 0.0
        %2303 = vmatprep.subr.mxu0 0.0
        %2304 = vmatpush1.xpose.msra.mxu0 0.0
        %2305 = vmatprep.subr.mxu0 0.0
        %2306 = vmatpush1.xpose.msra.mxu0 0.0
        %2307 = vmatprep.subr.mxu0 0.0
        %2308 = vmatpush1.xpose.msra.mxu0 0.0
        %2309 = vmatprep.subr.mxu0 0.0
        %2310 = vmatpush1.xpose.msra.mxu0 0.0
        %2311 = vmatprep.subr.mxu0 0.0
        %2312 = vmatpush1.xpose.msra.mxu0 0.0
        %2313 = vmatprep.subr.mxu0 0.0
        %2314 = vmatpush1.xpose.msra.mxu0 0.0
        %2315 = vmatprep.subr.mxu0 0.0
        %2316 = vmatpush1.xpose.msra.mxu0 0.0
        %2317 = vmatprep.subr.mxu0 0.0
        %2318 = vmatpush1.xpose.msra.mxu0 0.0
        %2319 = vmatprep.subr.mxu0 0.0
        %2320 = vmatpush1.xpose.msra.mxu0 0.0
        %2321 = vmatprep.subr.mxu0 0.0
        %2322 = vmatpush1.xpose.msra.mxu0 0.0
        %2323 = vmatprep.subr.mxu0 0.0
        %2324 = vmatpush1.xpose.msra.mxu0 0.0
        %2325 = vmatprep.subr.mxu0 0.0
        %2326 = vmatpush1.xpose.msra.mxu0 0.0
        %2327 = vmatprep.subr.mxu0 0.0
        %2328 = vmatpush1.xpose.msra.mxu0 0.0
        %2329 = vmatprep.mubr.f32.mxu0 0.0
        %2330 = vmatmul.mubr.f32.gmra.mrb[0].mxu0 %v2261
        %v2331 = vpop.f32.mrb[0].mxu0
        %v2332 = vadd.f32 0.0, %v2331
        %v2333 = vpop.f32.mrb[0].mxu0
        %2334 = vdwg.mxu0
        %v2335 = vsel %vm1087, %v2244, 0
        %v2337 = vsel %vm1087, %v2251, 0
        %2339 = vmatprep.subr.mxu0 0.0
        %2340 = vmatpush1.xpose.msra.mxu0 %v2337
        %2341 = vmatprep.subr.mxu0 0.0
        %2342 = vmatpush1.xpose.msra.mxu0 0.0
        %2343 = vmatprep.subr.mxu0 0.0
        %2344 = vmatpush1.xpose.msra.mxu0 0.0
        %2345 = vmatprep.subr.mxu0 0.0
        %2346 = vmatpush1.xpose.msra.mxu0 0.0
        %2347 = vmatprep.subr.mxu0 0.0
        %2348 = vmatpush1.xpose.msra.mxu0 0.0
        %2349 = vmatprep.subr.mxu0 0.0
        %2350 = vmatpush1.xpose.msra.mxu0 0.0
        %2351 = vmatprep.subr.mxu0 0.0
        %2352 = vmatpush1.xpose.msra.mxu0 0.0
        %2353 = vmatprep.subr.mxu0 0.0
        %2354 = vmatpush1.xpose.msra.mxu0 0.0
        %2355 = vmatprep.subr.mxu0 0.0
        %2356 = vmatpush1.xpose.msra.mxu0 0.0
        %2357 = vmatprep.subr.mxu0 0.0
        %2358 = vmatpush1.xpose.msra.mxu0 0.0
        %2359 = vmatprep.subr.mxu0 0.0
        %2360 = vmatpush1.xpose.msra.mxu0 0.0
        %2361 = vmatprep.subr.mxu0 0.0
        %2362 = vmatpush1.xpose.msra.mxu0 0.0
        %2363 = vmatprep.subr.mxu0 0.0
        %2364 = vmatpush1.xpose.msra.mxu0 0.0
        %2365 = vmatprep.subr.mxu0 0.0
        %2366 = vmatpush1.xpose.msra.mxu0 0.0
        %2367 = vmatprep.subr.mxu0 0.0
        %2368 = vmatpush1.xpose.msra.mxu0 0.0
        %2369 = vmatprep.subr.mxu0 0.0
        %2370 = vmatpush1.xpose.msra.mxu0 0.0
        %2371 = vmatprep.subr.mxu0 0.0
        %2372 = vmatpush1.xpose.msra.mxu0 0.0
        %2373 = vmatprep.subr.mxu0 0.0
        %2374 = vmatpush1.xpose.msra.mxu0 0.0
        %2375 = vmatprep.subr.mxu0 0.0
        %2376 = vmatpush1.xpose.msra.mxu0 0.0
        %2377 = vmatprep.subr.mxu0 0.0
        %2378 = vmatpush1.xpose.msra.mxu0 0.0
        %2379 = vmatprep.subr.mxu0 0.0
        %2380 = vmatpush1.xpose.msra.mxu0 0.0
        %2381 = vmatprep.subr.mxu0 0.0
        %2382 = vmatpush1.xpose.msra.mxu0 0.0
        %2383 = vmatprep.subr.mxu0 0.0
        %2384 = vmatpush1.xpose.msra.mxu0 0.0
        %2385 = vmatprep.subr.mxu0 0.0
        %2386 = vmatpush1.xpose.msra.mxu0 0.0
        %2387 = vmatprep.subr.mxu0 0.0
        %2388 = vmatpush1.xpose.msra.mxu0 0.0
        %2389 = vmatprep.subr.mxu0 0.0
        %2390 = vmatpush1.xpose.msra.mxu0 0.0
        %2391 = vmatprep.subr.mxu0 0.0
        %2392 = vmatpush1.xpose.msra.mxu0 0.0
        %2393 = vmatprep.subr.mxu0 0.0
        %2394 = vmatpush1.xpose.msra.mxu0 0.0
        %2395 = vmatprep.subr.mxu0 0.0
        %2396 = vmatpush1.xpose.msra.mxu0 0.0
        %2397 = vmatprep.subr.mxu0 0.0
        %2398 = vmatpush1.xpose.msra.mxu0 0.0
        %2399 = vmatprep.subr.mxu0 0.0
        %2400 = vmatpush1.xpose.msra.mxu0 0.0
        %2401 = vmatprep.subr.mxu0 0.0
        %2402 = vmatpush1.xpose.msra.mxu0 0.0
        %2403 = vmatprep.mubr.f32.mxu0 0.0
        %2404 = vmatmul.mubr.f32.gmra.mrb[0].mxu0 %v2335
        %v2405 = vpop.f32.mrb[0].mxu0
        %v2406 = vadd.f32 0.0, %v2405
        %v2407 = vpop.f32.mrb[0].mxu0
        %2408 = vdwg.mxu0
        %v2409 = vsel %vm1087, %v2246, 0
        %v2411 = vsel %vm1087, %v2253, 0
        %2413 = vmatprep.subr.mxu0 0.0
        %2414 = vmatpush1.xpose.msra.mxu0 %v2411
        %2415 = vmatprep.subr.mxu0 0.0
        %2416 = vmatpush1.xpose.msra.mxu0 0.0
        %2417 = vmatprep.subr.mxu0 0.0
        %2418 = vmatpush1.xpose.msra.mxu0 0.0
        %2419 = vmatprep.subr.mxu0 0.0
        %2420 = vmatpush1.xpose.msra.mxu0 0.0
        %2421 = vmatprep.subr.mxu0 0.0
        %2422 = vmatpush1.xpose.msra.mxu0 0.0
        %2423 = vmatprep.subr.mxu0 0.0
        %2424 = vmatpush1.xpose.msra.mxu0 0.0
        %2425 = vmatprep.subr.mxu0 0.0
        %2426 = vmatpush1.xpose.msra.mxu0 0.0
        %2427 = vmatprep.subr.mxu0 0.0
        %2428 = vmatpush1.xpose.msra.mxu0 0.0
        %2429 = vmatprep.subr.mxu0 0.0
        %2430 = vmatpush1.xpose.msra.mxu0 0.0
        %2431 = vmatprep.subr.mxu0 0.0
        %2432 = vmatpush1.xpose.msra.mxu0 0.0
        %2433 = vmatprep.subr.mxu0 0.0
        %2434 = vmatpush1.xpose.msra.mxu0 0.0
        %2435 = vmatprep.subr.mxu0 0.0
        %2436 = vmatpush1.xpose.msra.mxu0 0.0
        %2437 = vmatprep.subr.mxu0 0.0
        %2438 = vmatpush1.xpose.msra.mxu0 0.0
        %2439 = vmatprep.subr.mxu0 0.0
        %2440 = vmatpush1.xpose.msra.mxu0 0.0
        %2441 = vmatprep.subr.mxu0 0.0
        %2442 = vmatpush1.xpose.msra.mxu0 0.0
        %2443 = vmatprep.subr.mxu0 0.0
        %2444 = vmatpush1.xpose.msra.mxu0 0.0
        %2445 = vmatprep.subr.mxu0 0.0
        %2446 = vmatpush1.xpose.msra.mxu0 0.0
        %2447 = vmatprep.subr.mxu0 0.0
        %2448 = vmatpush1.xpose.msra.mxu0 0.0
        %2449 = vmatprep.subr.mxu0 0.0
        %2450 = vmatpush1.xpose.msra.mxu0 0.0
        %2451 = vmatprep.subr.mxu0 0.0
        %2452 = vmatpush1.xpose.msra.mxu0 0.0
        %2453 = vmatprep.subr.mxu0 0.0
        %2454 = vmatpush1.xpose.msra.mxu0 0.0
        %2455 = vmatprep.subr.mxu0 0.0
        %2456 = vmatpush1.xpose.msra.mxu0 0.0
        %2457 = vmatprep.subr.mxu0 0.0
        %2458 = vmatpush1.xpose.msra.mxu0 0.0
        %2459 = vmatprep.subr.mxu0 0.0
        %2460 = vmatpush1.xpose.msra.mxu0 0.0
        %2461 = vmatprep.subr.mxu0 0.0
        %2462 = vmatpush1.xpose.msra.mxu0 0.0
        %2463 = vmatprep.subr.mxu0 0.0
        %2464 = vmatpush1.xpose.msra.mxu0 0.0
        %2465 = vmatprep.subr.mxu0 0.0
        %2466 = vmatpush1.xpose.msra.mxu0 0.0
        %2467 = vmatprep.subr.mxu0 0.0
        %2468 = vmatpush1.xpose.msra.mxu0 0.0
        %2469 = vmatprep.subr.mxu0 0.0
        %2470 = vmatpush1.xpose.msra.mxu0 0.0
        %2471 = vmatprep.subr.mxu0 0.0
        %2472 = vmatpush1.xpose.msra.mxu0 0.0
        %2473 = vmatprep.subr.mxu0 0.0
        %2474 = vmatpush1.xpose.msra.mxu0 0.0
        %2475 = vmatprep.subr.mxu0 0.0
        %2476 = vmatpush1.xpose.msra.mxu0 0.0
        %2477 = vmatprep.mubr.f32.mxu0 0.0
        %2478 = vmatmul.mubr.f32.gmra.mrb[0].mxu0 %v2409
        %v2479 = vpop.f32.mrb[0].mxu0
        %v2480 = vadd.f32 0.0, %v2479
        %v2481 = vpop.f32.mrb[0].mxu0
        %2482 = vdwg.mxu0
        %v2483 = vsel %vm1087, %v2248, 0
        %v2485 = vsel %vm1087, %v2255, 0
        %2487 = vmatprep.subr.mxu0 0.0
        %2488 = vmatpush1.xpose.msra.mxu0 %v2485
        %2489 = vmatprep.subr.mxu0 0.0
        %2490 = vmatpush1.xpose.msra.mxu0 0.0
        %2491 = vmatprep.subr.mxu0 0.0
        %2492 = vmatpush1.xpose.msra.mxu0 0.0
        %2493 = vmatprep.subr.mxu0 0.0
        %2494 = vmatpush1.xpose.msra.mxu0 0.0
        %2495 = vmatprep.subr.mxu0 0.0
        %2496 = vmatpush1.xpose.msra.mxu0 0.0
        %2497 = vmatprep.subr.mxu0 0.0
        %2498 = vmatpush1.xpose.msra.mxu0 0.0
        %2499 = vmatprep.subr.mxu0 0.0
        %2500 = vmatpush1.xpose.msra.mxu0 0.0
        %2501 = vmatprep.subr.mxu0 0.0
        %2502 = vmatpush1.xpose.msra.mxu0 0.0
        %2503 = vmatprep.subr.mxu0 0.0
        %2504 = vmatpush1.xpose.msra.mxu0 0.0
        %2505 = vmatprep.subr.mxu0 0.0
        %2506 = vmatpush1.xpose.msra.mxu0 0.0
        %2507 = vmatprep.subr.mxu0 0.0
        %2508 = vmatpush1.xpose.msra.mxu0 0.0
        %2509 = vmatprep.subr.mxu0 0.0
        %2510 = vmatpush1.xpose.msra.mxu0 0.0
        %2511 = vmatprep.subr.mxu0 0.0
        %2512 = vmatpush1.xpose.msra.mxu0 0.0
        %2513 = vmatprep.subr.mxu0 0.0
        %2514 = vmatpush1.xpose.msra.mxu0 0.0
        %2515 = vmatprep.subr.mxu0 0.0
        %2516 = vmatpush1.xpose.msra.mxu0 0.0
        %2517 = vmatprep.subr.mxu0 0.0
        %2518 = vmatpush1.xpose.msra.mxu0 0.0
        %2519 = vmatprep.subr.mxu0 0.0
        %2520 = vmatpush1.xpose.msra.mxu0 0.0
        %2521 = vmatprep.subr.mxu0 0.0
        %2522 = vmatpush1.xpose.msra.mxu0 0.0
        %2523 = vmatprep.subr.mxu0 0.0
        %2524 = vmatpush1.xpose.msra.mxu0 0.0
        %2525 = vmatprep.subr.mxu0 0.0
        %2526 = vmatpush1.xpose.msra.mxu0 0.0
        %2527 = vmatprep.subr.mxu0 0.0
        %2528 = vmatpush1.xpose.msra.mxu0 0.0
        %2529 = vmatprep.subr.mxu0 0.0
        %2530 = vmatpush1.xpose.msra.mxu0 0.0
        %2531 = vmatprep.subr.mxu0 0.0
        %2532 = vmatpush1.xpose.msra.mxu0 0.0
        %2533 = vmatprep.subr.mxu0 0.0
        %2534 = vmatpush1.xpose.msra.mxu0 0.0
        %2535 = vmatprep.subr.mxu0 0.0
        %2536 = vmatpush1.xpose.msra.mxu0 0.0
        %2537 = vmatprep.subr.mxu0 0.0
        %2538 = vmatpush1.xpose.msra.mxu0 0.0
        %2539 = vmatprep.subr.mxu0 0.0
        %2540 = vmatpush1.xpose.msra.mxu0 0.0
        %2541 = vmatprep.subr.mxu0 0.0
        %2542 = vmatpush1.xpose.msra.mxu0 0.0
        %2543 = vmatprep.subr.mxu0 0.0
        %2544 = vmatpush1.xpose.msra.mxu0 0.0
        %2545 = vmatprep.subr.mxu0 0.0
        %2546 = vmatpush1.xpose.msra.mxu0 0.0
        %2547 = vmatprep.subr.mxu0 0.0
        %2548 = vmatpush1.xpose.msra.mxu0 0.0
        %2549 = vmatprep.subr.mxu0 0.0
        %2550 = vmatpush1.xpose.msra.mxu0 0.0
        %2551 = vmatprep.mubr.f32.mxu0 0.0
        %2552 = vmatmul.mubr.f32.gmra.mrb[0].mxu0 %v2483
        %v2553 = vpop.f32.mrb[0].mxu0
        %v2554 = vadd.f32 0.0, %v2553
        %v2555 = vpop.f32.mrb[0].mxu0
        %2556 = vdwg.mxu0
        %v2557 = vsel %vm1087, %v2332, -inf
        %2558 = vmax.xlane.f32.xlu0 %v2557
        %v2559 = vpop.xlane.xlu0 %2558
        %v2560 = vsel %vm1087, %v2406, -inf
        %2561 = vmax.xlane.f32.xlu0 %v2560
        %v2562 = vpop.xlane.xlu0 %2561
        %v2563 = vsel %vm1087, %v2480, -inf
        %2564 = vmax.xlane.f32.xlu0 %v2563
        %v2565 = vpop.xlane.xlu0 %2564
        %v2566 = vsel %vm1087, %v2554, -inf
        %2567 = vmax.xlane.f32.xlu0 %v2566
        %v2568 = vpop.xlane.xlu0 %2567
        %v2569 = vsub.f32 %v2332, %v2559
        %v2570 = vsub.f32 %v2406, %v2562
        %v2571 = vsub.f32 %v2480, %v2565
        %v2572 = vsub.f32 %v2554, %v2568
        %v2573 = vmul.f32 %v2569, 1.442695
        %v2574 = vpow.pop %v2573
        %v2575 = vmul.f32 %v2570, 1.442695
        %v2576 = vpow.pop %v2575
        %v2577 = vmul.f32 %v2571, 1.442695
        %v2578 = vpow.pop %v2577
        %v2579 = vmul.f32 %v2572, 1.442695
        %v2580 = vpow.pop %v2579
        %v2581 = vsel %vm1087, %v2574, 0.0
        %2582 = vadd.xlane.f32.xlu0 %v2581
        %v2583 = vpop.xlane.xlu0 %2582
        %v2584 = vsel %vm1087, %v2576, 0.0
        %2585 = vadd.xlane.f32.xlu0 %v2584
        %v2586 = vpop.xlane.xlu0 %2585
        %v2587 = vsel %vm1087, %v2578, 0.0
        %2588 = vadd.xlane.f32.xlu0 %v2587
        %v2589 = vpop.xlane.xlu0 %2588
        %v2590 = vsel %vm1087, %v2580, 0.0
        %2591 = vadd.xlane.f32.xlu0 %v2590
        %v2592 = vpop.xlane.xlu0 %2591
        %v2593 = vrcp.pop %v2583
        %v2594 = vrcp.pop %v2586
        %v2595 = vrcp.pop %v2589
        %v2596 = vrcp.pop %v2592
        %v2597 = vmul.f32 %v2574, %v2593
        %v2598 = vmul.f32 %v2576, %v2594
        %v2599 = vmul.f32 %v2578, %v2595
        %v2600 = vmul.f32 %v2580, %v2596
        %2601 = vrot.lane.b32.xlu0 %v2239, 96
        %v2602 = vpop.permute.xlu0 %2601
        %v2605 = vsel %vm1087, %v2597, 0
        %2607 = vmatprep.subr.mxu0 0.0
        %2608 = vmatpush1.msra.mxu0 %v2602
        %2609 = vmatprep.subr.mxu0 0.0
        %2610 = vmatpush1.msra.mxu0 0.0
        %2611 = vmatprep.subr.mxu0 0.0
        %2612 = vmatpush1.msra.mxu0 0.0
        %2613 = vmatprep.subr.mxu0 0.0
        %2614 = vmatpush1.msra.mxu0 0.0
        %2615 = vmatprep.subr.mxu0 0.0
        %2616 = vmatpush1.msra.mxu0 0.0
        %2617 = vmatprep.subr.mxu0 0.0
        %2618 = vmatpush1.msra.mxu0 0.0
        %2619 = vmatprep.subr.mxu0 0.0
        %2620 = vmatpush1.msra.mxu0 0.0
        %2621 = vmatprep.subr.mxu0 0.0
        %2622 = vmatpush1.msra.mxu0 0.0
        %2623 = vmatprep.subr.mxu0 0.0
        %2624 = vmatpush1.msra.mxu0 0.0
        %2625 = vmatprep.subr.mxu0 0.0
        %2626 = vmatpush1.msra.mxu0 0.0
        %2627 = vmatprep.subr.mxu0 0.0
        %2628 = vmatpush1.msra.mxu0 0.0
        %2629 = vmatprep.subr.mxu0 0.0
        %2630 = vmatpush1.msra.mxu0 0.0
        %2631 = vmatprep.subr.mxu0 0.0
        %2632 = vmatpush1.msra.mxu0 0.0
        %2633 = vmatprep.subr.mxu0 0.0
        %2634 = vmatpush1.msra.mxu0 0.0
        %2635 = vmatprep.subr.mxu0 0.0
        %2636 = vmatpush1.msra.mxu0 0.0
        %2637 = vmatprep.subr.mxu0 0.0
        %2638 = vmatpush1.msra.mxu0 0.0
        %2639 = vmatprep.subr.mxu0 0.0
        %2640 = vmatpush1.msra.mxu0 0.0
        %2641 = vmatprep.subr.mxu0 0.0
        %2642 = vmatpush1.msra.mxu0 0.0
        %2643 = vmatprep.subr.mxu0 0.0
        %2644 = vmatpush1.msra.mxu0 0.0
        %2645 = vmatprep.subr.mxu0 0.0
        %2646 = vmatpush1.msra.mxu0 0.0
        %2647 = vmatprep.subr.mxu0 0.0
        %2648 = vmatpush1.msra.mxu0 0.0
        %2649 = vmatprep.subr.mxu0 0.0
        %2650 = vmatpush1.msra.mxu0 0.0
        %2651 = vmatprep.subr.mxu0 0.0
        %2652 = vmatpush1.msra.mxu0 0.0
        %2653 = vmatprep.subr.mxu0 0.0
        %2654 = vmatpush1.msra.mxu0 0.0
        %2655 = vmatprep.subr.mxu0 0.0
        %2656 = vmatpush1.msra.mxu0 0.0
        %2657 = vmatprep.subr.mxu0 0.0
        %2658 = vmatpush1.msra.mxu0 0.0
        %2659 = vmatprep.subr.mxu0 0.0
        %2660 = vmatpush1.msra.mxu0 0.0
        %2661 = vmatprep.subr.mxu0 0.0
        %2662 = vmatpush1.msra.mxu0 0.0
        %2663 = vmatprep.subr.mxu0 0.0
        %2664 = vmatpush1.msra.mxu0 0.0
        %2665 = vmatprep.subr.mxu0 0.0
        %2666 = vmatpush1.msra.mxu0 0.0
        %2667 = vmatprep.subr.mxu0 0.0
        %2668 = vmatpush1.msra.mxu0 0.0
        %2669 = vmatprep.subr.mxu0 0.0
        %2670 = vmatpush1.msra.mxu0 0.0
        %2671 = vmatprep.mubr.f32.mxu0 0.0
        %2672 = vmatmul.mubr.f32.gmra.mrb[0].mxu0 %v2605
        %v2673 = vpop.f32.mrb[0].mxu0
        %v2674 = vadd.f32 0.0, %v2673
        %v2675 = vpop.f32.mrb[0].mxu0
        %2676 = vdwg.mxu0
        %2677 = vrot.lane.b32.xlu0 %v2251, 96
        %v2678 = vpop.permute.xlu0 %2677
        %v2681 = vsel %vm1087, %v2598, 0
        %2683 = vmatprep.subr.mxu0 0.0
        %2684 = vmatpush1.msra.mxu0 %v2678
        %2685 = vmatprep.subr.mxu0 0.0
        %2686 = vmatpush1.msra.mxu0 0.0
        %2687 = vmatprep.subr.mxu0 0.0
        %2688 = vmatpush1.msra.mxu0 0.0
        %2689 = vmatprep.subr.mxu0 0.0
        %2690 = vmatpush1.msra.mxu0 0.0
        %2691 = vmatprep.subr.mxu0 0.0
        %2692 = vmatpush1.msra.mxu0 0.0
        %2693 = vmatprep.subr.mxu0 0.0
        %2694 = vmatpush1.msra.mxu0 0.0
        %2695 = vmatprep.subr.mxu0 0.0
        %2696 = vmatpush1.msra.mxu0 0.0
        %2697 = vmatprep.subr.mxu0 0.0
        %2698 = vmatpush1.msra.mxu0 0.0
        %2699 = vmatprep.subr.mxu0 0.0
        %2700 = vmatpush1.msra.mxu0 0.0
        %2701 = vmatprep.subr.mxu0 0.0
        %2702 = vmatpush1.msra.mxu0 0.0
        %2703 = vmatprep.subr.mxu0 0.0
        %2704 = vmatpush1.msra.mxu0 0.0
        %2705 = vmatprep.subr.mxu0 0.0
        %2706 = vmatpush1.msra.mxu0 0.0
        %2707 = vmatprep.subr.mxu0 0.0
        %2708 = vmatpush1.msra.mxu0 0.0
        %2709 = vmatprep.subr.mxu0 0.0
        %2710 = vmatpush1.msra.mxu0 0.0
        %2711 = vmatprep.subr.mxu0 0.0
        %2712 = vmatpush1.msra.mxu0 0.0
        %2713 = vmatprep.subr.mxu0 0.0
        %2714 = vmatpush1.msra.mxu0 0.0
        %2715 = vmatprep.subr.mxu0 0.0
        %2716 = vmatpush1.msra.mxu0 0.0
        %2717 = vmatprep.subr.mxu0 0.0
        %2718 = vmatpush1.msra.mxu0 0.0
        %2719 = vmatprep.subr.mxu0 0.0
        %2720 = vmatpush1.msra.mxu0 0.0
        %2721 = vmatprep.subr.mxu0 0.0
        %2722 = vmatpush1.msra.mxu0 0.0
        %2723 = vmatprep.subr.mxu0 0.0
        %2724 = vmatpush1.msra.mxu0 0.0
        %2725 = vmatprep.subr.mxu0 0.0
        %2726 = vmatpush1.msra.mxu0 0.0
        %2727 = vmatprep.subr.mxu0 0.0
        %2728 = vmatpush1.msra.mxu0 0.0
        %2729 = vmatprep.subr.mxu0 0.0
        %2730 = vmatpush1.msra.mxu0 0.0
        %2731 = vmatprep.subr.mxu0 0.0
        %2732 = vmatpush1.msra.mxu0 0.0
        %2733 = vmatprep.subr.mxu0 0.0
        %2734 = vmatpush1.msra.mxu0 0.0
        %2735 = vmatprep.subr.mxu0 0.0
        %2736 = vmatpush1.msra.mxu0 0.0
        %2737 = vmatprep.subr.mxu0 0.0
        %2738 = vmatpush1.msra.mxu0 0.0
        %2739 = vmatprep.subr.mxu0 0.0
        %2740 = vmatpush1.msra.mxu0 0.0
        %2741 = vmatprep.subr.mxu0 0.0
        %2742 = vmatpush1.msra.mxu0 0.0
        %2743 = vmatprep.subr.mxu0 0.0
        %2744 = vmatpush1.msra.mxu0 0.0
        %2745 = vmatprep.subr.mxu0 0.0
        %2746 = vmatpush1.msra.mxu0 0.0
        %2747 = vmatprep.mubr.f32.mxu0 0.0
        %2748 = vmatmul.mubr.f32.gmra.mrb[0].mxu0 %v2681
        %v2749 = vpop.f32.mrb[0].mxu0
        %v2750 = vadd.f32 0.0, %v2749
        %v2751 = vpop.f32.mrb[0].mxu0
        %2752 = vdwg.mxu0
        %2753 = vrot.lane.b32.xlu0 %v2253, 96
        %v2754 = vpop.permute.xlu0 %2753
        %v2757 = vsel %vm1087, %v2599, 0
        %2759 = vmatprep.subr.mxu0 0.0
        %2760 = vmatpush1.msra.mxu0 %v2754
        %2761 = vmatprep.subr.mxu0 0.0
        %2762 = vmatpush1.msra.mxu0 0.0
        %2763 = vmatprep.subr.mxu0 0.0
        %2764 = vmatpush1.msra.mxu0 0.0
        %2765 = vmatprep.subr.mxu0 0.0
        %2766 = vmatpush1.msra.mxu0 0.0
        %2767 = vmatprep.subr.mxu0 0.0
        %2768 = vmatpush1.msra.mxu0 0.0
        %2769 = vmatprep.subr.mxu0 0.0
        %2770 = vmatpush1.msra.mxu0 0.0
        %2771 = vmatprep.subr.mxu0 0.0
        %2772 = vmatpush1.msra.mxu0 0.0
        %2773 = vmatprep.subr.mxu0 0.0
        %2774 = vmatpush1.msra.mxu0 0.0
        %2775 = vmatprep.subr.mxu0 0.0
        %2776 = vmatpush1.msra.mxu0 0.0
        %2777 = vmatprep.subr.mxu0 0.0
        %2778 = vmatpush1.msra.mxu0 0.0
        %2779 = vmatprep.subr.mxu0 0.0
        %2780 = vmatpush1.msra.mxu0 0.0
        %2781 = vmatprep.subr.mxu0 0.0
        %2782 = vmatpush1.msra.mxu0 0.0
        %2783 = vmatprep.subr.mxu0 0.0
        %2784 = vmatpush1.msra.mxu0 0.0
        %2785 = vmatprep.subr.mxu0 0.0
        %2786 = vmatpush1.msra.mxu0 0.0
        %2787 = vmatprep.subr.mxu0 0.0
        %2788 = vmatpush1.msra.mxu0 0.0
        %2789 = vmatprep.subr.mxu0 0.0
        %2790 = vmatpush1.msra.mxu0 0.0
        %2791 = vmatprep.subr.mxu0 0.0
        %2792 = vmatpush1.msra.mxu0 0.0
        %2793 = vmatprep.subr.mxu0 0.0
        %2794 = vmatpush1.msra.mxu0 0.0
        %2795 = vmatprep.subr.mxu0 0.0
        %2796 = vmatpush1.msra.mxu0 0.0
        %2797 = vmatprep.subr.mxu0 0.0
        %2798 = vmatpush1.msra.mxu0 0.0
        %2799 = vmatprep.subr.mxu0 0.0
        %2800 = vmatpush1.msra.mxu0 0.0
        %2801 = vmatprep.subr.mxu0 0.0
        %2802 = vmatpush1.msra.mxu0 0.0
        %2803 = vmatprep.subr.mxu0 0.0
        %2804 = vmatpush1.msra.mxu0 0.0
        %2805 = vmatprep.subr.mxu0 0.0
        %2806 = vmatpush1.msra.mxu0 0.0
        %2807 = vmatprep.subr.mxu0 0.0
        %2808 = vmatpush1.msra.mxu0 0.0
        %2809 = vmatprep.subr.mxu0 0.0
        %2810 = vmatpush1.msra.mxu0 0.0
        %2811 = vmatprep.subr.mxu0 0.0
        %2812 = vmatpush1.msra.mxu0 0.0
        %2813 = vmatprep.subr.mxu0 0.0
        %2814 = vmatpush1.msra.mxu0 0.0
        %2815 = vmatprep.subr.mxu0 0.0
        %2816 = vmatpush1.msra.mxu0 0.0
        %2817 = vmatprep.subr.mxu0 0.0
        %2818 = vmatpush1.msra.mxu0 0.0
        %2819 = vmatprep.subr.mxu0 0.0
        %2820 = vmatpush1.msra.mxu0 0.0
        %2821 = vmatprep.subr.mxu0 0.0
        %2822 = vmatpush1.msra.mxu0 0.0
        %2823 = vmatprep.mubr.f32.mxu0 0.0
        %2824 = vmatmul.mubr.f32.gmra.mrb[0].mxu0 %v2757
        %v2825 = vpop.f32.mrb[0].mxu0
        %v2826 = vadd.f32 0.0, %v2825
        %v2827 = vpop.f32.mrb[0].mxu0
        %2828 = vdwg.mxu0
        %2829 = vrot.lane.b32.xlu0 %v2255, 96
        %v2830 = vpop.permute.xlu0 %2829
        %v2833 = vsel %vm1087, %v2600, 0
        %2835 = vmatprep.subr.mxu0 0.0
        %2836 = vmatpush1.msra.mxu0 %v2830
        %2837 = vmatprep.subr.mxu0 0.0
        %2838 = vmatpush1.msra.mxu0 0.0
        %2839 = vmatprep.subr.mxu0 0.0
        %2840 = vmatpush1.msra.mxu0 0.0
        %2841 = vmatprep.subr.mxu0 0.0
        %2842 = vmatpush1.msra.mxu0 0.0
        %2843 = vmatprep.subr.mxu0 0.0
        %2844 = vmatpush1.msra.mxu0 0.0
        %2845 = vmatprep.subr.mxu0 0.0
        %2846 = vmatpush1.msra.mxu0 0.0
        %2847 = vmatprep.subr.mxu0 0.0
        %2848 = vmatpush1.msra.mxu0 0.0
        %2849 = vmatprep.subr.mxu0 0.0
        %2850 = vmatpush1.msra.mxu0 0.0
        %2851 = vmatprep.subr.mxu0 0.0
        %2852 = vmatpush1.msra.mxu0 0.0
        %2853 = vmatprep.subr.mxu0 0.0
        %2854 = vmatpush1.msra.mxu0 0.0
        %2855 = vmatprep.subr.mxu0 0.0
        %2856 = vmatpush1.msra.mxu0 0.0
        %2857 = vmatprep.subr.mxu0 0.0
        %2858 = vmatpush1.msra.mxu0 0.0
        %2859 = vmatprep.subr.mxu0 0.0
        %2860 = vmatpush1.msra.mxu0 0.0
        %2861 = vmatprep.subr.mxu0 0.0
        %2862 = vmatpush1.msra.mxu0 0.0
        %2863 = vmatprep.subr.mxu0 0.0
        %2864 = vmatpush1.msra.mxu0 0.0
        %2865 = vmatprep.subr.mxu0 0.0
        %2866 = vmatpush1.msra.mxu0 0.0
        %2867 = vmatprep.subr.mxu0 0.0
        %2868 = vmatpush1.msra.mxu0 0.0
        %2869 = vmatprep.subr.mxu0 0.0
        %2870 = vmatpush1.msra.mxu0 0.0
        %2871 = vmatprep.subr.mxu0 0.0
        %2872 = vmatpush1.msra.mxu0 0.0
        %2873 = vmatprep.subr.mxu0 0.0
        %2874 = vmatpush1.msra.mxu0 0.0
        %2875 = vmatprep.subr.mxu0 0.0
        %2876 = vmatpush1.msra.mxu0 0.0
        %2877 = vmatprep.subr.mxu0 0.0
        %2878 = vmatpush1.msra.mxu0 0.0
        %2879 = vmatprep.subr.mxu0 0.0
        %2880 = vmatpush1.msra.mxu0 0.0
        %2881 = vmatprep.subr.mxu0 0.0
        %2882 = vmatpush1.msra.mxu0 0.0
        %2883 = vmatprep.subr.mxu0 0.0
        %2884 = vmatpush1.msra.mxu0 0.0
        %2885 = vmatprep.subr.mxu0 0.0
        %2886 = vmatpush1.msra.mxu0 0.0
        %2887 = vmatprep.subr.mxu0 0.0
        %2888 = vmatpush1.msra.mxu0 0.0
        %2889 = vmatprep.subr.mxu0 0.0
        %2890 = vmatpush1.msra.mxu0 0.0
        %2891 = vmatprep.subr.mxu0 0.0
        %2892 = vmatpush1.msra.mxu0 0.0
        %2893 = vmatprep.subr.mxu0 0.0
        %2894 = vmatpush1.msra.mxu0 0.0
        %2895 = vmatprep.subr.mxu0 0.0
        %2896 = vmatpush1.msra.mxu0 0.0
        %2897 = vmatprep.subr.mxu0 0.0
        %2898 = vmatpush1.msra.mxu0 0.0
        %2899 = vmatprep.mubr.f32.mxu0 0.0
        %2900 = vmatmul.mubr.f32.gmra.mrb[0].mxu0 %v2833
        %v2901 = vpop.f32.mrb[0].mxu0
        %v2902 = vadd.f32 0.0, %v2901
        %v2903 = vpop.f32.mrb[0].mxu0
        %2904 = vdwg.mxu0
        %v2906 = vsel %vm1087, %v2674, 0
        %2908 = vmatprep.subr.mxu0 0.0
        %2909 = vmatpush1.msra.mxu0 %v2256
        %2910 = vmatprep.subr.mxu0 0.0
        %2911 = vmatpush1.msra.mxu0 0.0
        %2912 = vmatprep.subr.mxu0 0.0
        %2913 = vmatpush1.msra.mxu0 0.0
        %2914 = vmatprep.subr.mxu0 0.0
        %2915 = vmatpush1.msra.mxu0 0.0
        %2916 = vmatprep.subr.mxu0 0.0
        %2917 = vmatpush1.msra.mxu0 0.0
        %2918 = vmatprep.subr.mxu0 0.0
        %2919 = vmatpush1.msra.mxu0 0.0
        %2920 = vmatprep.subr.mxu0 0.0
        %2921 = vmatpush1.msra.mxu0 0.0
        %2922 = vmatprep.subr.mxu0 0.0
        %2923 = vmatpush1.msra.mxu0 0.0
        %2924 = vmatprep.subr.mxu0 0.0
        %2925 = vmatpush1.msra.mxu0 0.0
        %2926 = vmatprep.subr.mxu0 0.0
        %2927 = vmatpush1.msra.mxu0 0.0
        %2928 = vmatprep.subr.mxu0 0.0
        %2929 = vmatpush1.msra.mxu0 0.0
        %2930 = vmatprep.subr.mxu0 0.0
        %2931 = vmatpush1.msra.mxu0 0.0
        %2932 = vmatprep.subr.mxu0 0.0
        %2933 = vmatpush1.msra.mxu0 0.0
        %2934 = vmatprep.subr.mxu0 0.0
        %2935 = vmatpush1.msra.mxu0 0.0
        %2936 = vmatprep.subr.mxu0 0.0
        %2937 = vmatpush1.msra.mxu0 0.0
        %2938 = vmatprep.subr.mxu0 0.0
        %2939 = vmatpush1.msra.mxu0 0.0
        %2940 = vmatprep.subr.mxu0 0.0
        %2941 = vmatpush1.msra.mxu0 0.0
        %2942 = vmatprep.subr.mxu0 0.0
        %2943 = vmatpush1.msra.mxu0 0.0
        %2944 = vmatprep.subr.mxu0 0.0
        %2945 = vmatpush1.msra.mxu0 0.0
        %2946 = vmatprep.subr.mxu0 0.0
        %2947 = vmatpush1.msra.mxu0 0.0
        %2948 = vmatprep.subr.mxu0 0.0
        %2949 = vmatpush1.msra.mxu0 0.0
        %2950 = vmatprep.subr.mxu0 0.0
        %2951 = vmatpush1.msra.mxu0 0.0
        %2952 = vmatprep.subr.mxu0 0.0
        %2953 = vmatpush1.msra.mxu0 0.0
        %2954 = vmatprep.subr.mxu0 0.0
        %2955 = vmatpush1.msra.mxu0 0.0
        %2956 = vmatprep.subr.mxu0 0.0
        %2957 = vmatpush1.msra.mxu0 0.0
        %2958 = vmatprep.subr.mxu0 0.0
        %2959 = vmatpush1.msra.mxu0 0.0
        %2960 = vmatprep.subr.mxu0 0.0
        %2961 = vmatpush1.msra.mxu0 0.0
        %2962 = vmatprep.subr.mxu0 0.0
        %2963 = vmatpush1.msra.mxu0 0.0
        %2964 = vmatprep.subr.mxu0 0.0
        %2965 = vmatpush1.msra.mxu0 0.0
        %2966 = vmatprep.subr.mxu0 0.0
        %2967 = vmatpush1.msra.mxu0 0.0
        %2968 = vmatprep.subr.mxu0 0.0
        %2969 = vmatpush1.msra.mxu0 0.0
        %2970 = vmatprep.subr.mxu0 0.0
        %2971 = vmatpush1.msra.mxu0 0.0
        %2972 = vmatprep.mubr.f32.mxu0 0.0
        %2973 = vmatmul.mubr.f32.gmra.mrb[0].mxu0 %v2906
        %v2974 = vpop.f32.mrb[0].mxu0
        %v2975 = vadd.f32 0.0, %v2974
        %v2976 = vpop.f32.mrb[0].mxu0
        %2977 = vdwg.mxu0
        %v2979 = vsel %vm1087, %v2750, 0
        %2981 = vmatprep.subr.mxu0 0.0
        %2982 = vmatpush1.msra.mxu0 %v2257
        %2983 = vmatprep.subr.mxu0 0.0
        %2984 = vmatpush1.msra.mxu0 0.0
        %2985 = vmatprep.subr.mxu0 0.0
        %2986 = vmatpush1.msra.mxu0 0.0
        %2987 = vmatprep.subr.mxu0 0.0
        %2988 = vmatpush1.msra.mxu0 0.0
        %2989 = vmatprep.subr.mxu0 0.0
        %2990 = vmatpush1.msra.mxu0 0.0
        %2991 = vmatprep.subr.mxu0 0.0
        %2992 = vmatpush1.msra.mxu0 0.0
        %2993 = vmatprep.subr.mxu0 0.0
        %2994 = vmatpush1.msra.mxu0 0.0
        %2995 = vmatprep.subr.mxu0 0.0
        %2996 = vmatpush1.msra.mxu0 0.0
        %2997 = vmatprep.subr.mxu0 0.0
        %2998 = vmatpush1.msra.mxu0 0.0
        %2999 = vmatprep.subr.mxu0 0.0
        %3000 = vmatpush1.msra.mxu0 0.0
        %3001 = vmatprep.subr.mxu0 0.0
        %3002 = vmatpush1.msra.mxu0 0.0
        %3003 = vmatprep.subr.mxu0 0.0
        %3004 = vmatpush1.msra.mxu0 0.0
        %3005 = vmatprep.subr.mxu0 0.0
        %3006 = vmatpush1.msra.mxu0 0.0
        %3007 = vmatprep.subr.mxu0 0.0
        %3008 = vmatpush1.msra.mxu0 0.0
        %3009 = vmatprep.subr.mxu0 0.0
        %3010 = vmatpush1.msra.mxu0 0.0
        %3011 = vmatprep.subr.mxu0 0.0
        %3012 = vmatpush1.msra.mxu0 0.0
        %3013 = vmatprep.subr.mxu0 0.0
        %3014 = vmatpush1.msra.mxu0 0.0
        %3015 = vmatprep.subr.mxu0 0.0
        %3016 = vmatpush1.msra.mxu0 0.0
        %3017 = vmatprep.subr.mxu0 0.0
        %3018 = vmatpush1.msra.mxu0 0.0
        %3019 = vmatprep.subr.mxu0 0.0
        %3020 = vmatpush1.msra.mxu0 0.0
        %3021 = vmatprep.subr.mxu0 0.0
        %3022 = vmatpush1.msra.mxu0 0.0
        %3023 = vmatprep.subr.mxu0 0.0
        %3024 = vmatpush1.msra.mxu0 0.0
        %3025 = vmatprep.subr.mxu0 0.0
        %3026 = vmatpush1.msra.mxu0 0.0
        %3027 = vmatprep.subr.mxu0 0.0
        %3028 = vmatpush1.msra.mxu0 0.0
        %3029 = vmatprep.subr.mxu0 0.0
        %3030 = vmatpush1.msra.mxu0 0.0
        %3031 = vmatprep.subr.mxu0 0.0
        %3032 = vmatpush1.msra.mxu0 0.0
        %3033 = vmatprep.subr.mxu0 0.0
        %3034 = vmatpush1.msra.mxu0 0.0
        %3035 = vmatprep.subr.mxu0 0.0
        %3036 = vmatpush1.msra.mxu0 0.0
        %3037 = vmatprep.subr.mxu0 0.0
        %3038 = vmatpush1.msra.mxu0 0.0
        %3039 = vmatprep.subr.mxu0 0.0
        %3040 = vmatpush1.msra.mxu0 0.0
        %3041 = vmatprep.subr.mxu0 0.0
        %3042 = vmatpush1.msra.mxu0 0.0
        %3043 = vmatprep.subr.mxu0 0.0
        %3044 = vmatpush1.msra.mxu0 0.0
        %3045 = vmatprep.mubr.f32.mxu0 0.0
        %3046 = vmatmul.mubr.f32.gmra.mrb[0].mxu0 %v2979
        %v3047 = vpop.f32.mrb[0].mxu0
        %v3048 = vadd.f32 0.0, %v3047
        %v3049 = vpop.f32.mrb[0].mxu0
        %3050 = vdwg.mxu0
        %v3052 = vsel %vm1087, %v2826, 0
        %3054 = vmatprep.subr.mxu0 0.0
        %3055 = vmatpush1.msra.mxu0 %v2258
        %3056 = vmatprep.subr.mxu0 0.0
        %3057 = vmatpush1.msra.mxu0 0.0
        %3058 = vmatprep.subr.mxu0 0.0
        %3059 = vmatpush1.msra.mxu0 0.0
        %3060 = vmatprep.subr.mxu0 0.0
        %3061 = vmatpush1.msra.mxu0 0.0
        %3062 = vmatprep.subr.mxu0 0.0
        %3063 = vmatpush1.msra.mxu0 0.0
        %3064 = vmatprep.subr.mxu0 0.0
        %3065 = vmatpush1.msra.mxu0 0.0
        %3066 = vmatprep.subr.mxu0 0.0
        %3067 = vmatpush1.msra.mxu0 0.0
        %3068 = vmatprep.subr.mxu0 0.0
        %3069 = vmatpush1.msra.mxu0 0.0
        %3070 = vmatprep.subr.mxu0 0.0
        %3071 = vmatpush1.msra.mxu0 0.0
        %3072 = vmatprep.subr.mxu0 0.0
        %3073 = vmatpush1.msra.mxu0 0.0
        %3074 = vmatprep.subr.mxu0 0.0
        %3075 = vmatpush1.msra.mxu0 0.0
        %3076 = vmatprep.subr.mxu0 0.0
        %3077 = vmatpush1.msra.mxu0 0.0
        %3078 = vmatprep.subr.mxu0 0.0
        %3079 = vmatpush1.msra.mxu0 0.0
        %3080 = vmatprep.subr.mxu0 0.0
        %3081 = vmatpush1.msra.mxu0 0.0
        %3082 = vmatprep.subr.mxu0 0.0
        %3083 = vmatpush1.msra.mxu0 0.0
        %3084 = vmatprep.subr.mxu0 0.0
        %3085 = vmatpush1.msra.mxu0 0.0
        %3086 = vmatprep.subr.mxu0 0.0
        %3087 = vmatpush1.msra.mxu0 0.0
        %3088 = vmatprep.subr.mxu0 0.0
        %3089 = vmatpush1.msra.mxu0 0.0
        %3090 = vmatprep.subr.mxu0 0.0
        %3091 = vmatpush1.msra.mxu0 0.0
        %3092 = vmatprep.subr.mxu0 0.0
        %3093 = vmatpush1.msra.mxu0 0.0
        %3094 = vmatprep.subr.mxu0 0.0
        %3095 = vmatpush1.msra.mxu0 0.0
        %3096 = vmatprep.subr.mxu0 0.0
        %3097 = vmatpush1.msra.mxu0 0.0
        %3098 = vmatprep.subr.mxu0 0.0
        %3099 = vmatpush1.msra.mxu0 0.0
        %3100 = vmatprep.subr.mxu0 0.0
        %3101 = vmatpush1.msra.mxu0 0.0
        %3102 = vmatprep.subr.mxu0 0.0
        %3103 = vmatpush1.msra.mxu0 0.0
        %3104 = vmatprep.subr.mxu0 0.0
        %3105 = vmatpush1.msra.mxu0 0.0
        %3106 = vmatprep.subr.mxu0 0.0
        %3107 = vmatpush1.msra.mxu0 0.0
        %3108 = vmatprep.subr.mxu0 0.0
        %3109 = vmatpush1.msra.mxu0 0.0
        %3110 = vmatprep.subr.mxu0 0.0
        %3111 = vmatpush1.msra.mxu0 0.0
        %3112 = vmatprep.subr.mxu0 0.0
        %3113 = vmatpush1.msra.mxu0 0.0
        %3114 = vmatprep.subr.mxu0 0.0
        %3115 = vmatpush1.msra.mxu0 0.0
        %3116 = vmatprep.subr.mxu0 0.0
        %3117 = vmatpush1.msra.mxu0 0.0
        %3118 = vmatprep.mubr.f32.mxu0 0.0
        %3119 = vmatmul.mubr.f32.gmra.mrb[0].mxu0 %v3052
        %v3120 = vpop.f32.mrb[0].mxu0
        %v3121 = vadd.f32 0.0, %v3120
        %v3122 = vpop.f32.mrb[0].mxu0
        %3123 = vdwg.mxu0
        %v3125 = vsel %vm1087, %v2902, 0
        %3127 = vmatprep.subr.mxu0 0.0
        %3128 = vmatpush1.msra.mxu0 %v2259
        %3129 = vmatprep.subr.mxu0 0.0
        %3130 = vmatpush1.msra.mxu0 0.0
        %3131 = vmatprep.subr.mxu0 0.0
        %3132 = vmatpush1.msra.mxu0 0.0
        %3133 = vmatprep.subr.mxu0 0.0
        %3134 = vmatpush1.msra.mxu0 0.0
        %3135 = vmatprep.subr.mxu0 0.0
        %3136 = vmatpush1.msra.mxu0 0.0
        %3137 = vmatprep.subr.mxu0 0.0
        %3138 = vmatpush1.msra.mxu0 0.0
        %3139 = vmatprep.subr.mxu0 0.0
        %3140 = vmatpush1.msra.mxu0 0.0
        %3141 = vmatprep.subr.mxu0 0.0
        %3142 = vmatpush1.msra.mxu0 0.0
        %3143 = vmatprep.subr.mxu0 0.0
        %3144 = vmatpush1.msra.mxu0 0.0
        %3145 = vmatprep.subr.mxu0 0.0
        %3146 = vmatpush1.msra.mxu0 0.0
        %3147 = vmatprep.subr.mxu0 0.0
        %3148 = vmatpush1.msra.mxu0 0.0
        %3149 = vmatprep.subr.mxu0 0.0
        %3150 = vmatpush1.msra.mxu0 0.0
        %3151 = vmatprep.subr.mxu0 0.0
        %3152 = vmatpush1.msra.mxu0 0.0
        %3153 = vmatprep.subr.mxu0 0.0
        %3154 = vmatpush1.msra.mxu0 0.0
        %3155 = vmatprep.subr.mxu0 0.0
        %3156 = vmatpush1.msra.mxu0 0.0
        %3157 = vmatprep.subr.mxu0 0.0
        %3158 = vmatpush1.msra.mxu0 0.0
        %3159 = vmatprep.subr.mxu0 0.0
        %3160 = vmatpush1.msra.mxu0 0.0
        %3161 = vmatprep.subr.mxu0 0.0
        %3162 = vmatpush1.msra.mxu0 0.0
        %3163 = vmatprep.subr.mxu0 0.0
        %3164 = vmatpush1.msra.mxu0 0.0
        %3165 = vmatprep.subr.mxu0 0.0
        %3166 = vmatpush1.msra.mxu0 0.0
        %3167 = vmatprep.subr.mxu0 0.0
        %3168 = vmatpush1.msra.mxu0 0.0
        %3169 = vmatprep.subr.mxu0 0.0
        %3170 = vmatpush1.msra.mxu0 0.0
        %3171 = vmatprep.subr.mxu0 0.0
        %3172 = vmatpush1.msra.mxu0 0.0
        %3173 = vmatprep.subr.mxu0 0.0
        %3174 = vmatpush1.msra.mxu0 0.0
        %3175 = vmatprep.subr.mxu0 0.0
        %3176 = vmatpush1.msra.mxu0 0.0
        %3177 = vmatprep.subr.mxu0 0.0
        %3178 = vmatpush1.msra.mxu0 0.0
        %3179 = vmatprep.subr.mxu0 0.0
        %3180 = vmatpush1.msra.mxu0 0.0
        %3181 = vmatprep.subr.mxu0 0.0
        %3182 = vmatpush1.msra.mxu0 0.0
        %3183 = vmatprep.subr.mxu0 0.0
        %3184 = vmatpush1.msra.mxu0 0.0
        %3185 = vmatprep.subr.mxu0 0.0
        %3186 = vmatpush1.msra.mxu0 0.0
        %3187 = vmatprep.subr.mxu0 0.0
        %3188 = vmatpush1.msra.mxu0 0.0
        %3189 = vmatprep.subr.mxu0 0.0
        %3190 = vmatpush1.msra.mxu0 0.0
        %3191 = vmatprep.mubr.f32.mxu0 0.0
        %3192 = vmatmul.mubr.f32.gmra.mrb[0].mxu0 %v3125
        %v3193 = vpop.f32.mrb[0].mxu0
        %v3194 = vadd.f32 0.0, %v3193
        %v3195 = vpop.f32.mrb[0].mxu0
        %3196 = vdwg.mxu0
        %v3197 = vsel %vm960, %v2975, 0.0
        %v3198 = vsel %vm960, %v3048, 0.0
        %v3199 = vadd.f32 %v3197, %v3198
        %v3200 = vsel %vm960, %v3121, 0.0
        %v3201 = vadd.f32 %v3199, %v3200
        %v3202 = vsel %vm960, %v3194, 0.0
        %v3203 = vadd.f32 %v3201, %v3202
        %v3205 = vlaneseq
        %v3206 = vshrl.u32 %v3205, 7
        %v3207 = vsub.s32 0, %v3206
        %v3208 = vrot.slane %v2260, %v3207
        %v3210 = vadd.f32 %v3203, %v3208
        %v3211 = vadd.f32 %v2044, %v3210
        %v3212 = vld [vmem:[#allocation22] sm:$0x1]
        %v3213 = vld [vmem:[#allocation23] sm:$0x1]
        %v3214 = vsel %vm960, %v3211, 0.0
        %3215 = vadd.xlane.f32.xlu0 %v3214
        %v3216 = vpop.xlane.xlu0 %3215
        %v3217 = vmul.f32 %v3216, %v964
        %v3218 = vsub.f32 %v3211, %v3217
        %v3219 = vmul.f32 %v3218, %v3218
        %v3220 = vsel %vm960, %v3219, 0.0
        %3221 = vadd.xlane.f32.xlu0 %v3220
        %v3222 = vpop.xlane.xlu0 %3221
        %v3223 = vmul.f32 %v3222, %v964
        %v3224 = vadd.f32 %v3223, 1e-05
        %v3225 = vrsqrt.pop %v3224
        %v3226 = vmul.f32 %v3218, %v3225
        %v3228 = vlaneseq
        %v3229 = vshrl.u32 %v3228, 7
        %v3230 = vsub.s32 0, %v3229
        %v3231 = vrot.slane %v3212, %v3230
        %v3233 = vmul.f32 %v3226, %v3231
        %v3235 = vlaneseq
        %v3236 = vshrl.u32 %v3235, 7
        %v3237 = vsub.s32 0, %v3236
        %v3238 = vrot.slane %v3213, %v3237
        %v3240 = vadd.f32 %v3233, %v3238
        %v3241 = vld [vmem:[#allocation25] sm:$0xff]
        %v3242 = vld [vmem:[#allocation25 + $0x8] sm:$0xff]
        %v3243 = vld [vmem:[#allocation25 + $0x10] sm:$0xff]
        %v3244 = vld [vmem:[#allocation25 + $0x18] sm:$0xff]
        %v3245 = vld [vmem:[%s19] sm:$0x1]
        %v3247 = vlaneseq
        %v3248 = vshrl.u32 %v3247, 7
        %v3249 = vsub.s32 0, %v3248
        %v3250 = vrot.slane %v3245, %v3249
        %v3253 = vsel %vm960, %v3240, 0
        %3255 = vmatprep.subr.mxu0 0.0
        %3256 = vmatpush1.msra.mxu0 %v3241
        %3257 = vmatprep.subr.mxu0 0.0
        %3258 = vmatpush1.msra.mxu0 %v3242
        %3259 = vmatprep.subr.mxu0 0.0
        %3260 = vmatpush1.msra.mxu0 %v3243
        %3261 = vmatprep.subr.mxu0 0.0
        %3262 = vmatpush1.msra.mxu0 %v3244
        %3263 = vmatprep.subr.mxu0 0.0
        %3264 = vmatpush1.msra.mxu0 0.0
        %3265 = vmatprep.subr.mxu0 0.0
        %3266 = vmatpush1.msra.mxu0 0.0
        %3267 = vmatprep.subr.mxu0 0.0
        %3268 = vmatpush1.msra.mxu0 0.0
        %3269 = vmatprep.subr.mxu0 0.0
        %3270 = vmatpush1.msra.mxu0 0.0
        %3271 = vmatprep.subr.mxu0 0.0
        %3272 = vmatpush1.msra.mxu0 0.0
        %3273 = vmatprep.subr.mxu0 0.0
        %3274 = vmatpush1.msra.mxu0 0.0
        %3275 = vmatprep.subr.mxu0 0.0
        %3276 = vmatpush1.msra.mxu0 0.0
        %3277 = vmatprep.subr.mxu0 0.0
        %3278 = vmatpush1.msra.mxu0 0.0
        %3279 = vmatprep.subr.mxu0 0.0
        %3280 = vmatpush1.msra.mxu0 0.0
        %3281 = vmatprep.subr.mxu0 0.0
        %3282 = vmatpush1.msra.mxu0 0.0
        %3283 = vmatprep.subr.mxu0 0.0
        %3284 = vmatpush1.msra.mxu0 0.0
        %3285 = vmatprep.subr.mxu0 0.0
        %3286 = vmatpush1.msra.mxu0 0.0
        %3287 = vmatprep.subr.mxu0 0.0
        %3288 = vmatpush1.msra.mxu0 0.0
        %3289 = vmatprep.subr.mxu0 0.0
        %3290 = vmatpush1.msra.mxu0 0.0
        %3291 = vmatprep.subr.mxu0 0.0
        %3292 = vmatpush1.msra.mxu0 0.0
        %3293 = vmatprep.subr.mxu0 0.0
        %3294 = vmatpush1.msra.mxu0 0.0
        %3295 = vmatprep.subr.mxu0 0.0
        %3296 = vmatpush1.msra.mxu0 0.0
        %3297 = vmatprep.subr.mxu0 0.0
        %3298 = vmatpush1.msra.mxu0 0.0
        %3299 = vmatprep.subr.mxu0 0.0
        %3300 = vmatpush1.msra.mxu0 0.0
        %3301 = vmatprep.subr.mxu0 0.0
        %3302 = vmatpush1.msra.mxu0 0.0
        %3303 = vmatprep.subr.mxu0 0.0
        %3304 = vmatpush1.msra.mxu0 0.0
        %3305 = vmatprep.subr.mxu0 0.0
        %3306 = vmatpush1.msra.mxu0 0.0
        %3307 = vmatprep.subr.mxu0 0.0
        %3308 = vmatpush1.msra.mxu0 0.0
        %3309 = vmatprep.subr.mxu0 0.0
        %3310 = vmatpush1.msra.mxu0 0.0
        %3311 = vmatprep.subr.mxu0 0.0
        %3312 = vmatpush1.msra.mxu0 0.0
        %3313 = vmatprep.subr.mxu0 0.0
        %3314 = vmatpush1.msra.mxu0 0.0
        %3315 = vmatprep.subr.mxu0 0.0
        %3316 = vmatpush1.msra.mxu0 0.0
        %3317 = vmatprep.subr.mxu0 0.0
        %3318 = vmatpush1.msra.mxu0 0.0
        %3319 = vmatprep.mubr.f32.mxu0 0.0
        %3320 = vmatmul.mubr.f32.gmra.mrb[0].mxu0 %v3253
        %v3321 = vpop.f32.mrb[0].mxu0
        %v3322 = vadd.f32 %v3250, %v3321
        %v3323 = vpop.f32.mrb[0].mxu0
        %3324 = vdwg.mxu0
        %v3325 = vmax.f32 %v3322, 0.0
        %v3326 = vld [vmem:[%s20] sm:$0xff]
        %v3327 = vld [vmem:[%s20 + $0x8] sm:$0xff]
        %v3328 = vld [vmem:[%s20 + $0x10] sm:$0xff]
        %v3329 = vld [vmem:[%s20 + $0x18] sm:$0xff]
        %v3330 = vld [vmem:[%s20 + $0x20] sm:$0xff]
        %v3331 = vld [vmem:[%s20 + $0x28] sm:$0xff]
        %v3332 = vld [vmem:[%s20 + $0x30] sm:$0xff]
        %v3333 = vld [vmem:[%s20 + $0x38] sm:$0xff]
        %vm3334 = vcmask 523264
        %v3336 = vsel %vm3334, %v3325, 0
        %3338 = vmatprep.subr.mxu0 0.0
        %3339 = vmatpush1.msra.mxu0 %v3326
        %3340 = vmatprep.subr.mxu0 0.0
        %3341 = vmatpush1.msra.mxu0 %v3327
        %3342 = vmatprep.subr.mxu0 0.0
        %3343 = vmatpush1.msra.mxu0 %v3328
        %3344 = vmatprep.subr.mxu0 0.0
        %3345 = vmatpush1.msra.mxu0 %v3329
        %3346 = vmatprep.subr.mxu0 0.0
        %3347 = vmatpush1.msra.mxu0 %v3330
        %3348 = vmatprep.subr.mxu0 0.0
        %3349 = vmatpush1.msra.mxu0 %v3331
        %3350 = vmatprep.subr.mxu0 0.0
        %3351 = vmatpush1.msra.mxu0 %v3332
        %3352 = vmatprep.subr.mxu0 0.0
        %3353 = vmatpush1.msra.mxu0 %v3333
        %3354 = vmatprep.subr.mxu0 0.0
        %3355 = vmatpush1.msra.mxu0 0.0
        %3356 = vmatprep.subr.mxu0 0.0
        %3357 = vmatpush1.msra.mxu0 0.0
        %3358 = vmatprep.subr.mxu0 0.0
        %3359 = vmatpush1.msra.mxu0 0.0
        %3360 = vmatprep.subr.mxu0 0.0
        %3361 = vmatpush1.msra.mxu0 0.0
        %3362 = vmatprep.subr.mxu0 0.0
        %3363 = vmatpush1.msra.mxu0 0.0
        %3364 = vmatprep.subr.mxu0 0.0
        %3365 = vmatpush1.msra.mxu0 0.0
        %3366 = vmatprep.subr.mxu0 0.0
        %3367 = vmatpush1.msra.mxu0 0.0
        %3368 = vmatprep.subr.mxu0 0.0
        %3369 = vmatpush1.msra.mxu0 0.0
        %3370 = vmatprep.subr.mxu0 0.0
        %3371 = vmatpush1.msra.mxu0 0.0
        %3372 = vmatprep.subr.mxu0 0.0
        %3373 = vmatpush1.msra.mxu0 0.0
        %3374 = vmatprep.subr.mxu0 0.0
        %3375 = vmatpush1.msra.mxu0 0.0
        %3376 = vmatprep.subr.mxu0 0.0
        %3377 = vmatpush1.msra.mxu0 0.0
        %3378 = vmatprep.subr.mxu0 0.0
        %3379 = vmatpush1.msra.mxu0 0.0
        %3380 = vmatprep.subr.mxu0 0.0
        %3381 = vmatpush1.msra.mxu0 0.0
        %3382 = vmatprep.subr.mxu0 0.0
        %3383 = vmatpush1.msra.mxu0 0.0
        %3384 = vmatprep.subr.mxu0 0.0
        %3385 = vmatpush1.msra.mxu0 0.0
        %3386 = vmatprep.subr.mxu0 0.0
        %3387 = vmatpush1.msra.mxu0 0.0
        %3388 = vmatprep.subr.mxu0 0.0
        %3389 = vmatpush1.msra.mxu0 0.0
        %3390 = vmatprep.subr.mxu0 0.0
        %3391 = vmatpush1.msra.mxu0 0.0
        %3392 = vmatprep.subr.mxu0 0.0
        %3393 = vmatpush1.msra.mxu0 0.0
        %3394 = vmatprep.subr.mxu0 0.0
        %3395 = vmatpush1.msra.mxu0 0.0
        %3396 = vmatprep.subr.mxu0 0.0
        %3397 = vmatpush1.msra.mxu0 0.0
        %3398 = vmatprep.subr.mxu0 0.0
        %3399 = vmatpush1.msra.mxu0 0.0
        %3400 = vmatprep.subr.mxu0 0.0
        %3401 = vmatpush1.msra.mxu0 0.0
        %3402 = vmatprep.mubr.f32.mxu0 0.0
        %3403 = vmatmul.mubr.f32.gmra.mrb[0].mxu0 %v3336
        %v3404 = vpop.f32.mrb[0].mxu0
        %v3405 = vadd.f32 0.0, %v3404
        %v3406 = vpop.f32.mrb[0].mxu0
        %3407 = vdwg.mxu0
        %v3408 = vadd.f32 %v3211, %v3405
        %v3409 = vld [vmem:[%s21] sm:$0x1]
        %v3411 = vlaneseq
        %v3412 = vshrl.u32 %v3411, 7
        %v3413 = vsub.s32 0, %v3412
        %v3414 = vrot.slane %v3409, %v3413
        %v3416 = vadd.f32 %v3408, %v3414
        %v3417 = vld [vmem:[%s22] sm:$0x1]
        %v3418 = vld [vmem:[%s23] sm:$0x1]
        %v3419 = vsel %vm960, %v3416, 0.0
        %3420 = vadd.xlane.f32.xlu0 %v3419
        %v3421 = vpop.xlane.xlu0 %3420
        %v3422 = vmul.f32 %v3421, %v964
        %v3423 = vsub.f32 %v3416, %v3422
        %v3424 = vmul.f32 %v3423, %v3423
        %v3425 = vsel %vm960, %v3424, 0.0
        %3426 = vadd.xlane.f32.xlu0 %v3425
        %v3427 = vpop.xlane.xlu0 %3426
        %v3428 = vmul.f32 %v3427, %v964
        %v3429 = vadd.f32 %v3428, 1e-05
        %v3430 = vrsqrt.pop %v3429
        %v3431 = vmul.f32 %v3423, %v3430
        %v3433 = vlaneseq
        %v3434 = vshrl.u32 %v3433, 7
        %v3435 = vsub.s32 0, %v3434
        %v3436 = vrot.slane %v3417, %v3435
        %v3438 = vmul.f32 %v3431, %v3436
        %v3440 = vlaneseq
        %v3441 = vshrl.u32 %v3440, 7
        %v3442 = vsub.s32 0, %v3441
        %v3443 = vrot.slane %v3418, %v3442
        %v3445 = vadd.f32 %v3438, %v3443
        %3446 = vst.msk [vmem:[%s955] sm:$0xff] %vm960, %v3445
        %s3447 = sand.u32 %s572, 1
        %s3448 = scalar_lea.sflag [#allocation4], %s3447
        %s3449 = sand.u32 %s572, 1
        %s3450 = smul.addr %s3449, 8
        %s3451 = scalar_lea.vmem [#allocation26], %s3450
        // Predicated region
        $region177: #{tpu_custom_call.1} parent=115 // pred_check
          %p3452 = pneg %p582
        $region178: #{tpu_custom_call.1} parent=115 // pred_check_branch
          %3454 = sbr.rel (%p3452) target = $region180
        $region179: #{tpu_custom_call.1} parent=115 // pred_region
          %s3456 = ssub.s32 128, 128
          %3457 = vsyncadd %s3448, %s3456
          %s3458 = smul.addr %s50, 128
          %s3459 = scalar_lea.hbm %s24, %s3458
          %s3461 = sshll.u32 %s3451, 4
          %s3462 = int_to_ptr.vmem [resolvable:$true] %s3461
          %3464 = dma.vmem_to_hbm [thread:$0]  %s3462, 128, %s3459, %s3448
        $region180: #{tpu_custom_call.1} parent=115 // pred_fallthru
          _
      $region116: #{tpu_custom_call.1} parent=5 // pred_fallthru
        _
      %p3465 = scmp.le.s32.totalorder 2, %s45
      // Predicated region
      $region181: #{tpu_custom_call.1} parent=5 // pred_check
        %p3466 = pneg %p3465
      $region182: #{tpu_custom_call.1} parent=5 // pred_check_branch
        %3468 = sbr.rel (%p3466) target = $region184
      $region183: #{tpu_custom_call.1} parent=5 // pred_region
        %s3469 = ssub.s32 %s45, 2
        // Predicated region
        $region185: #{tpu_custom_call.1} parent=183 // pred_check
          %p3470 = pneg %p588
        $region186: #{tpu_custom_call.1} parent=183 // pred_check_branch
          %3472 = sbr.rel (%p3470) target = $region188
        $region187: #{tpu_custom_call.1} parent=183 // pred_region
          %s3473 = sand.u32 %s573, 1
          %s3474 = scalar_lea.sflag [#allocation4], %s3473
          %s3475 = sand.u32 %s573, 1
          %s3476 = smul.addr %s3475, 8
          %s3477 = scalar_lea.vmem [#allocation26], %s3476
          %3478 = dma.done %s3474, 128
        $region188: #{tpu_custom_call.1} parent=183 // pred_fallthru
          _
      $region184: #{tpu_custom_call.1} parent=5 // pred_fallthru
        _
    $region6: #{tpu_custom_call.1} parent=1 // loop_footer
      %s49 = sadd.s32 1, %s45
    $region7: #{tpu_custom_call.1} parent=1 // loop_footer_branch
      %44 = sbr.rel target = $region3
    $region8: #{tpu_custom_call.1} parent=1 // loop_exit
      _
    %3479 = vsyncpa [#allocation3], 1
    %s3480 = scalar_lea.sflag [#allocation3], 1
    %3481 = vsyncpa %s3480, 1
    %3482 = vsyncpa [#allocation6], 1
    %s3483 = scalar_lea.sflag [#allocation6], 1
    %3484 = vsyncpa %s3483, 1
    %3485 = vsyncpa [#allocation9], 1
    %3486 = vsyncpa [#allocation12], 1
    %3487 = vsyncpa [#allocation15], 1
    %3488 = vsyncpa [#allocation18], 1
    %3489 = vsyncpa [#allocation21], 1
    %3490 = vsyncpa [#allocation24], 1
    %3491 = vsyncpa [#allocation4], 1
    %s3492 = scalar_lea.sflag [#allocation4], 1
    %3493 = vsyncpa %s3492, 1

</llo_original>
